<compile_context>
chip_gen: v5e
topology: v5e:2x2
jax: 0.10.0
libtpu: 0.0.40
codegen_flags: <defaults>
</compile_context>

<pallas_src>
import jax
import jax.numpy as jnp
from jax import lax
from jax.experimental import pallas as pl
from jax.experimental.pallas import tpu as pltpu

EPS = 1e-5
EXPANSION = 4
LANE = 128                               # vreg lane width / MXU minor dim
VMEM_LIMIT_BYTES = 32 * 1024 * 1024      # explicit scoped VMEM; safe on v5e/v6e/v7x


def _round_up(x, m):
    return (x + m - 1) // m * m


# ----------------------------- Pallas kernel ------------------------------ #
def _bottleneck_kernel(x_ref, w1_ref, s1_ref, b1_ref,
                       w2_ref, s2_ref, b2_ref,
                       w3_ref, s3_ref, b3_ref,
                       out_ref, h1pad_ref):
    """One batch tile: x_ref (B, H*W, Cin_p) f32 -> out_ref (B, H*W, Cout_p) f32."""
    B, HW, Cin_p = x_ref.shape
    _, Hp2, Wp2, Pp = h1pad_ref.shape
    H, W = Hp2 - 2, Wp2 - 2
    Cout_p = w3_ref.shape[1]

    x = x_ref[...].reshape(B * HW, Cin_p)            # f32 copy kept for the residual

    # ---- conv1 (1x1) + bn1 + relu: one lane-dense bf16 matmul on the MXU ----
    h1 = jnp.dot(x.astype(jnp.bfloat16), w1_ref[...],
                 preferred_element_type=jnp.float32)
    h1 = jnp.maximum(h1 * s1_ref[...] + b1_ref[...], 0.0)

    # ---- conv2 (3x3, stride 1, pad 1) + bn2 + relu ----
    # Zero-halo scratch: memset + interior ref store (no concatenate-built padded
    # copy).  Memset every step keeps this correct under megacore partitioning.
    h1pad_ref[...] = jnp.zeros_like(h1pad_ref)
    h1pad_ref[:, 1:H + 1, 1:W + 1, :] = h1.reshape(B, H, W, Pp)
    # im2col: 9 shifted windows concatenated along channels -> ONE matmul with
    # contraction K = 9*Pp (keeps the MXU fed, removes the 8 VPU accumulation adds).
    windows = [h1pad_ref[:, ky:ky + H, kx:kx + W, :]
               for ky in range(3) for kx in range(3)]
    im2col = jnp.concatenate(windows, axis=-1).reshape(B * HW, 9 * Pp)
    h2 = jnp.dot(im2col.astype(jnp.bfloat16), w2_ref[...],
                 preferred_element_type=jnp.float32)
    h2 = jnp.maximum(h2 * s2_ref[...] + b2_ref[...], 0.0)

    # ---- conv3 (1x1) + bn3 + residual add + relu ----
    h3 = jnp.dot(h2.astype(jnp.bfloat16), w3_ref[...],
                 preferred_element_type=jnp.float32)
    h3 = h3 * s3_ref[...] + b3_ref[...]
    out = jnp.maximum(h3 + x, 0.0)        # downsample=None => residual = x (Cin_p == Cout_p)
    out_ref[...] = out.reshape(B, HW, Cout_p)        # lane-dense (128-multiple) store


# --------------------------- batch-tile selection --------------------------- #
def _pick_batch_tile(n, h, w, cin_p, pp, cout_p, vmem_budget):
    """Largest divisor of n that fits the VMEM budget; keep >=2 grid steps when
    possible so both TensorCores (v7x) / megacore halves get work."""
    hw = h * w
    weight_bytes = (cin_p * pp + 9 * pp * pp + pp * cout_p) * 2      # bf16
    def footprint(bt):
        x_blk = bt * hw * cin_p * 4
        o_blk = bt * hw * cout_p * 4
        halo = bt * (h + 2) * (w + 2) * pp * 4
        im2col = bt * hw * 9 * pp * (4 + 2)                          # f32 concat + bf16 cast
        return 2 * (x_blk + o_blk) + 2 * weight_bytes + halo + im2col + (1 << 20)
    divisors = [d for d in range(1, n + 1) if n % d == 0]
    fitting = [d for d in divisors if footprint(d) <= vmem_budget] or [1]
    multi_step = [d for d in fitting if n // d >= 2]
    return max(multi_step) if multi_step else max(fitting)


# ------------------------------ JAX wrapper -------------------------------- #
def bottleneck_forward(x_nchw, packed):
    (w1, s1, b1, w2, s2, b2, w3, s3, b3) = packed
    N, Cin, H, W = x_nchw.shape
    cin_p, pp = w1.shape
    cout_p = w3.shape[1]
    # Identity residual path requires inplanes == planes * expansion.
    assert cin_p == cout_p, "downsample=None requires inplanes == planes * expansion"
    HW = H * W

    # NCHW -> channel-minor (N, H*W, C); zero-pad channels to the 128-lane width.
    x = jnp.transpose(x_nchw, (0, 2, 3, 1)).reshape(N, HW, Cin)
    x = jnp.pad(x, ((0, 0), (0, 0), (0, cin_p - Cin))).astype(jnp.float32)

    bt = _pick_batch_tile(N, H, W, cin_p, pp, cout_p, VMEM_LIMIT_BYTES)
    grid = (N // bt,)

    def full(a):
        nd = a.ndim
        return pl.BlockSpec(a.shape, lambda n, _nd=nd: (0,) * _nd)

    out = pl.pallas_call(
        _bottleneck_kernel,
        grid=grid,
        in_specs=[pl.BlockSpec((bt, HW, cin_p), lambda n: (n, 0, 0)),
                  full(w1), full(s1), full(b1),
                  full(w2), full(s2), full(b2),
                  full(w3), full(s3), full(b3)],
        out_specs=pl.BlockSpec((bt, HW, cout_p), lambda n: (n, 0, 0)),
        out_shape=jax.ShapeDtypeStruct((N, HW, cout_p), jnp.float32),
        scratch_shapes=[pltpu.VMEM((bt, H + 2, W + 2, pp), jnp.float32)],
        compiler_params=pltpu.CompilerParams(
            dimension_semantics=("parallel",),
            vmem_limit_bytes=VMEM_LIMIT_BYTES),
    )(x, w1, s1, b1, w2, s2, b2, w3, s3, b3)

    # lane-dense padded output -> NCHW, drop channel padding
    out = out[:, :, :Cin].reshape(N, H, W, Cin)
    return jnp.transpose(out, (0, 3, 1, 2))


# --------------------- parameter folding / kernel packing ------------------- #
def pack_params(w1_t, w2_t, w3_t, bn1, bn2, bn3):
    """Fold BN into per-channel scale/bias; pad channel dims to LANE multiples;
    cast weights to bf16 for the MXU (f32 accumulation in-kernel)."""
    planes, inplanes = w1_t.shape[0], w1_t.shape[1]
    cout = w3_t.shape[0]
    cin_p = _round_up(inplanes, LANE)
    pp = _round_up(planes, LANE)
    cout_p = _round_up(cout, LANE)

    def fold(bn, cpad):
        g, b, m, v = bn
        scale = g / jnp.sqrt(v + EPS)
        bias = b - m * scale
        # zero padding keeps padded channels exactly 0 through BN/ReLU
        scale = jnp.pad(scale, (0, cpad - scale.shape[0])).reshape(1, cpad)
        bias = jnp.pad(bias, (0, cpad - bias.shape[0])).reshape(1, cpad)
        return scale.astype(jnp.float32), bias.astype(jnp.float32)

    s1, b1 = fold(bn1, pp)
    s2, b2 = fold(bn2, pp)
    s3, b3 = fold(bn3, cout_p)

    w1 = jnp.transpose(w1_t[:, :, 0, 0])                          # (Cin, P)
    w1 = jnp.pad(w1, ((0, cin_p - inplanes), (0, pp - planes))).astype(jnp.bfloat16)

    w2 = jnp.transpose(w2_t, (2, 3, 1, 0))                        # (3, 3, P_in, P_out)
    w2 = jnp.pad(w2, ((0, 0), (0, 0), (0, pp - planes), (0, pp - planes)))
    w2 = w2.reshape(9 * pp, pp).astype(jnp.bfloat16)              # fused-K (9*Pp, Pp) layout

    w3 = jnp.transpose(w3_t[:, :, 0, 0])                          # (P, Cout)
    w3 = jnp.pad(w3, ((0, pp - planes), (0, cout_p - cout))).astype(jnp.bfloat16)

    return (w1, s1, b1, w2, s2, b2, w3, s3, b3)


# ----------------------- deterministic parameter init ---------------------- #
def init_params(key, inplanes, planes):
    keys = jax.random.split(key, 15)
    cout3 = planes * EXPANSION

    # PyTorch conv weight layout: (out, in, kh, kw)
    w1_t = 0.1 * jax.random.normal(keys[0], (planes, inplanes, 1, 1), jnp.float32)
    w2_t = 0.1 * jax.random.normal(keys[1], (planes, planes, 3, 3), jnp.float32)
    w3_t = 0.1 * jax.random.normal(keys[2], (cout3, planes, 1, 1), jnp.float32)

    def bn_params(kg, kb, km, kv, c):
        gamma = 1.0 + 0.1 * jax.random.normal(kg, (c,), jnp.float32)
        beta = 0.1 * jax.random.normal(kb, (c,), jnp.float32)
        mean = 0.1 * jax.random.normal(km, (c,), jnp.float32)
        var = jnp.abs(jax.random.normal(kv, (c,), jnp.float32)) + 0.5
        return gamma, beta, mean, var

    bn1 = bn_params(keys[3], keys[4], keys[5], keys[6], planes)
    bn2 = bn_params(keys[7], keys[8], keys[9], keys[10], planes)
    bn3 = bn_params(keys[11], keys[12], keys[13], keys[14], cout3)
    return (w1_t, w2_t, w3_t, bn1, bn2, bn3)


# -------------------------- plain-JAX reference ----------------------------- #
def ref_forward(x, w1_t, w2_t, w3_t, bn1, bn2, bn3):
    def conv(x, w, pad):
        return lax.conv_general_dilated(
            x, w, (1, 1), [(pad, pad), (pad, pad)],
            dimension_numbers=('NCHW', 'OIHW', 'NCHW'))

    def bn(x, p):
        g, b, m, v = p
        g, b, m, v = (a[None, :, None, None] for a in (g, b, m, v))
        return g * (x - m) / jnp.sqrt(v + EPS) + b

    out = jax.nn.relu(bn(conv(x, w1_t, 0), bn1))
    out = jax.nn.relu(bn(conv(out, w2_t, 1), bn2))
    out = bn(conv(out, w3_t, 0), bn3)
    return jax.nn.relu(out + x)


if __name__ == "__main__":
    key = jax.random.PRNGKey(0)
    N, H, W = 2, 16, 16
    planes = 4
    inplanes = planes * EXPANSION   # downsample=None => inplanes == planes*4, stride=1

    kx, kp = jax.random.split(key)
    x = jax.random.normal(kx, (N, inplanes, H, W), jnp.float32)   # NCHW like PyTorch

    raw = init_params(kp, inplanes, planes)
    packed = pack_params(*raw)

    out = bottleneck_forward(x, packed)
    out = jax.block_until_ready(out)

    ref = ref_forward(x, *raw)
    assert out.shape == ref.shape == (N, planes * EXPANSION, H, W)
    max_err = float(jnp.max(jnp.abs(out - ref)))
    # bf16 MXU operands with f32 accumulation: tolerance comfortably above bf16
    # rounding noise but far below any structural error.
    assert jnp.allclose(out, ref, rtol=2e-2, atol=2e-2), max_err

    print("KERNEL_OK")
</pallas_src>

<mosaic_0001>
module attributes {stable_mosaic.version = 11 : i64} {
  func.func @_bottleneck_kernel(%arg0: i32, %arg1: memref<1x256x128xf32, #tpu.memory_space<vmem>>, %arg2: memref<128x128xbf16, #tpu.memory_space<vmem>>, %arg3: memref<1x128xf32, #tpu.memory_space<vmem>>, %arg4: memref<1x128xf32, #tpu.memory_space<vmem>>, %arg5: memref<1152x128xbf16, #tpu.memory_space<vmem>>, %arg6: memref<1x128xf32, #tpu.memory_space<vmem>>, %arg7: memref<1x128xf32, #tpu.memory_space<vmem>>, %arg8: memref<128x128xbf16, #tpu.memory_space<vmem>>, %arg9: memref<1x128xf32, #tpu.memory_space<vmem>>, %arg10: memref<1x128xf32, #tpu.memory_space<vmem>>, %arg11: memref<1x256x128xf32, #tpu.memory_space<vmem>>, %arg12: memref<1x18x18x128xf32, #tpu.memory_space<vmem>>) attributes {dimension_semantics = [#tpu.dimension_semantics<parallel>], iteration_bounds = array<i64: 2>, scalar_prefetch = 0 : i64, scratch_operands = 1 : i64, tpu.core_type = #tpu.core_type<tc>, window_params = [{transform_indices = @transform_0, window_bounds = array<i64: 1, 256, 128>}, {pipeline_mode = #tpu.pipeline_mode<synchronous>, transform_indices = @transform_1, window_bounds = array<i64: 128, 128>}, {pipeline_mode = #tpu.pipeline_mode<synchronous>, transform_indices = @transform_2, window_bounds = array<i64: 1, 128>}, {pipeline_mode = #tpu.pipeline_mode<synchronous>, transform_indices = @transform_3, window_bounds = array<i64: 1, 128>}, {pipeline_mode = #tpu.pipeline_mode<synchronous>, transform_indices = @transform_4, window_bounds = array<i64: 1152, 128>}, {pipeline_mode = #tpu.pipeline_mode<synchronous>, transform_indices = @transform_5, window_bounds = array<i64: 1, 128>}, {pipeline_mode = #tpu.pipeline_mode<synchronous>, transform_indices = @transform_6, window_bounds = array<i64: 1, 128>}, {pipeline_mode = #tpu.pipeline_mode<synchronous>, transform_indices = @transform_7, window_bounds = array<i64: 128, 128>}, {pipeline_mode = #tpu.pipeline_mode<synchronous>, transform_indices = @transform_8, window_bounds = array<i64: 1, 128>}, {pipeline_mode = #tpu.pipeline_mode<synchronous>, transform_indices = @transform_9, window_bounds = array<i64: 1, 128>}, {transform_indices = @transform_10, window_bounds = array<i64: 1, 256, 128>}]} {
    %c0 = arith.constant 0 : index
    %c0_0 = arith.constant 0 : index
    %c0_1 = arith.constant 0 : index
    %0 = vector.load %arg1[%c0, %c0_0, %c0_1] : memref<1x256x128xf32, #tpu.memory_space<vmem>>, vector<1x256x128xf32>
    %1 = vector.shape_cast %0 : vector<1x256x128xf32> to vector<256x128xf32>
    %2 = arith.truncf %1 : vector<256x128xf32> to vector<256x128xbf16>
    %c0_2 = arith.constant 0 : index
    %c0_3 = arith.constant 0 : index
    %3 = vector.load %arg2[%c0_2, %c0_3] : memref<128x128xbf16, #tpu.memory_space<vmem>>, vector<128x128xbf16>
    %cst = arith.constant dense<0.000000e+00> : vector<256x128xf32>
    %4 = tpu.matmul %2, %3, %cst {dimension_numbers = #tpu.dot_dimension_numbers<[1], [0], [0], [1], [0, 0, 1, 1], [], []>} : vector<256x128xbf16>, vector<128x128xbf16>, vector<256x128xf32> -> vector<256x128xf32>
    %c0_4 = arith.constant 0 : index
    %c0_5 = arith.constant 0 : index
    %5 = vector.load %arg3[%c0_4, %c0_5] : memref<1x128xf32, #tpu.memory_space<vmem>>, vector<1x128xf32>
    %6 = vector.broadcast %5 : vector<1x128xf32> to vector<256x128xf32>
    %7 = arith.mulf %4, %6 : vector<256x128xf32>
    %c0_6 = arith.constant 0 : index
    %c0_7 = arith.constant 0 : index
    %8 = vector.load %arg4[%c0_6, %c0_7] : memref<1x128xf32, #tpu.memory_space<vmem>>, vector<1x128xf32>
    %9 = vector.broadcast %8 : vector<1x128xf32> to vector<256x128xf32>
    %10 = arith.addf %7, %9 : vector<256x128xf32>
    %cst_8 = arith.constant 0.000000e+00 : f32
    %11 = vector.broadcast %cst_8 : f32 to vector<256x128xf32>
    %12 = arith.maximumf %10, %11 : vector<256x128xf32>
    %cst_9 = arith.constant 0.000000e+00 : f32
    %13 = vector.broadcast %cst_9 : f32 to vector<1x18x18x128xf32>
    %c0_10 = arith.constant 0 : index
    %c0_11 = arith.constant 0 : index
    %c0_12 = arith.constant 0 : index
    %c0_13 = arith.constant 0 : index
    %14 = vector.load %arg12[%c0_10, %c0_11, %c0_12, %c0_13] : memref<1x18x18x128xf32, #tpu.memory_space<vmem>>, vector<1x18x18x128xf32>
    tpu.vector_store %arg12[%c0_10, %c0_11, %c0_12, %c0_13], %13 {strides = array<i32>} : memref<1x18x18x128xf32, #tpu.memory_space<vmem>>, vector<1x18x18x128xf32>,
    %15 = vector.shape_cast %12 : vector<256x128xf32> to vector<1x16x16x128xf32>
    %c0_14 = arith.constant 0 : index
    %c1 = arith.constant 1 : index
    %c1_15 = arith.constant 1 : index
    %c0_16 = arith.constant 0 : index
    %16 = vector.load %arg12[%c0_14, %c1, %c1_15, %c0_16] : memref<1x18x18x128xf32, #tpu.memory_space<vmem>>, vector<1x16x16x128xf32>
    tpu.vector_store %arg12[%c0_14, %c1, %c1_15, %c0_16], %15 {strides = array<i32>} : memref<1x18x18x128xf32, #tpu.memory_space<vmem>>, vector<1x16x16x128xf32>,
    %c0_17 = arith.constant 0 : index
    %c0_18 = arith.constant 0 : index
    %c0_19 = arith.constant 0 : index
    %c0_20 = arith.constant 0 : index
    %17 = vector.load %arg12[%c0_17, %c0_18, %c0_19, %c0_20] : memref<1x18x18x128xf32, #tpu.memory_space<vmem>>, vector<1x16x16x128xf32>
    %c0_21 = arith.constant 0 : index
    %c0_22 = arith.constant 0 : index
    %c1_23 = arith.constant 1 : index
    %c0_24 = arith.constant 0 : index
    %18 = vector.load %arg12[%c0_21, %c0_22, %c1_23, %c0_24] : memref<1x18x18x128xf32, #tpu.memory_space<vmem>>, vector<1x16x16x128xf32>
    %c0_25 = arith.constant 0 : index
    %c0_26 = arith.constant 0 : index
    %c2 = arith.constant 2 : index
    %c0_27 = arith.constant 0 : index
    %19 = vector.load %arg12[%c0_25, %c0_26, %c2, %c0_27] : memref<1x18x18x128xf32, #tpu.memory_space<vmem>>, vector<1x16x16x128xf32>
    %c0_28 = arith.constant 0 : index
    %c1_29 = arith.constant 1 : index
    %c0_30 = arith.constant 0 : index
    %c0_31 = arith.constant 0 : index
    %20 = vector.load %arg12[%c0_28, %c1_29, %c0_30, %c0_31] : memref<1x18x18x128xf32, #tpu.memory_space<vmem>>, vector<1x16x16x128xf32>
    %c0_32 = arith.constant 0 : index
    %c1_33 = arith.constant 1 : index
    %c1_34 = arith.constant 1 : index
    %c0_35 = arith.constant 0 : index
    %21 = vector.load %arg12[%c0_32, %c1_33, %c1_34, %c0_35] : memref<1x18x18x128xf32, #tpu.memory_space<vmem>>, vector<1x16x16x128xf32>
    %c0_36 = arith.constant 0 : index
    %c1_37 = arith.constant 1 : index
    %c2_38 = arith.constant 2 : index
    %c0_39 = arith.constant 0 : index
    %22 = vector.load %arg12[%c0_36, %c1_37, %c2_38, %c0_39] : memref<1x18x18x128xf32, #tpu.memory_space<vmem>>, vector<1x16x16x128xf32>
    %c0_40 = arith.constant 0 : index
    %c2_41 = arith.constant 2 : index
    %c0_42 = arith.constant 0 : index
    %c0_43 = arith.constant 0 : index
    %23 = vector.load %arg12[%c0_40, %c2_41, %c0_42, %c0_43] : memref<1x18x18x128xf32, #tpu.memory_space<vmem>>, vector<1x16x16x128xf32>
    %c0_44 = arith.constant 0 : index
    %c2_45 = arith.constant 2 : index
    %c1_46 = arith.constant 1 : index
    %c0_47 = arith.constant 0 : index
    %24 = vector.load %arg12[%c0_44, %c2_45, %c1_46, %c0_47] : memref<1x18x18x128xf32, #tpu.memory_space<vmem>>, vector<1x16x16x128xf32>
    %c0_48 = arith.constant 0 : index
    %c2_49 = arith.constant 2 : index
    %c2_50 = arith.constant 2 : index
    %c0_51 = arith.constant 0 : index
    %25 = vector.load %arg12[%c0_48, %c2_49, %c2_50, %c0_51] : memref<1x18x18x128xf32, #tpu.memory_space<vmem>>, vector<1x16x16x128xf32>
    %26 = tpu.concatenate %17, %18, %19, %20, %21, %22, %23, %24, %25 in 3 : vector<1x16x16x128xf32>, vector<1x16x16x128xf32>, vector<1x16x16x128xf32>, vector<1x16x16x128xf32>, vector<1x16x16x128xf32>, vector<1x16x16x128xf32>, vector<1x16x16x128xf32>, vector<1x16x16x128xf32>, vector<1x16x16x128xf32> -> vector<1x16x16x1152xf32>
    %27 = vector.shape_cast %26 : vector<1x16x16x1152xf32> to vector<256x1152xf32>
    %28 = arith.truncf %27 : vector<256x1152xf32> to vector<256x1152xbf16>
    %c0_52 = arith.constant 0 : index
    %c0_53 = arith.constant 0 : index
    %29 = vector.load %arg5[%c0_52, %c0_53] : memref<1152x128xbf16, #tpu.memory_space<vmem>>, vector<1152x128xbf16>
    %cst_54 = arith.constant dense<0.000000e+00> : vector<256x128xf32>
    %30 = tpu.matmul %28, %29, %cst_54 {dimension_numbers = #tpu.dot_dimension_numbers<[1], [0], [0], [1], [0, 0, 1, 1], [], []>} : vector<256x1152xbf16>, vector<1152x128xbf16>, vector<256x128xf32> -> vector<256x128xf32>
    %c0_55 = arith.constant 0 : index
    %c0_56 = arith.constant 0 : index
    %31 = vector.load %arg6[%c0_55, %c0_56] : memref<1x128xf32, #tpu.memory_space<vmem>>, vector<1x128xf32>
    %32 = vector.broadcast %31 : vector<1x128xf32> to vector<256x128xf32>
    %33 = arith.mulf %30, %32 : vector<256x128xf32>
    %c0_57 = arith.constant 0 : index
    %c0_58 = arith.constant 0 : index
    %34 = vector.load %arg7[%c0_57, %c0_58] : memref<1x128xf32, #tpu.memory_space<vmem>>, vector<1x128xf32>
    %35 = vector.broadcast %34 : vector<1x128xf32> to vector<256x128xf32>
    %36 = arith.addf %33, %35 : vector<256x128xf32>
    %cst_59 = arith.constant 0.000000e+00 : f32
    %37 = vector.broadcast %cst_59 : f32 to vector<256x128xf32>
    %38 = arith.maximumf %36, %37 : vector<256x128xf32>
    %39 = arith.truncf %38 : vector<256x128xf32> to vector<256x128xbf16>
    %c0_60 = arith.constant 0 : index
    %c0_61 = arith.constant 0 : index
    %40 = vector.load %arg8[%c0_60, %c0_61] : memref<128x128xbf16, #tpu.memory_space<vmem>>, vector<128x128xbf16>
    %cst_62 = arith.constant dense<0.000000e+00> : vector<256x128xf32>
    %41 = tpu.matmul %39, %40, %cst_62 {dimension_numbers = #tpu.dot_dimension_numbers<[1], [0], [0], [1], [0, 0, 1, 1], [], []>} : vector<256x128xbf16>, vector<128x128xbf16>, vector<256x128xf32> -> vector<256x128xf32>
    %c0_63 = arith.constant 0 : index
    %c0_64 = arith.constant 0 : index
    %42 = vector.load %arg9[%c0_63, %c0_64] : memref<1x128xf32, #tpu.memory_space<vmem>>, vector<1x128xf32>
    %43 = vector.broadcast %42 : vector<1x128xf32> to vector<256x128xf32>
    %44 = arith.mulf %41, %43 : vector<256x128xf32>
    %c0_65 = arith.constant 0 : index
    %c0_66 = arith.constant 0 : index
    %45 = vector.load %arg10[%c0_65, %c0_66] : memref<1x128xf32, #tpu.memory_space<vmem>>, vector<1x128xf32>
    %46 = vector.broadcast %45 : vector<1x128xf32> to vector<256x128xf32>
    %47 = arith.addf %44, %46 : vector<256x128xf32>
    %48 = arith.addf %47, %1 : vector<256x128xf32>
    %cst_67 = arith.constant 0.000000e+00 : f32
    %49 = vector.broadcast %cst_67 : f32 to vector<256x128xf32>
    %50 = arith.maximumf %48, %49 : vector<256x128xf32>
    %51 = vector.shape_cast %50 : vector<256x128xf32> to vector<1x256x128xf32>
    %c0_68 = arith.constant 0 : index
    %c0_69 = arith.constant 0 : index
    %c0_70 = arith.constant 0 : index
    %52 = vector.load %arg11[%c0_68, %c0_69, %c0_70] : memref<1x256x128xf32, #tpu.memory_space<vmem>>, vector<1x256x128xf32>
    tpu.vector_store %arg11[%c0_68, %c0_69, %c0_70], %51 {strides = array<i32>} : memref<1x256x128xf32, #tpu.memory_space<vmem>>, vector<1x256x128xf32>,
    return
  }
  func.func @transform_0(%arg0: i32) -> (i32, i32, i32) {
    %c0_i32 = arith.constant 0 : i32
    %c0_i32_0 = arith.constant 0 : i32
    %c0_i32_1 = arith.constant 0 : i32
    return %arg0, %c0_i32, %c0_i32_0 : i32, i32, i32
  }
  func.func @transform_1(%arg0: i32) -> (i32, i32) {
    %c0_i32 = arith.constant 0 : i32
    %c0_i32_0 = arith.constant 0 : i32
    %c0_i32_1 = arith.constant 0 : i32
    return %c0_i32, %c0_i32_0 : i32, i32
  }
  func.func @transform_2(%arg0: i32) -> (i32, i32) {
    %c0_i32 = arith.constant 0 : i32
    %c0_i32_0 = arith.constant 0 : i32
    %c0_i32_1 = arith.constant 0 : i32
    return %c0_i32, %c0_i32_0 : i32, i32
  }
  func.func @transform_3(%arg0: i32) -> (i32, i32) {
    %c0_i32 = arith.constant 0 : i32
    %c0_i32_0 = arith.constant 0 : i32
    %c0_i32_1 = arith.constant 0 : i32
    return %c0_i32, %c0_i32_0 : i32, i32
  }
  func.func @transform_4(%arg0: i32) -> (i32, i32) {
    %c0_i32 = arith.constant 0 : i32
    %c0_i32_0 = arith.constant 0 : i32
    %c0_i32_1 = arith.constant 0 : i32
    return %c0_i32, %c0_i32_0 : i32, i32
  }
  func.func @transform_5(%arg0: i32) -> (i32, i32) {
    %c0_i32 = arith.constant 0 : i32
    %c0_i32_0 = arith.constant 0 : i32
    %c0_i32_1 = arith.constant 0 : i32
    return %c0_i32, %c0_i32_0 : i32, i32
  }
  func.func @transform_6(%arg0: i32) -> (i32, i32) {
    %c0_i32 = arith.constant 0 : i32
    %c0_i32_0 = arith.constant 0 : i32
    %c0_i32_1 = arith.constant 0 : i32
    return %c0_i32, %c0_i32_0 : i32, i32
  }
  func.func @transform_7(%arg0: i32) -> (i32, i32) {
    %c0_i32 = arith.constant 0 : i32
    %c0_i32_0 = arith.constant 0 : i32
    %c0_i32_1 = arith.constant 0 : i32
    return %c0_i32, %c0_i32_0 : i32, i32
  }
  func.func @transform_8(%arg0: i32) -> (i32, i32) {
    %c0_i32 = arith.constant 0 : i32
    %c0_i32_0 = arith.constant 0 : i32
    %c0_i32_1 = arith.constant 0 : i32
    return %c0_i32, %c0_i32_0 : i32, i32
  }
  func.func @transform_9(%arg0: i32) -> (i32, i32) {
    %c0_i32 = arith.constant 0 : i32
    %c0_i32_0 = arith.constant 0 : i32
    %c0_i32_1 = arith.constant 0 : i32
    return %c0_i32, %c0_i32_0 : i32, i32
  }
  func.func @transform_10(%arg0: i32) -> (i32, i32, i32) {
    %c0_i32 = arith.constant 0 : i32
    %c0_i32_0 = arith.constant 0 : i32
    %c0_i32_1 = arith.constant 0 : i32
    return %arg0, %c0_i32, %c0_i32_0 : i32, i32, i32
  }
}

</mosaic_0001>

<llo_original>
// kernel: tpu_custom_call.1
$region0: #{tpu_custom_call.1}
  #allocation0 [shape = 'u32[]', space=smem, size = 0x4, offset = 0x4, fixed_abs, tag = 'smem constant byte address 0x4 - core index']
  #allocation1 [shape = 'u32[72,128]{1,0:T(1,128)}', space=vmem, size = 0x9000, scoped, tag = 'internal scratch']
  #allocation2 [shape = 'f32[1,18,18,128]{3,2,1,0:T(8,128)}', space=vmem, size = 0x36000, scoped, tag = 'scratch operand']
  %s0 = inlined_call_operand.hbm [shape: f32[2,256,128], index: 0, kind: input, shape index: {}]
  %s1 = inlined_call_operand.hbm [shape: bf16[128,128], index: 1, kind: input, shape index: {}]
  %s2 = inlined_call_operand.vmem [shape: f32[1,128], index: 2, kind: input, shape index: {}]
  %s3 = inlined_call_operand.vmem [shape: f32[1,128], index: 3, kind: input, shape index: {}]
  %s4 = inlined_call_operand.hbm [shape: bf16[1152,128], index: 4, kind: input, shape index: {}]
  %s5 = inlined_call_operand.vmem [shape: f32[1,128], index: 5, kind: input, shape index: {}]
  %s6 = inlined_call_operand.vmem [shape: f32[1,128], index: 6, kind: input, shape index: {}]
  %s7 = inlined_call_operand.hbm [shape: bf16[128,128], index: 7, kind: input, shape index: {}]
  %s8 = inlined_call_operand.vmem [shape: f32[1,128], index: 8, kind: input, shape index: {}]
  %s9 = inlined_call_operand.vmem [shape: f32[1,128], index: 9, kind: input, shape index: {}]
  %s10 = inlined_call_operand.hbm [shape: f32[2,256,128], index: 10, kind: output, shape index: {}]
  %s11 = sld [smem:[#allocation0]]
  $region89: #{tpu_custom_call.1} parent=0
    _
  %s13 = ssub.s32 1, %s11
  %s14 = scalar_select 0, %s13, %s11
  $region1: #{tpu_custom_call.1} parent=0
    #allocation3 [shape = 'u8[262144]{0}', space=vmem, size = 0x40000, scoped, tag = 'input window, operand 0']
    #allocation4 [shape = 's32[2]{0}', space=sflag, size = 0x8, scoped, tag = 'scoped memory for tpu_custom_call.1']
    #allocation5 [shape = 's32[2]{0}', space=sflag, size = 0x8, scoped, tag = 'scoped memory for tpu_custom_call.1']
    #allocation6 [shape = 'u8[32768]{0}', space=vmem, size = 0x8000, scoped, tag = 'input window, operand 1, single buffered']
    #allocation7 [shape = 's32[1]{0}', space=sflag, size = 0x4, scoped, tag = 'scoped memory for tpu_custom_call.1']
    #allocation8 [shape = 'u8[294912]{0}', space=vmem, size = 0x48000, scoped, tag = 'input window, operand 4, single buffered']
    #allocation9 [shape = 'u8[32768]{0}', space=vmem, size = 0x8000, scoped, tag = 'input window, operand 7, single buffered']
    #allocation10 [shape = 's32[1]{0}', space=sflag, size = 0x4, scoped, tag = 'scoped memory for tpu_custom_call.1']
    #allocation11 [shape = 'u8[262144]{0}', space=vmem, size = 0x40000, scoped, tag = 'output window, operand 0']
    %15 = vsyncpa [#allocation4], 0
    %s16 = scalar_lea.sflag [#allocation4], 1
    %17 = vsyncpa %s16, 0
    %18 = vsyncpa [#allocation7], 0
    %19 = vsyncpa [#allocation10], 0
    %20 = vsyncpa [#allocation5], 0
    %s21 = scalar_lea.sflag [#allocation5], 1
    %22 = vsyncpa %s21, 0
    loop: start=0, step=1, limit=4
    $region2: #{tpu_custom_call.1} parent=1 // loop_pre_header
      _
    $region3: #{tpu_custom_call.1} parent=1 // loop_header
      %s24 = sphi 0, %s28
      %p25 = scmp.ge.s32.totalorder %s24, 4
      %s34 = sphi 0, %s36
      %s37 = sphi 0, %s34
      %s38 = sphi 0, %s37
      %s54 = sphi 0, %s38
      %s58 = sphi 0, %s58
      %s60 = sphi 0, %s58
      %s61 = sphi 0, %s60
      %s75 = sphi 0, %s61
      %s79 = sphi 0, %s79
      %s81 = sphi 0, %s79
      %s82 = sphi 0, %s81
      %s96 = sphi 0, %s82
      %s100 = sphi 0, %s100
      %s102 = sphi 0, %s100
      %s103 = sphi 0, %s102
      %s117 = sphi 0, %s103
      %s121 = sphi 0, %s121
      %s123 = sphi 0, %s121
      %s124 = sphi 0, %s123
      %s138 = sphi 0, %s124
      %s142 = sphi 0, %s142
      %s144 = sphi 0, %s142
      %s145 = sphi 0, %s144
      %s159 = sphi 0, %s145
      %s163 = sphi 0, %s163
      %s165 = sphi 0, %s163
      %s166 = sphi 0, %s165
      %s180 = sphi 0, %s166
      %s184 = sphi 0, %s184
      %s186 = sphi 0, %s184
      %s187 = sphi 0, %s186
      %s201 = sphi 0, %s187
      %s205 = sphi 0, %s205
      %s207 = sphi 0, %s205
      %s208 = sphi 0, %s207
      %s222 = sphi 0, %s208
      %s226 = sphi 0, %s226
      %s228 = sphi 0, %s226
      %s229 = sphi 0, %s228
      %s243 = sphi 0, %s229
      %s249 = sphi 0, %s251
      %s252 = sphi 0, %s249
      %s253 = sphi 0, %s252
      %s269 = sphi 0, %s253
    $region4: #{tpu_custom_call.1} parent=1 // loop_header_branch
      %27 = sbr.rel (%p25) target = $region8
    $region5: #{tpu_custom_call.1} parent=1 // loop_body
      %s29 = ssub.s32 %s24, 1
      %s30 = ssub.s32 %s24, 2
      %s31 = sadd.s32 %s24, 1
      %s32 = ssub.s32 %s24, %s31
      %p33 = scmp.eq.s32.totalorder %s32, 0
      %s35 = sadd.s32 %s34, 1
      %s36 = scalar_select %p33, %s34, %s35
      %p39 = pneg %p33
      %p40 = scmp.eq.s32.totalorder %s24, 1
      %p41 = por %p39, %p40
      %p42 = scmp.ne.s32.totalorder %s34, %s37
      %p43 = scmp.eq.s32.totalorder %s24, 0
      %p44 = por %p42, %p43
      %p45 = scmp.ne.s32.totalorder %s34, %s37
      %p46 = scmp.eq.s32.totalorder %s29, 1
      %p47 = por %p45, %p46
      %p48 = scmp.ne.s32.totalorder %s37, %s38
      %p49 = scmp.eq.s32.totalorder %s29, 0
      %p50 = por %p48, %p49
      %p51 = scmp.ne.s32.totalorder %s37, %s38
      %p52 = scmp.eq.s32.totalorder %s30, 1
      %p53 = por %p51, %p52
      %p55 = scmp.ne.s32.totalorder %s38, %s54
      %p56 = scmp.eq.s32.totalorder %s30, 0
      %p57 = por %p55, %p56
      %s59 = sadd.s32 %s58, 1
      %p62 = scmp.eq.s32.totalorder %s24, 1
      %p63 = scmp.ne.s32.totalorder %s58, %s60
      %p64 = scmp.eq.s32.totalorder %s24, 0
      %p65 = por %p63, %p64
      %p66 = scmp.ne.s32.totalorder %s58, %s60
      %p67 = scmp.eq.s32.totalorder %s29, 1
      %p68 = por %p66, %p67
      %p69 = scmp.ne.s32.totalorder %s60, %s61
      %p70 = scmp.eq.s32.totalorder %s29, 0
      %p71 = por %p69, %p70
      %p72 = scmp.ne.s32.totalorder %s60, %s61
      %p73 = scmp.eq.s32.totalorder %s30, 1
      %p74 = por %p72, %p73
      %p76 = scmp.ne.s32.totalorder %s61, %s75
      %p77 = scmp.eq.s32.totalorder %s30, 0
      %p78 = por %p76, %p77
      %s80 = sadd.s32 %s79, 1
      %p83 = scmp.eq.s32.totalorder %s24, 1
      %p84 = scmp.ne.s32.totalorder %s79, %s81
      %p85 = scmp.eq.s32.totalorder %s24, 0
      %p86 = por %p84, %p85
      %p87 = scmp.ne.s32.totalorder %s79, %s81
      %p88 = scmp.eq.s32.totalorder %s29, 1
      %p89 = por %p87, %p88
      %p90 = scmp.ne.s32.totalorder %s81, %s82
      %p91 = scmp.eq.s32.totalorder %s29, 0
      %p92 = por %p90, %p91
      %p93 = scmp.ne.s32.totalorder %s81, %s82
      %p94 = scmp.eq.s32.totalorder %s30, 1
      %p95 = por %p93, %p94
      %p97 = scmp.ne.s32.totalorder %s82, %s96
      %p98 = scmp.eq.s32.totalorder %s30, 0
      %p99 = por %p97, %p98
      %s101 = sadd.s32 %s100, 1
      %p104 = scmp.eq.s32.totalorder %s24, 1
      %p105 = scmp.ne.s32.totalorder %s100, %s102
      %p106 = scmp.eq.s32.totalorder %s24, 0
      %p107 = por %p105, %p106
      %p108 = scmp.ne.s32.totalorder %s100, %s102
      %p109 = scmp.eq.s32.totalorder %s29, 1
      %p110 = por %p108, %p109
      %p111 = scmp.ne.s32.totalorder %s102, %s103
      %p112 = scmp.eq.s32.totalorder %s29, 0
      %p113 = por %p111, %p112
      %p114 = scmp.ne.s32.totalorder %s102, %s103
      %p115 = scmp.eq.s32.totalorder %s30, 1
      %p116 = por %p114, %p115
      %p118 = scmp.ne.s32.totalorder %s103, %s117
      %p119 = scmp.eq.s32.totalorder %s30, 0
      %p120 = por %p118, %p119
      %s122 = sadd.s32 %s121, 1
      %p125 = scmp.eq.s32.totalorder %s24, 1
      %p126 = scmp.ne.s32.totalorder %s121, %s123
      %p127 = scmp.eq.s32.totalorder %s24, 0
      %p128 = por %p126, %p127
      %p129 = scmp.ne.s32.totalorder %s121, %s123
      %p130 = scmp.eq.s32.totalorder %s29, 1
      %p131 = por %p129, %p130
      %p132 = scmp.ne.s32.totalorder %s123, %s124
      %p133 = scmp.eq.s32.totalorder %s29, 0
      %p134 = por %p132, %p133
      %p135 = scmp.ne.s32.totalorder %s123, %s124
      %p136 = scmp.eq.s32.totalorder %s30, 1
      %p137 = por %p135, %p136
      %p139 = scmp.ne.s32.totalorder %s124, %s138
      %p140 = scmp.eq.s32.totalorder %s30, 0
      %p141 = por %p139, %p140
      %s143 = sadd.s32 %s142, 1
      %p146 = scmp.eq.s32.totalorder %s24, 1
      %p147 = scmp.ne.s32.totalorder %s142, %s144
      %p148 = scmp.eq.s32.totalorder %s24, 0
      %p149 = por %p147, %p148
      %p150 = scmp.ne.s32.totalorder %s142, %s144
      %p151 = scmp.eq.s32.totalorder %s29, 1
      %p152 = por %p150, %p151
      %p153 = scmp.ne.s32.totalorder %s144, %s145
      %p154 = scmp.eq.s32.totalorder %s29, 0
      %p155 = por %p153, %p154
      %p156 = scmp.ne.s32.totalorder %s144, %s145
      %p157 = scmp.eq.s32.totalorder %s30, 1
      %p158 = por %p156, %p157
      %p160 = scmp.ne.s32.totalorder %s145, %s159
      %p161 = scmp.eq.s32.totalorder %s30, 0
      %p162 = por %p160, %p161
      %s164 = sadd.s32 %s163, 1
      %p167 = scmp.eq.s32.totalorder %s24, 1
      %p168 = scmp.ne.s32.totalorder %s163, %s165
      %p169 = scmp.eq.s32.totalorder %s24, 0
      %p170 = por %p168, %p169
      %p171 = scmp.ne.s32.totalorder %s163, %s165
      %p172 = scmp.eq.s32.totalorder %s29, 1
      %p173 = por %p171, %p172
      %p174 = scmp.ne.s32.totalorder %s165, %s166
      %p175 = scmp.eq.s32.totalorder %s29, 0
      %p176 = por %p174, %p175
      %p177 = scmp.ne.s32.totalorder %s165, %s166
      %p178 = scmp.eq.s32.totalorder %s30, 1
      %p179 = por %p177, %p178
      %p181 = scmp.ne.s32.totalorder %s166, %s180
      %p182 = scmp.eq.s32.totalorder %s30, 0
      %p183 = por %p181, %p182
      %s185 = sadd.s32 %s184, 1
      %p188 = scmp.eq.s32.totalorder %s24, 1
      %p189 = scmp.ne.s32.totalorder %s184, %s186
      %p190 = scmp.eq.s32.totalorder %s24, 0
      %p191 = por %p189, %p190
      %p192 = scmp.ne.s32.totalorder %s184, %s186
      %p193 = scmp.eq.s32.totalorder %s29, 1
      %p194 = por %p192, %p193
      %p195 = scmp.ne.s32.totalorder %s186, %s187
      %p196 = scmp.eq.s32.totalorder %s29, 0
      %p197 = por %p195, %p196
      %p198 = scmp.ne.s32.totalorder %s186, %s187
      %p199 = scmp.eq.s32.totalorder %s30, 1
      %p200 = por %p198, %p199
      %p202 = scmp.ne.s32.totalorder %s187, %s201
      %p203 = scmp.eq.s32.totalorder %s30, 0
      %p204 = por %p202, %p203
      %s206 = sadd.s32 %s205, 1
      %p209 = scmp.eq.s32.totalorder %s24, 1
      %p210 = scmp.ne.s32.totalorder %s205, %s207
      %p211 = scmp.eq.s32.totalorder %s24, 0
      %p212 = por %p210, %p211
      %p213 = scmp.ne.s32.totalorder %s205, %s207
      %p214 = scmp.eq.s32.totalorder %s29, 1
      %p215 = por %p213, %p214
      %p216 = scmp.ne.s32.totalorder %s207, %s208
      %p217 = scmp.eq.s32.totalorder %s29, 0
      %p218 = por %p216, %p217
      %p219 = scmp.ne.s32.totalorder %s207, %s208
      %p220 = scmp.eq.s32.totalorder %s30, 1
      %p221 = por %p219, %p220
      %p223 = scmp.ne.s32.totalorder %s208, %s222
      %p224 = scmp.eq.s32.totalorder %s30, 0
      %p225 = por %p223, %p224
      %s227 = sadd.s32 %s226, 1
      %p230 = scmp.eq.s32.totalorder %s24, 1
      %p231 = scmp.ne.s32.totalorder %s226, %s228
      %p232 = scmp.eq.s32.totalorder %s24, 0
      %p233 = por %p231, %p232
      %p234 = scmp.ne.s32.totalorder %s226, %s228
      %p235 = scmp.eq.s32.totalorder %s29, 1
      %p236 = por %p234, %p235
      %p237 = scmp.ne.s32.totalorder %s228, %s229
      %p238 = scmp.eq.s32.totalorder %s29, 0
      %p239 = por %p237, %p238
      %p240 = scmp.ne.s32.totalorder %s228, %s229
      %p241 = scmp.eq.s32.totalorder %s30, 1
      %p242 = por %p240, %p241
      %p244 = scmp.ne.s32.totalorder %s229, %s243
      %p245 = scmp.eq.s32.totalorder %s30, 0
      %p246 = por %p244, %p245
      %s247 = ssub.s32 %s24, %s31
      %p248 = scmp.eq.s32.totalorder %s247, 0
      %s250 = sadd.s32 %s249, 1
      %s251 = scalar_select %p248, %s249, %s250
      %p254 = pneg %p248
      %p255 = scmp.eq.s32.totalorder %s24, 1
      %p256 = por %p254, %p255
      %p257 = scmp.ne.s32.totalorder %s249, %s252
      %p258 = scmp.eq.s32.totalorder %s24, 0
      %p259 = por %p257, %p258
      %p260 = scmp.ne.s32.totalorder %s249, %s252
      %p261 = scmp.eq.s32.totalorder %s29, 1
      %p262 = por %p260, %p261
      %p263 = scmp.ne.s32.totalorder %s252, %s253
      %p264 = scmp.eq.s32.totalorder %s29, 0
      %p265 = por %p263, %p264
      %p266 = scmp.ne.s32.totalorder %s252, %s253
      %p267 = scmp.eq.s32.totalorder %s30, 1
      %p268 = por %p266, %p267
      %p270 = scmp.ne.s32.totalorder %s253, %s269
      %p271 = scmp.eq.s32.totalorder %s30, 0
      %p272 = por %p270, %p271
      %p273 = scmp.le.s32.totalorder 1, %s24
      %p274 = scmp.lt.s32.totalorder %s24, 3
      %p275 = pnand %p273, %p274
      %p276 = pneg %p275
      // Predicated region
      $region9: #{tpu_custom_call.1} parent=5 // pred_check
        _
      $region10: #{tpu_custom_call.1} parent=5 // pred_check_branch
        %278 = sbr.rel (%p275) target = $region12
      $region11: #{tpu_custom_call.1} parent=5 // pred_region
        %s279 = ssub.s32 %s24, 1
        // Predicated region
        $region13: #{tpu_custom_call.1} parent=11 // pred_check
          %p280 = pneg %p71
        $region14: #{tpu_custom_call.1} parent=11 // pred_check_branch
          %282 = sbr.rel (%p280) target = $region16
        $region15: #{tpu_custom_call.1} parent=11 // pred_region
          %284 = vsyncadd [#allocation7], 0
          %s285 = sshll.u32 %s1, 4
          %s286 = int_to_ptr.hbm [resolvable:$true] %s285
          %s287 = sshll.u32 [#allocation6], 4
          %s288 = int_to_ptr.vmem [resolvable:$true] %s287
          %293 = dma.hbm_to_vmem [thread:$0]  %s286, 1024, %s288, [#allocation7], 64, 64, 4
        $region16: #{tpu_custom_call.1} parent=11 // pred_fallthru
          _
        // Predicated region
        $region17: #{tpu_custom_call.1} parent=11 // pred_check
          %p294 = pneg %p92
        $region18: #{tpu_custom_call.1} parent=11 // pred_check_branch
          %296 = sbr.rel (%p294) target = $region20
        $region19: #{tpu_custom_call.1} parent=11 // pred_region
          _
        $region20: #{tpu_custom_call.1} parent=11 // pred_fallthru
          _
        // Predicated region
        $region21: #{tpu_custom_call.1} parent=11 // pred_check
          %p297 = pneg %p113
        $region22: #{tpu_custom_call.1} parent=11 // pred_check_branch
          %299 = sbr.rel (%p297) target = $region24
        $region23: #{tpu_custom_call.1} parent=11 // pred_region
          _
        $region24: #{tpu_custom_call.1} parent=11 // pred_fallthru
          _
        // Predicated region
        $region25: #{tpu_custom_call.1} parent=11 // pred_check
          %p300 = pneg %p134
        $region26: #{tpu_custom_call.1} parent=11 // pred_check_branch
          %302 = sbr.rel (%p300) target = $region28
        $region27: #{tpu_custom_call.1} parent=11 // pred_region
          %304 = vsyncadd [#allocation7], 0
          %s305 = sshll.u32 %s4, 4
          %s306 = int_to_ptr.hbm [resolvable:$true] %s305
          %s307 = sshll.u32 [#allocation8], 4
          %s308 = int_to_ptr.vmem [resolvable:$true] %s307
          %313 = dma.hbm_to_vmem [thread:$0]  %s306, 9216, %s308, [#allocation7], 64, 64, 4
        $region28: #{tpu_custom_call.1} parent=11 // pred_fallthru
          _
        // Predicated region
        $region29: #{tpu_custom_call.1} parent=11 // pred_check
          %p314 = pneg %p155
        $region30: #{tpu_custom_call.1} parent=11 // pred_check_branch
          %316 = sbr.rel (%p314) target = $region32
        $region31: #{tpu_custom_call.1} parent=11 // pred_region
          _
        $region32: #{tpu_custom_call.1} parent=11 // pred_fallthru
          _
        // Predicated region
        $region33: #{tpu_custom_call.1} parent=11 // pred_check
          %p317 = pneg %p176
        $region34: #{tpu_custom_call.1} parent=11 // pred_check_branch
          %319 = sbr.rel (%p317) target = $region36
        $region35: #{tpu_custom_call.1} parent=11 // pred_region
          _
        $region36: #{tpu_custom_call.1} parent=11 // pred_fallthru
          _
        // Predicated region
        $region37: #{tpu_custom_call.1} parent=11 // pred_check
          %p320 = pneg %p197
        $region38: #{tpu_custom_call.1} parent=11 // pred_check_branch
          %322 = sbr.rel (%p320) target = $region40
        $region39: #{tpu_custom_call.1} parent=11 // pred_region
          %324 = vsyncadd [#allocation10], 0
          %s325 = sshll.u32 %s7, 4
          %s326 = int_to_ptr.hbm [resolvable:$true] %s325
          %s327 = sshll.u32 [#allocation9], 4
          %s328 = int_to_ptr.vmem [resolvable:$true] %s327
          %333 = dma.hbm_to_vmem [thread:$0]  %s326, 1024, %s328, [#allocation10], 64, 64, 4
        $region40: #{tpu_custom_call.1} parent=11 // pred_fallthru
          _
        // Predicated region
        $region41: #{tpu_custom_call.1} parent=11 // pred_check
          %p334 = pneg %p218
        $region42: #{tpu_custom_call.1} parent=11 // pred_check_branch
          %336 = sbr.rel (%p334) target = $region44
        $region43: #{tpu_custom_call.1} parent=11 // pred_region
          _
        $region44: #{tpu_custom_call.1} parent=11 // pred_fallthru
          _
        // Predicated region
        $region45: #{tpu_custom_call.1} parent=11 // pred_check
          %p337 = pneg %p239
        $region46: #{tpu_custom_call.1} parent=11 // pred_check_branch
          %339 = sbr.rel (%p337) target = $region48
        $region47: #{tpu_custom_call.1} parent=11 // pred_region
          _
        $region48: #{tpu_custom_call.1} parent=11 // pred_fallthru
          _
      $region12: #{tpu_custom_call.1} parent=5 // pred_fallthru
        _
      %p340 = scmp.lt.s32.totalorder %s24, 2
      // Predicated region
      $region49: #{tpu_custom_call.1} parent=5 // pred_check
        %p341 = pneg %p340
      $region50: #{tpu_custom_call.1} parent=5 // pred_check_branch
        %343 = sbr.rel (%p341) target = $region52
      $region51: #{tpu_custom_call.1} parent=5 // pred_region
        // Predicated region
        $region53: #{tpu_custom_call.1} parent=51 // pred_check
          %p344 = pneg %p44
        $region54: #{tpu_custom_call.1} parent=51 // pred_check_branch
          %346 = sbr.rel (%p344) target = $region56
        $region55: #{tpu_custom_call.1} parent=51 // pred_region
          %s347 = sand.u32 %s34, 1
          %s348 = scalar_lea.sflag [#allocation4], %s347
          %s349 = sand.u32 %s34, 1
          %s350 = smul.addr %s349, 256
          %s351 = scalar_lea.vmem [#allocation3], %s350
          %353 = vsyncadd %s348, 0
          %s354 = smul.addr %s24, 32
          %s355 = smul.addr %s354, 8
          %s356 = scalar_lea.hbm %s0, %s355
          %s357 = sshll.u32 %s356, 4
          %s358 = int_to_ptr.hbm [resolvable:$true] %s357
          %s359 = sshll.u32 %s351, 4
          %s360 = int_to_ptr.vmem [resolvable:$true] %s359
          %365 = dma.hbm_to_vmem [thread:$0]  %s358, 4096, %s360, %s348, 128, 128, 8
        $region56: #{tpu_custom_call.1} parent=51 // pred_fallthru
          _
      $region52: #{tpu_custom_call.1} parent=5 // pred_fallthru
        _
      %p366 = scmp.le.s32.totalorder 1, %s24
      %p367 = scmp.lt.s32.totalorder %s24, 3
      %p368 = pnand %p366, %p367
      %p369 = pneg %p368
      // Predicated region
      $region57: #{tpu_custom_call.1} parent=5 // pred_check
        _
      $region58: #{tpu_custom_call.1} parent=5 // pred_check_branch
        %371 = sbr.rel (%p368) target = $region60
      $region59: #{tpu_custom_call.1} parent=5 // pred_region
        %s372 = ssub.s32 %s24, 1
        %s373 = sand.u32 %s37, 1
        %s374 = scalar_lea.sflag [#allocation4], %s373
        %s375 = sand.u32 %s37, 1
        %s376 = smul.addr %s375, 256
        %s377 = scalar_lea.vmem [#allocation3], %s376
        // Predicated region
        $region61: #{tpu_custom_call.1} parent=59 // pred_check
          %p378 = pneg %p50
        $region62: #{tpu_custom_call.1} parent=59 // pred_check_branch
          %380 = sbr.rel (%p378) target = $region64
        $region63: #{tpu_custom_call.1} parent=59 // pred_region
          %382 = dma.done %s374, 4096
        $region64: #{tpu_custom_call.1} parent=59 // pred_fallthru
          _
        // Predicated region
        $region65: #{tpu_custom_call.1} parent=59 // pred_check
          %p383 = pneg %p71
        $region66: #{tpu_custom_call.1} parent=59 // pred_check_branch
          %385 = sbr.rel (%p383) target = $region68
        $region67: #{tpu_custom_call.1} parent=59 // pred_region
          %387 = dma.done [#allocation7], 1024
        $region68: #{tpu_custom_call.1} parent=59 // pred_fallthru
          _
        // Predicated region
        $region69: #{tpu_custom_call.1} parent=59 // pred_check
          %p388 = pneg %p134
        $region70: #{tpu_custom_call.1} parent=59 // pred_check_branch
          %390 = sbr.rel (%p388) target = $region72
        $region71: #{tpu_custom_call.1} parent=59 // pred_region
          %392 = dma.done [#allocation7], 9216
        $region72: #{tpu_custom_call.1} parent=59 // pred_fallthru
          _
        // Predicated region
        $region73: #{tpu_custom_call.1} parent=59 // pred_check
          %p393 = pneg %p197
        $region74: #{tpu_custom_call.1} parent=59 // pred_check_branch
          %395 = sbr.rel (%p393) target = $region76
        $region75: #{tpu_custom_call.1} parent=59 // pred_region
          %397 = dma.done [#allocation10], 1024
        $region76: #{tpu_custom_call.1} parent=59 // pred_fallthru
          _
        %s398 = sand.u32 %s37, 1
        %s399 = scalar_lea.sflag [#allocation4], %s398
        %s400 = sand.u32 %s37, 1
        %s401 = smul.addr %s400, 256
        %s402 = scalar_lea.vmem [#allocation3], %s401
        %p403 = pneg %p50
        %p404 = pneg %p47
        %p405 = pneg %p71
        %p406 = pneg %p68
        %p407 = pneg %p92
        %p408 = pneg %p89
        %p409 = pneg %p113
        %p410 = pneg %p110
        %p411 = pneg %p134
        %p412 = pneg %p131
        %p413 = pneg %p155
        %p414 = pneg %p152
        %p415 = pneg %p176
        %p416 = pneg %p173
        %p417 = pneg %p197
        %p418 = pneg %p194
        %p419 = pneg %p218
        %p420 = pneg %p215
        %p421 = pneg %p239
        %p422 = pneg %p236
        %p423 = pneg %p265
        %p424 = pneg %p262
        %s425 = sand.u32 %s252, 1
        %s426 = scalar_lea.sflag [#allocation5], %s425
        %s427 = sand.u32 %s252, 1
        %s428 = smul.addr %s427, 256
        %s429 = scalar_lea.vmem [#allocation11], %s428
        %v430 = vld [vmem:[%s377] sm:$0xff]
        %v431 = vld [vmem:[%s377 + $0x8] sm:$0xff]
        %v432 = vld [vmem:[%s377 + $0x10] sm:$0xff]
        %v433 = vld [vmem:[%s377 + $0x18] sm:$0xff]
        %v434 = vld [vmem:[%s377 + $0x20] sm:$0xff]
        %v435 = vld [vmem:[%s377 + $0x28] sm:$0xff]
        %v436 = vld [vmem:[%s377 + $0x30] sm:$0xff]
        %v437 = vld [vmem:[%s377 + $0x38] sm:$0xff]
        %v438 = vld [vmem:[%s377 + $0x40] sm:$0xff]
        %v439 = vld [vmem:[%s377 + $0x48] sm:$0xff]
        %v440 = vld [vmem:[%s377 + $0x50] sm:$0xff]
        %v441 = vld [vmem:[%s377 + $0x58] sm:$0xff]
        %v442 = vld [vmem:[%s377 + $0x60] sm:$0xff]
        %v443 = vld [vmem:[%s377 + $0x68] sm:$0xff]
        %v444 = vld [vmem:[%s377 + $0x70] sm:$0xff]
        %v445 = vld [vmem:[%s377 + $0x78] sm:$0xff]
        %v446 = vld [vmem:[%s377 + $0x80] sm:$0xff]
        %v447 = vld [vmem:[%s377 + $0x88] sm:$0xff]
        %v448 = vld [vmem:[%s377 + $0x90] sm:$0xff]
        %v449 = vld [vmem:[%s377 + $0x98] sm:$0xff]
        %v450 = vld [vmem:[%s377 + $0xa0] sm:$0xff]
        %v451 = vld [vmem:[%s377 + $0xa8] sm:$0xff]
        %v452 = vld [vmem:[%s377 + $0xb0] sm:$0xff]
        %v453 = vld [vmem:[%s377 + $0xb8] sm:$0xff]
        %v454 = vld [vmem:[%s377 + $0xc0] sm:$0xff]
        %v455 = vld [vmem:[%s377 + $0xc8] sm:$0xff]
        %v456 = vld [vmem:[%s377 + $0xd0] sm:$0xff]
        %v457 = vld [vmem:[%s377 + $0xd8] sm:$0xff]
        %v458 = vld [vmem:[%s377 + $0xe0] sm:$0xff]
        %v459 = vld [vmem:[%s377 + $0xe8] sm:$0xff]
        %v460 = vld [vmem:[%s377 + $0xf0] sm:$0xff]
        %v461 = vld [vmem:[%s377 + $0xf8] sm:$0xff]
        %v462 = vpack.c.bf16 %v431, %v430
        %v463 = vpack.c.bf16 %v433, %v432
        %v464 = vpack.c.bf16 %v435, %v434
        %v465 = vpack.c.bf16 %v437, %v436
        %v466 = vpack.c.bf16 %v439, %v438
        %v467 = vpack.c.bf16 %v441, %v440
        %v468 = vpack.c.bf16 %v443, %v442
        %v469 = vpack.c.bf16 %v445, %v444
        %v470 = vpack.c.bf16 %v447, %v446
        %v471 = vpack.c.bf16 %v449, %v448
        %v472 = vpack.c.bf16 %v451, %v450
        %v473 = vpack.c.bf16 %v453, %v452
        %v474 = vpack.c.bf16 %v455, %v454
        %v475 = vpack.c.bf16 %v457, %v456
        %v476 = vpack.c.bf16 %v459, %v458
        %v477 = vpack.c.bf16 %v461, %v460
        %v478 = vld [vmem:[#allocation6] sm:$0xf]
        %v479 = vld [vmem:[#allocation6 + $0x4] sm:$0xf]
        %v480 = vld [vmem:[#allocation6 + $0x8] sm:$0xf]
        %v481 = vld [vmem:[#allocation6 + $0xc] sm:$0xf]
        %v482 = vld [vmem:[#allocation6 + $0x10] sm:$0xf]
        %v483 = vld [vmem:[#allocation6 + $0x14] sm:$0xf]
        %v484 = vld [vmem:[#allocation6 + $0x18] sm:$0xf]
        %v485 = vld [vmem:[#allocation6 + $0x1c] sm:$0xf]
        %v486 = vld [vmem:[#allocation6 + $0x20] sm:$0xf]
        %v487 = vld [vmem:[#allocation6 + $0x24] sm:$0xf]
        %v488 = vld [vmem:[#allocation6 + $0x28] sm:$0xf]
        %v489 = vld [vmem:[#allocation6 + $0x2c] sm:$0xf]
        %v490 = vld [vmem:[#allocation6 + $0x30] sm:$0xf]
        %v491 = vld [vmem:[#allocation6 + $0x34] sm:$0xf]
        %v492 = vld [vmem:[#allocation6 + $0x38] sm:$0xf]
        %v493 = vld [vmem:[#allocation6 + $0x3c] sm:$0xf]
        %v510 = vunpack.c.l.b16 %v478
        %v511 = vunpack.c.l.b16 %v479
        %v512 = vunpack.c.l.b16 %v480
        %v513 = vunpack.c.l.b16 %v481
        %v514 = vunpack.c.l.b16 %v482
        %v515 = vunpack.c.l.b16 %v483
        %v516 = vunpack.c.l.b16 %v484
        %v517 = vunpack.c.l.b16 %v485
        %v518 = vunpack.c.l.b16 %v486
        %v519 = vunpack.c.l.b16 %v487
        %v520 = vunpack.c.l.b16 %v488
        %v521 = vunpack.c.l.b16 %v489
        %v522 = vunpack.c.l.b16 %v490
        %v523 = vunpack.c.l.b16 %v491
        %v524 = vunpack.c.l.b16 %v492
        %v525 = vunpack.c.l.b16 %v493
        %v526 = vpack.c.b16 %v511, %v510
        %v527 = vpack.c.b16 %v513, %v512
        %v528 = vpack.c.b16 %v515, %v514
        %v529 = vpack.c.b16 %v517, %v516
        %v530 = vpack.c.b16 %v519, %v518
        %v531 = vpack.c.b16 %v521, %v520
        %v532 = vpack.c.b16 %v523, %v522
        %v533 = vpack.c.b16 %v525, %v524
        %542 = vmatpush.bf16.msra.mxu0 %v533
        %543 = vmatpush.bf16.msra.mxu0 %v532
        %544 = vmatpush.bf16.msra.mxu0 %v531
        %545 = vmatpush.bf16.msra.mxu0 %v530
        %546 = vmatpush.bf16.msra.mxu0 %v529
        %547 = vmatpush.bf16.msra.mxu0 %v528
        %548 = vmatpush.bf16.msra.mxu0 %v527
        %549 = vmatpush.bf16.msra.mxu0 %v526
        %550 = vmatmul.bf16.gmra.mxu0 %v462
        %v551 = vpop.f32.mrf.mxu0
        %v552 = vadd.f32 0.0, %v551
        %v553 = vpop.f32.mrf.mxu0
        %v554 = vadd.f32 0.0, %v553
        %555 = vmatmul.bf16.gmra.mxu0 %v463
        %v556 = vpop.f32.mrf.mxu0
        %v557 = vadd.f32 0.0, %v556
        %v558 = vpop.f32.mrf.mxu0
        %v559 = vadd.f32 0.0, %v558
        %560 = vmatmul.bf16.gmra.mxu0 %v464
        %v561 = vpop.f32.mrf.mxu0
        %v562 = vadd.f32 0.0, %v561
        %v563 = vpop.f32.mrf.mxu0
        %v564 = vadd.f32 0.0, %v563
        %565 = vmatmul.bf16.gmra.mxu0 %v465
        %v566 = vpop.f32.mrf.mxu0
        %v567 = vadd.f32 0.0, %v566
        %v568 = vpop.f32.mrf.mxu0
        %v569 = vadd.f32 0.0, %v568
        %570 = vmatmul.bf16.gmra.mxu0 %v466
        %v571 = vpop.f32.mrf.mxu0
        %v572 = vadd.f32 0.0, %v571
        %v573 = vpop.f32.mrf.mxu0
        %v574 = vadd.f32 0.0, %v573
        %575 = vmatmul.bf16.gmra.mxu0 %v467
        %v576 = vpop.f32.mrf.mxu0
        %v577 = vadd.f32 0.0, %v576
        %v578 = vpop.f32.mrf.mxu0
        %v579 = vadd.f32 0.0, %v578
        %580 = vmatmul.bf16.gmra.mxu0 %v468
        %v581 = vpop.f32.mrf.mxu0
        %v582 = vadd.f32 0.0, %v581
        %v583 = vpop.f32.mrf.mxu0
        %v584 = vadd.f32 0.0, %v583
        %585 = vmatmul.bf16.gmra.mxu0 %v469
        %v586 = vpop.f32.mrf.mxu0
        %v587 = vadd.f32 0.0, %v586
        %v588 = vpop.f32.mrf.mxu0
        %v589 = vadd.f32 0.0, %v588
        %590 = vmatmul.bf16.gmra.mxu0 %v470
        %v591 = vpop.f32.mrf.mxu0
        %v592 = vadd.f32 0.0, %v591
        %v593 = vpop.f32.mrf.mxu0
        %v594 = vadd.f32 0.0, %v593
        %595 = vmatmul.bf16.gmra.mxu0 %v471
        %v596 = vpop.f32.mrf.mxu0
        %v597 = vadd.f32 0.0, %v596
        %v598 = vpop.f32.mrf.mxu0
        %v599 = vadd.f32 0.0, %v598
        %600 = vmatmul.bf16.gmra.mxu0 %v472
        %v601 = vpop.f32.mrf.mxu0
        %v602 = vadd.f32 0.0, %v601
        %v603 = vpop.f32.mrf.mxu0
        %v604 = vadd.f32 0.0, %v603
        %605 = vmatmul.bf16.gmra.mxu0 %v473
        %v606 = vpop.f32.mrf.mxu0
        %v607 = vadd.f32 0.0, %v606
        %v608 = vpop.f32.mrf.mxu0
        %v609 = vadd.f32 0.0, %v608
        %610 = vmatmul.bf16.gmra.mxu0 %v474
        %v611 = vpop.f32.mrf.mxu0
        %v612 = vadd.f32 0.0, %v611
        %v613 = vpop.f32.mrf.mxu0
        %v614 = vadd.f32 0.0, %v613
        %615 = vmatmul.bf16.gmra.mxu0 %v475
        %v616 = vpop.f32.mrf.mxu0
        %v617 = vadd.f32 0.0, %v616
        %v618 = vpop.f32.mrf.mxu0
        %v619 = vadd.f32 0.0, %v618
        %620 = vmatmul.bf16.gmra.mxu0 %v476
        %v621 = vpop.f32.mrf.mxu0
        %v622 = vadd.f32 0.0, %v621
        %v623 = vpop.f32.mrf.mxu0
        %v624 = vadd.f32 0.0, %v623
        %625 = vmatmul.bf16.gmra.mxu0 %v477
        %v626 = vpop.f32.mrf.mxu0
        %v627 = vadd.f32 0.0, %v626
        %v628 = vpop.f32.mrf.mxu0
        %v629 = vadd.f32 0.0, %v628
        %630 = vdwg.mxu0
        %v631 = vld [vmem:[%s2] sm:$0x1]
        %v633 = vperm.slane %v631, 0
        %v635 = vmul.f32 %v552, %v633
        %v636 = vmul.f32 %v554, %v633
        %v637 = vmul.f32 %v557, %v633
        %v638 = vmul.f32 %v559, %v633
        %v639 = vmul.f32 %v562, %v633
        %v640 = vmul.f32 %v564, %v633
        %v641 = vmul.f32 %v567, %v633
        %v642 = vmul.f32 %v569, %v633
        %v643 = vmul.f32 %v572, %v633
        %v644 = vmul.f32 %v574, %v633
        %v645 = vmul.f32 %v577, %v633
        %v646 = vmul.f32 %v579, %v633
        %v647 = vmul.f32 %v582, %v633
        %v648 = vmul.f32 %v584, %v633
        %v649 = vmul.f32 %v587, %v633
        %v650 = vmul.f32 %v589, %v633
        %v651 = vmul.f32 %v592, %v633
        %v652 = vmul.f32 %v594, %v633
        %v653 = vmul.f32 %v597, %v633
        %v654 = vmul.f32 %v599, %v633
        %v655 = vmul.f32 %v602, %v633
        %v656 = vmul.f32 %v604, %v633
        %v657 = vmul.f32 %v607, %v633
        %v658 = vmul.f32 %v609, %v633
        %v659 = vmul.f32 %v612, %v633
        %v660 = vmul.f32 %v614, %v633
        %v661 = vmul.f32 %v617, %v633
        %v662 = vmul.f32 %v619, %v633
        %v663 = vmul.f32 %v622, %v633
        %v664 = vmul.f32 %v624, %v633
        %v665 = vmul.f32 %v627, %v633
        %v666 = vmul.f32 %v629, %v633
        %v667 = vld [vmem:[%s3] sm:$0x1]
        %v669 = vperm.slane %v667, 0
        %v671 = vadd.f32 %v635, %v669
        %v672 = vadd.f32 %v636, %v669
        %v673 = vadd.f32 %v637, %v669
        %v674 = vadd.f32 %v638, %v669
        %v675 = vadd.f32 %v639, %v669
        %v676 = vadd.f32 %v640, %v669
        %v677 = vadd.f32 %v641, %v669
        %v678 = vadd.f32 %v642, %v669
        %v679 = vadd.f32 %v643, %v669
        %v680 = vadd.f32 %v644, %v669
        %v681 = vadd.f32 %v645, %v669
        %v682 = vadd.f32 %v646, %v669
        %v683 = vadd.f32 %v647, %v669
        %v684 = vadd.f32 %v648, %v669
        %v685 = vadd.f32 %v649, %v669
        %v686 = vadd.f32 %v650, %v669
        %v687 = vadd.f32 %v651, %v669
        %v688 = vadd.f32 %v652, %v669
        %v689 = vadd.f32 %v653, %v669
        %v690 = vadd.f32 %v654, %v669
        %v691 = vadd.f32 %v655, %v669
        %v692 = vadd.f32 %v656, %v669
        %v693 = vadd.f32 %v657, %v669
        %v694 = vadd.f32 %v658, %v669
        %v695 = vadd.f32 %v659, %v669
        %v696 = vadd.f32 %v660, %v669
        %v697 = vadd.f32 %v661, %v669
        %v698 = vadd.f32 %v662, %v669
        %v699 = vadd.f32 %v663, %v669
        %v700 = vadd.f32 %v664, %v669
        %v701 = vadd.f32 %v665, %v669
        %v702 = vadd.f32 %v666, %v669
        %v703 = vmax.f32 %v671, 0.0
        %v704 = vmax.f32 %v672, 0.0
        %v705 = vmax.f32 %v673, 0.0
        %v706 = vmax.f32 %v674, 0.0
        %v707 = vmax.f32 %v675, 0.0
        %v708 = vmax.f32 %v676, 0.0
        %v709 = vmax.f32 %v677, 0.0
        %v710 = vmax.f32 %v678, 0.0
        %v711 = vmax.f32 %v679, 0.0
        %v712 = vmax.f32 %v680, 0.0
        %v713 = vmax.f32 %v681, 0.0
        %v714 = vmax.f32 %v682, 0.0
        %v715 = vmax.f32 %v683, 0.0
        %v716 = vmax.f32 %v684, 0.0
        %v717 = vmax.f32 %v685, 0.0
        %v718 = vmax.f32 %v686, 0.0
        %v719 = vmax.f32 %v687, 0.0
        %v720 = vmax.f32 %v688, 0.0
        %v721 = vmax.f32 %v689, 0.0
        %v722 = vmax.f32 %v690, 0.0
        %v723 = vmax.f32 %v691, 0.0
        %v724 = vmax.f32 %v692, 0.0
        %v725 = vmax.f32 %v693, 0.0
        %v726 = vmax.f32 %v694, 0.0
        %v727 = vmax.f32 %v695, 0.0
        %v728 = vmax.f32 %v696, 0.0
        %v729 = vmax.f32 %v697, 0.0
        %v730 = vmax.f32 %v698, 0.0
        %v731 = vmax.f32 %v699, 0.0
        %v732 = vmax.f32 %v700, 0.0
        %v733 = vmax.f32 %v701, 0.0
        %v734 = vmax.f32 %v702, 0.0
        %735 = vst [vmem:[#allocation2] sm:$0xff] 0.0
        %736 = vst [vmem:[#allocation2 + $0x8] sm:$0xff] 0.0
        %737 = vst [vmem:[#allocation2 + $0x10] sm:$0x3] 0.0
        %738 = vst [vmem:[#allocation2 + $0x18] sm:$0xff] 0.0
        %739 = vst [vmem:[#allocation2 + $0x20] sm:$0xff] 0.0
        %740 = vst [vmem:[#allocation2 + $0x28] sm:$0x3] 0.0
        %741 = vst [vmem:[#allocation2 + $0x30] sm:$0xff] 0.0
        %742 = vst [vmem:[#allocation2 + $0x38] sm:$0xff] 0.0
        %743 = vst [vmem:[#allocation2 + $0x40] sm:$0x3] 0.0
        %744 = vst [vmem:[#allocation2 + $0x48] sm:$0xff] 0.0
        %745 = vst [vmem:[#allocation2 + $0x50] sm:$0xff] 0.0
        %746 = vst [vmem:[#allocation2 + $0x58] sm:$0x3] 0.0
        %747 = vst [vmem:[#allocation2 + $0x60] sm:$0xff] 0.0
        %748 = vst [vmem:[#allocation2 + $0x68] sm:$0xff] 0.0
        %749 = vst [vmem:[#allocation2 + $0x70] sm:$0x3] 0.0
        %750 = vst [vmem:[#allocation2 + $0x78] sm:$0xff] 0.0
        %751 = vst [vmem:[#allocation2 + $0x80] sm:$0xff] 0.0
        %752 = vst [vmem:[#allocation2 + $0x88] sm:$0x3] 0.0
        %753 = vst [vmem:[#allocation2 + $0x90] sm:$0xff] 0.0
        %754 = vst [vmem:[#allocation2 + $0x98] sm:$0xff] 0.0
        %755 = vst [vmem:[#allocation2 + $0xa0] sm:$0x3] 0.0
        %756 = vst [vmem:[#allocation2 + $0xa8] sm:$0xff] 0.0
        %757 = vst [vmem:[#allocation2 + $0xb0] sm:$0xff] 0.0
        %758 = vst [vmem:[#allocation2 + $0xb8] sm:$0x3] 0.0
        %759 = vst [vmem:[#allocation2 + $0xc0] sm:$0xff] 0.0
        %760 = vst [vmem:[#allocation2 + $0xc8] sm:$0xff] 0.0
        %761 = vst [vmem:[#allocation2 + $0xd0] sm:$0x3] 0.0
        %762 = vst [vmem:[#allocation2 + $0xd8] sm:$0xff] 0.0
        %763 = vst [vmem:[#allocation2 + $0xe0] sm:$0xff] 0.0
        %764 = vst [vmem:[#allocation2 + $0xe8] sm:$0x3] 0.0
        %765 = vst [vmem:[#allocation2 + $0xf0] sm:$0xff] 0.0
        %766 = vst [vmem:[#allocation2 + $0xf8] sm:$0xff] 0.0
        %767 = vst [vmem:[#allocation2 + $0x100] sm:$0x3] 0.0
        %768 = vst [vmem:[#allocation2 + $0x108] sm:$0xff] 0.0
        %769 = vst [vmem:[#allocation2 + $0x110] sm:$0xff] 0.0
        %770 = vst [vmem:[#allocation2 + $0x118] sm:$0x3] 0.0
        %771 = vst [vmem:[#allocation2 + $0x120] sm:$0xff] 0.0
        %772 = vst [vmem:[#allocation2 + $0x128] sm:$0xff] 0.0
        %773 = vst [vmem:[#allocation2 + $0x130] sm:$0x3] 0.0
        %774 = vst [vmem:[#allocation2 + $0x138] sm:$0xff] 0.0
        %775 = vst [vmem:[#allocation2 + $0x140] sm:$0xff] 0.0
        %776 = vst [vmem:[#allocation2 + $0x148] sm:$0x3] 0.0
        %777 = vst [vmem:[#allocation2 + $0x150] sm:$0xff] 0.0
        %778 = vst [vmem:[#allocation2 + $0x158] sm:$0xff] 0.0
        %779 = vst [vmem:[#allocation2 + $0x160] sm:$0x3] 0.0
        %780 = vst [vmem:[#allocation2 + $0x168] sm:$0xff] 0.0
        %781 = vst [vmem:[#allocation2 + $0x170] sm:$0xff] 0.0
        %782 = vst [vmem:[#allocation2 + $0x178] sm:$0x3] 0.0
        %783 = vst [vmem:[#allocation2 + $0x180] sm:$0xff] 0.0
        %784 = vst [vmem:[#allocation2 + $0x188] sm:$0xff] 0.0
        %785 = vst [vmem:[#allocation2 + $0x190] sm:$0x3] 0.0
        %786 = vst [vmem:[#allocation2 + $0x198] sm:$0xff] 0.0
        %787 = vst [vmem:[#allocation2 + $0x1a0] sm:$0xff] 0.0
        %788 = vst [vmem:[#allocation2 + $0x1a8] sm:$0x3] 0.0
        %s789 = scalar_lea.vmem [#allocation2], 24
        %790 = vst [vmem:[%s789 + $0x1] sm:$0xff] %v703
        %791 = vst [vmem:[%s789 + $0x9] sm:$0xff] %v704
        %792 = vst [vmem:[%s789 + $0x19] sm:$0xff] %v705
        %793 = vst [vmem:[%s789 + $0x21] sm:$0xff] %v706
        %794 = vst [vmem:[%s789 + $0x31] sm:$0xff] %v707
        %795 = vst [vmem:[%s789 + $0x39] sm:$0xff] %v708
        %796 = vst [vmem:[%s789 + $0x49] sm:$0xff] %v709
        %797 = vst [vmem:[%s789 + $0x51] sm:$0xff] %v710
        %798 = vst [vmem:[%s789 + $0x61] sm:$0xff] %v711
        %799 = vst [vmem:[%s789 + $0x69] sm:$0xff] %v712
        %800 = vst [vmem:[%s789 + $0x79] sm:$0xff] %v713
        %801 = vst [vmem:[%s789 + $0x81] sm:$0xff] %v714
        %802 = vst [vmem:[%s789 + $0x91] sm:$0xff] %v715
        %803 = vst [vmem:[%s789 + $0x99] sm:$0xff] %v716
        %804 = vst [vmem:[%s789 + $0xa9] sm:$0xff] %v717
        %805 = vst [vmem:[%s789 + $0xb1] sm:$0xff] %v718
        %806 = vst [vmem:[%s789 + $0xc1] sm:$0xff] %v719
        %807 = vst [vmem:[%s789 + $0xc9] sm:$0xff] %v720
        %808 = vst [vmem:[%s789 + $0xd9] sm:$0xff] %v721
        %809 = vst [vmem:[%s789 + $0xe1] sm:$0xff] %v722
        %810 = vst [vmem:[%s789 + $0xf1] sm:$0xff] %v723
        %811 = vst [vmem:[%s789 + $0xf9] sm:$0xff] %v724
        %812 = vst [vmem:[%s789 + $0x109] sm:$0xff] %v725
        %813 = vst [vmem:[%s789 + $0x111] sm:$0xff] %v726
        %814 = vst [vmem:[%s789 + $0x121] sm:$0xff] %v727
        %815 = vst [vmem:[%s789 + $0x129] sm:$0xff] %v728
        %816 = vst [vmem:[%s789 + $0x139] sm:$0xff] %v729
        %817 = vst [vmem:[%s789 + $0x141] sm:$0xff] %v730
        %818 = vst [vmem:[%s789 + $0x151] sm:$0xff] %v731
        %819 = vst [vmem:[%s789 + $0x159] sm:$0xff] %v732
        %820 = vst [vmem:[%s789 + $0x169] sm:$0xff] %v733
        %821 = vst [vmem:[%s789 + $0x171] sm:$0xff] %v734
        %v822 = vld [vmem:[#allocation2] sm:$0xff]
        %v823 = vld [vmem:[#allocation2 + $0x8] sm:$0xff]
        %v824 = vld [vmem:[#allocation2 + $0x18] sm:$0xff]
        %v825 = vld [vmem:[#allocation2 + $0x20] sm:$0xff]
        %v826 = vld [vmem:[#allocation2 + $0x30] sm:$0xff]
        %v827 = vld [vmem:[#allocation2 + $0x38] sm:$0xff]
        %v828 = vld [vmem:[#allocation2 + $0x48] sm:$0xff]
        %v829 = vld [vmem:[#allocation2 + $0x50] sm:$0xff]
        %v830 = vld [vmem:[#allocation2 + $0x60] sm:$0xff]
        %v831 = vld [vmem:[#allocation2 + $0x68] sm:$0xff]
        %v832 = vld [vmem:[#allocation2 + $0x78] sm:$0xff]
        %v833 = vld [vmem:[#allocation2 + $0x80] sm:$0xff]
        %v834 = vld [vmem:[#allocation2 + $0x90] sm:$0xff]
        %v835 = vld [vmem:[#allocation2 + $0x98] sm:$0xff]
        %v836 = vld [vmem:[#allocation2 + $0xa8] sm:$0xff]
        %v837 = vld [vmem:[#allocation2 + $0xb0] sm:$0xff]
        %v838 = vld [vmem:[#allocation2 + $0xc0] sm:$0xff]
        %v839 = vld [vmem:[#allocation2 + $0xc8] sm:$0xff]
        %v840 = vld [vmem:[#allocation2 + $0xd8] sm:$0xff]
        %v841 = vld [vmem:[#allocation2 + $0xe0] sm:$0xff]
        %v842 = vld [vmem:[#allocation2 + $0xf0] sm:$0xff]
        %v843 = vld [vmem:[#allocation2 + $0xf8] sm:$0xff]
        %v844 = vld [vmem:[#allocation2 + $0x108] sm:$0xff]
        %v845 = vld [vmem:[#allocation2 + $0x110] sm:$0xff]
        %v846 = vld [vmem:[#allocation2 + $0x120] sm:$0xff]
        %v847 = vld [vmem:[#allocation2 + $0x128] sm:$0xff]
        %v848 = vld [vmem:[#allocation2 + $0x138] sm:$0xff]
        %v849 = vld [vmem:[#allocation2 + $0x140] sm:$0xff]
        %v850 = vld [vmem:[#allocation2 + $0x150] sm:$0xff]
        %v851 = vld [vmem:[#allocation2 + $0x158] sm:$0xff]
        %v852 = vld [vmem:[#allocation2 + $0x168] sm:$0xff]
        %v853 = vld [vmem:[#allocation2 + $0x170] sm:$0xff]
        %v854 = vld [vmem:[#allocation2 + $0x1] sm:$0xff]
        %v855 = vld [vmem:[#allocation2 + $0x9] sm:$0xff]
        %v856 = vld [vmem:[#allocation2 + $0x19] sm:$0xff]
        %v857 = vld [vmem:[#allocation2 + $0x21] sm:$0xff]
        %v858 = vld [vmem:[#allocation2 + $0x31] sm:$0xff]
        %v859 = vld [vmem:[#allocation2 + $0x39] sm:$0xff]
        %v860 = vld [vmem:[#allocation2 + $0x49] sm:$0xff]
        %v861 = vld [vmem:[#allocation2 + $0x51] sm:$0xff]
        %v862 = vld [vmem:[#allocation2 + $0x61] sm:$0xff]
        %v863 = vld [vmem:[#allocation2 + $0x69] sm:$0xff]
        %v864 = vld [vmem:[#allocation2 + $0x79] sm:$0xff]
        %v865 = vld [vmem:[#allocation2 + $0x81] sm:$0xff]
        %v866 = vld [vmem:[#allocation2 + $0x91] sm:$0xff]
        %v867 = vld [vmem:[#allocation2 + $0x99] sm:$0xff]
        %v868 = vld [vmem:[#allocation2 + $0xa9] sm:$0xff]
        %v869 = vld [vmem:[#allocation2 + $0xb1] sm:$0xff]
        %v870 = vld [vmem:[#allocation2 + $0xc1] sm:$0xff]
        %v871 = vld [vmem:[#allocation2 + $0xc9] sm:$0xff]
        %v872 = vld [vmem:[#allocation2 + $0xd9] sm:$0xff]
        %v873 = vld [vmem:[#allocation2 + $0xe1] sm:$0xff]
        %v874 = vld [vmem:[#allocation2 + $0xf1] sm:$0xff]
        %v875 = vld [vmem:[#allocation2 + $0xf9] sm:$0xff]
        %v876 = vld [vmem:[#allocation2 + $0x109] sm:$0xff]
        %v877 = vld [vmem:[#allocation2 + $0x111] sm:$0xff]
        %v878 = vld [vmem:[#allocation2 + $0x121] sm:$0xff]
        %v879 = vld [vmem:[#allocation2 + $0x129] sm:$0xff]
        %v880 = vld [vmem:[#allocation2 + $0x139] sm:$0xff]
        %v881 = vld [vmem:[#allocation2 + $0x141] sm:$0xff]
        %v882 = vld [vmem:[#allocation2 + $0x151] sm:$0xff]
        %v883 = vld [vmem:[#allocation2 + $0x159] sm:$0xff]
        %v884 = vld [vmem:[#allocation2 + $0x169] sm:$0xff]
        %v885 = vld [vmem:[#allocation2 + $0x171] sm:$0xff]
        %v886 = vld [vmem:[#allocation2 + $0x2] sm:$0xff]
        %v887 = vld [vmem:[#allocation2 + $0xa] sm:$0xff]
        %v888 = vld [vmem:[#allocation2 + $0x1a] sm:$0xff]
        %v889 = vld [vmem:[#allocation2 + $0x22] sm:$0xff]
        %v890 = vld [vmem:[#allocation2 + $0x32] sm:$0xff]
        %v891 = vld [vmem:[#allocation2 + $0x3a] sm:$0xff]
        %v892 = vld [vmem:[#allocation2 + $0x4a] sm:$0xff]
        %v893 = vld [vmem:[#allocation2 + $0x52] sm:$0xff]
        %v894 = vld [vmem:[#allocation2 + $0x62] sm:$0xff]
        %v895 = vld [vmem:[#allocation2 + $0x6a] sm:$0xff]
        %v896 = vld [vmem:[#allocation2 + $0x7a] sm:$0xff]
        %v897 = vld [vmem:[#allocation2 + $0x82] sm:$0xff]
        %v898 = vld [vmem:[#allocation2 + $0x92] sm:$0xff]
        %v899 = vld [vmem:[#allocation2 + $0x9a] sm:$0xff]
        %v900 = vld [vmem:[#allocation2 + $0xaa] sm:$0xff]
        %v901 = vld [vmem:[#allocation2 + $0xb2] sm:$0xff]
        %v902 = vld [vmem:[#allocation2 + $0xc2] sm:$0xff]
        %v903 = vld [vmem:[#allocation2 + $0xca] sm:$0xff]
        %v904 = vld [vmem:[#allocation2 + $0xda] sm:$0xff]
        %v905 = vld [vmem:[#allocation2 + $0xe2] sm:$0xff]
        %v906 = vld [vmem:[#allocation2 + $0xf2] sm:$0xff]
        %v907 = vld [vmem:[#allocation2 + $0xfa] sm:$0xff]
        %v908 = vld [vmem:[#allocation2 + $0x10a] sm:$0xff]
        %v909 = vld [vmem:[#allocation2 + $0x112] sm:$0xff]
        %v910 = vld [vmem:[#allocation2 + $0x122] sm:$0xff]
        %v911 = vld [vmem:[#allocation2 + $0x12a] sm:$0xff]
        %v912 = vld [vmem:[#allocation2 + $0x13a] sm:$0xff]
        %v913 = vld [vmem:[#allocation2 + $0x142] sm:$0xff]
        %v914 = vld [vmem:[#allocation2 + $0x152] sm:$0xff]
        %v915 = vld [vmem:[#allocation2 + $0x15a] sm:$0xff]
        %v916 = vld [vmem:[#allocation2 + $0x16a] sm:$0xff]
        %v917 = vld [vmem:[#allocation2 + $0x172] sm:$0xff]
        %v918 = vld [vmem:[%s789] sm:$0xff]
        %v919 = vld [vmem:[%s789 + $0x8] sm:$0xff]
        %v920 = vld [vmem:[%s789 + $0x18] sm:$0xff]
        %v921 = vld [vmem:[%s789 + $0x20] sm:$0xff]
        %v922 = vld [vmem:[%s789 + $0x30] sm:$0xff]
        %v923 = vld [vmem:[%s789 + $0x38] sm:$0xff]
        %v924 = vld [vmem:[%s789 + $0x48] sm:$0xff]
        %v925 = vld [vmem:[%s789 + $0x50] sm:$0xff]
        %v926 = vld [vmem:[%s789 + $0x60] sm:$0xff]
        %v927 = vld [vmem:[%s789 + $0x68] sm:$0xff]
        %v928 = vld [vmem:[%s789 + $0x78] sm:$0xff]
        %v929 = vld [vmem:[%s789 + $0x80] sm:$0xff]
        %v930 = vld [vmem:[%s789 + $0x90] sm:$0xff]
        %v931 = vld [vmem:[%s789 + $0x98] sm:$0xff]
        %v932 = vld [vmem:[%s789 + $0xa8] sm:$0xff]
        %v933 = vld [vmem:[%s789 + $0xb0] sm:$0xff]
        %v934 = vld [vmem:[%s789 + $0xc0] sm:$0xff]
        %v935 = vld [vmem:[%s789 + $0xc8] sm:$0xff]
        %v936 = vld [vmem:[%s789 + $0xd8] sm:$0xff]
        %v937 = vld [vmem:[%s789 + $0xe0] sm:$0xff]
        %v938 = vld [vmem:[%s789 + $0xf0] sm:$0xff]
        %v939 = vld [vmem:[%s789 + $0xf8] sm:$0xff]
        %v940 = vld [vmem:[%s789 + $0x108] sm:$0xff]
        %v941 = vld [vmem:[%s789 + $0x110] sm:$0xff]
        %v942 = vld [vmem:[%s789 + $0x120] sm:$0xff]
        %v943 = vld [vmem:[%s789 + $0x128] sm:$0xff]
        %v944 = vld [vmem:[%s789 + $0x138] sm:$0xff]
        %v945 = vld [vmem:[%s789 + $0x140] sm:$0xff]
        %v946 = vld [vmem:[%s789 + $0x150] sm:$0xff]
        %v947 = vld [vmem:[%s789 + $0x158] sm:$0xff]
        %v948 = vld [vmem:[%s789 + $0x168] sm:$0xff]
        %v949 = vld [vmem:[%s789 + $0x170] sm:$0xff]
        %v950 = vld [vmem:[%s789 + $0x1] sm:$0xff]
        %v951 = vld [vmem:[%s789 + $0x9] sm:$0xff]
        %v952 = vld [vmem:[%s789 + $0x19] sm:$0xff]
        %v953 = vld [vmem:[%s789 + $0x21] sm:$0xff]
        %v954 = vld [vmem:[%s789 + $0x31] sm:$0xff]
        %v955 = vld [vmem:[%s789 + $0x39] sm:$0xff]
        %v956 = vld [vmem:[%s789 + $0x49] sm:$0xff]
        %v957 = vld [vmem:[%s789 + $0x51] sm:$0xff]
        %v958 = vld [vmem:[%s789 + $0x61] sm:$0xff]
        %v959 = vld [vmem:[%s789 + $0x69] sm:$0xff]
        %v960 = vld [vmem:[%s789 + $0x79] sm:$0xff]
        %v961 = vld [vmem:[%s789 + $0x81] sm:$0xff]
        %v962 = vld [vmem:[%s789 + $0x91] sm:$0xff]
        %v963 = vld [vmem:[%s789 + $0x99] sm:$0xff]
        %v964 = vld [vmem:[%s789 + $0xa9] sm:$0xff]
        %v965 = vld [vmem:[%s789 + $0xb1] sm:$0xff]
        %v966 = vld [vmem:[%s789 + $0xc1] sm:$0xff]
        %v967 = vld [vmem:[%s789 + $0xc9] sm:$0xff]
        %v968 = vld [vmem:[%s789 + $0xd9] sm:$0xff]
        %v969 = vld [vmem:[%s789 + $0xe1] sm:$0xff]
        %v970 = vld [vmem:[%s789 + $0xf1] sm:$0xff]
        %v971 = vld [vmem:[%s789 + $0xf9] sm:$0xff]
        %v972 = vld [vmem:[%s789 + $0x109] sm:$0xff]
        %v973 = vld [vmem:[%s789 + $0x111] sm:$0xff]
        %v974 = vld [vmem:[%s789 + $0x121] sm:$0xff]
        %v975 = vld [vmem:[%s789 + $0x129] sm:$0xff]
        %v976 = vld [vmem:[%s789 + $0x139] sm:$0xff]
        %v977 = vld [vmem:[%s789 + $0x141] sm:$0xff]
        %v978 = vld [vmem:[%s789 + $0x151] sm:$0xff]
        %v979 = vld [vmem:[%s789 + $0x159] sm:$0xff]
        %v980 = vld [vmem:[%s789 + $0x169] sm:$0xff]
        %v981 = vld [vmem:[%s789 + $0x171] sm:$0xff]
        %v982 = vld [vmem:[%s789 + $0x2] sm:$0xff]
        %v983 = vld [vmem:[%s789 + $0xa] sm:$0xff]
        %v984 = vld [vmem:[%s789 + $0x1a] sm:$0xff]
        %v985 = vld [vmem:[%s789 + $0x22] sm:$0xff]
        %v986 = vld [vmem:[%s789 + $0x32] sm:$0xff]
        %v987 = vld [vmem:[%s789 + $0x3a] sm:$0xff]
        %v988 = vld [vmem:[%s789 + $0x4a] sm:$0xff]
        %v989 = vld [vmem:[%s789 + $0x52] sm:$0xff]
        %v990 = vld [vmem:[%s789 + $0x62] sm:$0xff]
        %v991 = vld [vmem:[%s789 + $0x6a] sm:$0xff]
        %v992 = vld [vmem:[%s789 + $0x7a] sm:$0xff]
        %v993 = vld [vmem:[%s789 + $0x82] sm:$0xff]
        %v994 = vld [vmem:[%s789 + $0x92] sm:$0xff]
        %v995 = vld [vmem:[%s789 + $0x9a] sm:$0xff]
        %v996 = vld [vmem:[%s789 + $0xaa] sm:$0xff]
        %v997 = vld [vmem:[%s789 + $0xb2] sm:$0xff]
        %v998 = vld [vmem:[%s789 + $0xc2] sm:$0xff]
        %v999 = vld [vmem:[%s789 + $0xca] sm:$0xff]
        %v1000 = vld [vmem:[%s789 + $0xda] sm:$0xff]
        %v1001 = vld [vmem:[%s789 + $0xe2] sm:$0xff]
        %v1002 = vld [vmem:[%s789 + $0xf2] sm:$0xff]
        %v1003 = vld [vmem:[%s789 + $0xfa] sm:$0xff]
        %v1004 = vld [vmem:[%s789 + $0x10a] sm:$0xff]
        %v1005 = vld [vmem:[%s789 + $0x112] sm:$0xff]
        %v1006 = vld [vmem:[%s789 + $0x122] sm:$0xff]
        %v1007 = vld [vmem:[%s789 + $0x12a] sm:$0xff]
        %v1008 = vld [vmem:[%s789 + $0x13a] sm:$0xff]
        %v1009 = vld [vmem:[%s789 + $0x142] sm:$0xff]
        %v1010 = vld [vmem:[%s789 + $0x152] sm:$0xff]
        %v1011 = vld [vmem:[%s789 + $0x15a] sm:$0xff]
        %v1012 = vld [vmem:[%s789 + $0x16a] sm:$0xff]
        %v1013 = vld [vmem:[%s789 + $0x172] sm:$0xff]
        %s1014 = scalar_lea.vmem [#allocation2], 48
        %v1015 = vld [vmem:[%s1014] sm:$0xff]
        %v1016 = vld [vmem:[%s1014 + $0x8] sm:$0xff]
        %v1017 = vld [vmem:[%s1014 + $0x18] sm:$0xff]
        %v1018 = vld [vmem:[%s1014 + $0x20] sm:$0xff]
        %v1019 = vld [vmem:[%s1014 + $0x30] sm:$0xff]
        %v1020 = vld [vmem:[%s1014 + $0x38] sm:$0xff]
        %v1021 = vld [vmem:[%s1014 + $0x48] sm:$0xff]
        %v1022 = vld [vmem:[%s1014 + $0x50] sm:$0xff]
        %v1023 = vld [vmem:[%s1014 + $0x60] sm:$0xff]
        %v1024 = vld [vmem:[%s1014 + $0x68] sm:$0xff]
        %v1025 = vld [vmem:[%s1014 + $0x78] sm:$0xff]
        %v1026 = vld [vmem:[%s1014 + $0x80] sm:$0xff]
        %v1027 = vld [vmem:[%s1014 + $0x90] sm:$0xff]
        %v1028 = vld [vmem:[%s1014 + $0x98] sm:$0xff]
        %v1029 = vld [vmem:[%s1014 + $0xa8] sm:$0xff]
        %v1030 = vld [vmem:[%s1014 + $0xb0] sm:$0xff]
        %v1031 = vld [vmem:[%s1014 + $0xc0] sm:$0xff]
        %v1032 = vld [vmem:[%s1014 + $0xc8] sm:$0xff]
        %v1033 = vld [vmem:[%s1014 + $0xd8] sm:$0xff]
        %v1034 = vld [vmem:[%s1014 + $0xe0] sm:$0xff]
        %v1035 = vld [vmem:[%s1014 + $0xf0] sm:$0xff]
        %v1036 = vld [vmem:[%s1014 + $0xf8] sm:$0xff]
        %v1037 = vld [vmem:[%s1014 + $0x108] sm:$0xff]
        %v1038 = vld [vmem:[%s1014 + $0x110] sm:$0xff]
        %v1039 = vld [vmem:[%s1014 + $0x120] sm:$0xff]
        %v1040 = vld [vmem:[%s1014 + $0x128] sm:$0xff]
        %v1041 = vld [vmem:[%s1014 + $0x138] sm:$0xff]
        %v1042 = vld [vmem:[%s1014 + $0x140] sm:$0xff]
        %v1043 = vld [vmem:[%s1014 + $0x150] sm:$0xff]
        %v1044 = vld [vmem:[%s1014 + $0x158] sm:$0xff]
        %v1045 = vld [vmem:[%s1014 + $0x168] sm:$0xff]
        %v1046 = vld [vmem:[%s1014 + $0x170] sm:$0xff]
        %v1047 = vld [vmem:[%s1014 + $0x1] sm:$0xff]
        %v1048 = vld [vmem:[%s1014 + $0x9] sm:$0xff]
        %v1049 = vld [vmem:[%s1014 + $0x19] sm:$0xff]
        %v1050 = vld [vmem:[%s1014 + $0x21] sm:$0xff]
        %v1051 = vld [vmem:[%s1014 + $0x31] sm:$0xff]
        %v1052 = vld [vmem:[%s1014 + $0x39] sm:$0xff]
        %v1053 = vld [vmem:[%s1014 + $0x49] sm:$0xff]
        %v1054 = vld [vmem:[%s1014 + $0x51] sm:$0xff]
        %v1055 = vld [vmem:[%s1014 + $0x61] sm:$0xff]
        %v1056 = vld [vmem:[%s1014 + $0x69] sm:$0xff]
        %v1057 = vld [vmem:[%s1014 + $0x79] sm:$0xff]
        %v1058 = vld [vmem:[%s1014 + $0x81] sm:$0xff]
        %v1059 = vld [vmem:[%s1014 + $0x91] sm:$0xff]
        %v1060 = vld [vmem:[%s1014 + $0x99] sm:$0xff]
        %v1061 = vld [vmem:[%s1014 + $0xa9] sm:$0xff]
        %v1062 = vld [vmem:[%s1014 + $0xb1] sm:$0xff]
        %v1063 = vld [vmem:[%s1014 + $0xc1] sm:$0xff]
        %v1064 = vld [vmem:[%s1014 + $0xc9] sm:$0xff]
        %v1065 = vld [vmem:[%s1014 + $0xd9] sm:$0xff]
        %v1066 = vld [vmem:[%s1014 + $0xe1] sm:$0xff]
        %v1067 = vld [vmem:[%s1014 + $0xf1] sm:$0xff]
        %v1068 = vld [vmem:[%s1014 + $0xf9] sm:$0xff]
        %v1069 = vld [vmem:[%s1014 + $0x109] sm:$0xff]
        %v1070 = vld [vmem:[%s1014 + $0x111] sm:$0xff]
        %v1071 = vld [vmem:[%s1014 + $0x121] sm:$0xff]
        %v1072 = vld [vmem:[%s1014 + $0x129] sm:$0xff]
        %v1073 = vld [vmem:[%s1014 + $0x139] sm:$0xff]
        %v1074 = vld [vmem:[%s1014 + $0x141] sm:$0xff]
        %v1075 = vld [vmem:[%s1014 + $0x151] sm:$0xff]
        %v1076 = vld [vmem:[%s1014 + $0x159] sm:$0xff]
        %v1077 = vld [vmem:[%s1014 + $0x169] sm:$0xff]
        %v1078 = vld [vmem:[%s1014 + $0x171] sm:$0xff]
        %v1079 = vld [vmem:[%s1014 + $0x2] sm:$0xff]
        %v1080 = vld [vmem:[%s1014 + $0xa] sm:$0xff]
        %v1081 = vld [vmem:[%s1014 + $0x1a] sm:$0xff]
        %v1082 = vld [vmem:[%s1014 + $0x22] sm:$0xff]
        %v1083 = vld [vmem:[%s1014 + $0x32] sm:$0xff]
        %v1084 = vld [vmem:[%s1014 + $0x3a] sm:$0xff]
        %v1085 = vld [vmem:[%s1014 + $0x4a] sm:$0xff]
        %v1086 = vld [vmem:[%s1014 + $0x52] sm:$0xff]
        %v1087 = vld [vmem:[%s1014 + $0x62] sm:$0xff]
        %v1088 = vld [vmem:[%s1014 + $0x6a] sm:$0xff]
        %v1089 = vld [vmem:[%s1014 + $0x7a] sm:$0xff]
        %v1090 = vld [vmem:[%s1014 + $0x82] sm:$0xff]
        %v1091 = vld [vmem:[%s1014 + $0x92] sm:$0xff]
        %v1092 = vld [vmem:[%s1014 + $0x9a] sm:$0xff]
        %v1093 = vld [vmem:[%s1014 + $0xaa] sm:$0xff]
        %v1094 = vld [vmem:[%s1014 + $0xb2] sm:$0xff]
        %v1095 = vld [vmem:[%s1014 + $0xc2] sm:$0xff]
        %v1096 = vld [vmem:[%s1014 + $0xca] sm:$0xff]
        %v1097 = vld [vmem:[%s1014 + $0xda] sm:$0xff]
        %v1098 = vld [vmem:[%s1014 + $0xe2] sm:$0xff]
        %v1099 = vld [vmem:[%s1014 + $0xf2] sm:$0xff]
        %v1100 = vld [vmem:[%s1014 + $0xfa] sm:$0xff]
        %v1101 = vld [vmem:[%s1014 + $0x10a] sm:$0xff]
        %v1102 = vld [vmem:[%s1014 + $0x112] sm:$0xff]
        %v1103 = vld [vmem:[%s1014 + $0x122] sm:$0xff]
        %v1104 = vld [vmem:[%s1014 + $0x12a] sm:$0xff]
        %v1105 = vld [vmem:[%s1014 + $0x13a] sm:$0xff]
        %v1106 = vld [vmem:[%s1014 + $0x142] sm:$0xff]
        %v1107 = vld [vmem:[%s1014 + $0x152] sm:$0xff]
        %v1108 = vld [vmem:[%s1014 + $0x15a] sm:$0xff]
        %v1109 = vld [vmem:[%s1014 + $0x16a] sm:$0xff]
        %v1110 = vld [vmem:[%s1014 + $0x172] sm:$0xff]
        %v1111 = vpack.c.bf16 %v823, %v822
        %v1112 = vpack.c.bf16 %v855, %v854
        %v1113 = vpack.c.bf16 %v887, %v886
        %v1114 = vpack.c.bf16 %v919, %v918
        %v1115 = vpack.c.bf16 %v951, %v950
        %v1116 = vpack.c.bf16 %v983, %v982
        %v1117 = vpack.c.bf16 %v1016, %v1015
        %v1118 = vpack.c.bf16 %v1048, %v1047
        %v1119 = vpack.c.bf16 %v1080, %v1079
        %v1120 = vpack.c.bf16 %v825, %v824
        %v1121 = vpack.c.bf16 %v857, %v856
        %v1122 = vpack.c.bf16 %v889, %v888
        %v1123 = vpack.c.bf16 %v921, %v920
        %v1124 = vpack.c.bf16 %v953, %v952
        %v1125 = vpack.c.bf16 %v985, %v984
        %v1126 = vpack.c.bf16 %v1018, %v1017
        %v1127 = vpack.c.bf16 %v1050, %v1049
        %v1128 = vpack.c.bf16 %v1082, %v1081
        %v1129 = vpack.c.bf16 %v827, %v826
        %v1130 = vpack.c.bf16 %v859, %v858
        %v1131 = vpack.c.bf16 %v891, %v890
        %v1132 = vpack.c.bf16 %v923, %v922
        %v1133 = vpack.c.bf16 %v955, %v954
        %v1134 = vpack.c.bf16 %v987, %v986
        %v1135 = vpack.c.bf16 %v1020, %v1019
        %v1136 = vpack.c.bf16 %v1052, %v1051
        %v1137 = vpack.c.bf16 %v1084, %v1083
        %v1138 = vpack.c.bf16 %v829, %v828
        %v1139 = vpack.c.bf16 %v861, %v860
        %v1140 = vpack.c.bf16 %v893, %v892
        %v1141 = vpack.c.bf16 %v925, %v924
        %v1142 = vpack.c.bf16 %v957, %v956
        %v1143 = vpack.c.bf16 %v989, %v988
        %v1144 = vpack.c.bf16 %v1022, %v1021
        %v1145 = vpack.c.bf16 %v1054, %v1053
        %v1146 = vpack.c.bf16 %v1086, %v1085
        %v1147 = vpack.c.bf16 %v831, %v830
        %v1148 = vpack.c.bf16 %v863, %v862
        %v1149 = vpack.c.bf16 %v895, %v894
        %v1150 = vpack.c.bf16 %v927, %v926
        %v1151 = vpack.c.bf16 %v959, %v958
        %v1152 = vpack.c.bf16 %v991, %v990
        %v1153 = vpack.c.bf16 %v1024, %v1023
        %v1154 = vpack.c.bf16 %v1056, %v1055
        %v1155 = vpack.c.bf16 %v1088, %v1087
        %v1156 = vpack.c.bf16 %v833, %v832
        %v1157 = vpack.c.bf16 %v865, %v864
        %v1158 = vpack.c.bf16 %v897, %v896
        %v1159 = vpack.c.bf16 %v929, %v928
        %v1160 = vpack.c.bf16 %v961, %v960
        %v1161 = vpack.c.bf16 %v993, %v992
        %v1162 = vpack.c.bf16 %v1026, %v1025
        %v1163 = vpack.c.bf16 %v1058, %v1057
        %v1164 = vpack.c.bf16 %v1090, %v1089
        %v1165 = vpack.c.bf16 %v835, %v834
        %v1166 = vpack.c.bf16 %v867, %v866
        %v1167 = vpack.c.bf16 %v899, %v898
        %v1168 = vpack.c.bf16 %v931, %v930
        %v1169 = vpack.c.bf16 %v963, %v962
        %v1170 = vpack.c.bf16 %v995, %v994
        %v1171 = vpack.c.bf16 %v1028, %v1027
        %v1172 = vpack.c.bf16 %v1060, %v1059
        %v1173 = vpack.c.bf16 %v1092, %v1091
        %v1174 = vpack.c.bf16 %v837, %v836
        %v1175 = vpack.c.bf16 %v869, %v868
        %v1176 = vpack.c.bf16 %v901, %v900
        %v1177 = vpack.c.bf16 %v933, %v932
        %v1178 = vpack.c.bf16 %v965, %v964
        %v1179 = vpack.c.bf16 %v997, %v996
        %v1180 = vpack.c.bf16 %v1030, %v1029
        %v1181 = vpack.c.bf16 %v1062, %v1061
        %v1182 = vpack.c.bf16 %v1094, %v1093
        %v1183 = vpack.c.bf16 %v839, %v838
        %v1184 = vpack.c.bf16 %v871, %v870
        %v1185 = vpack.c.bf16 %v903, %v902
        %v1186 = vpack.c.bf16 %v935, %v934
        %v1187 = vpack.c.bf16 %v967, %v966
        %v1188 = vpack.c.bf16 %v999, %v998
        %v1189 = vpack.c.bf16 %v1032, %v1031
        %v1190 = vpack.c.bf16 %v1064, %v1063
        %v1191 = vpack.c.bf16 %v1096, %v1095
        %v1192 = vpack.c.bf16 %v841, %v840
        %v1193 = vpack.c.bf16 %v873, %v872
        %v1194 = vpack.c.bf16 %v905, %v904
        %v1195 = vpack.c.bf16 %v937, %v936
        %v1196 = vpack.c.bf16 %v969, %v968
        %v1197 = vpack.c.bf16 %v1001, %v1000
        %v1198 = vpack.c.bf16 %v1034, %v1033
        %v1199 = vpack.c.bf16 %v1066, %v1065
        %v1200 = vpack.c.bf16 %v1098, %v1097
        %v1201 = vpack.c.bf16 %v843, %v842
        %v1202 = vpack.c.bf16 %v875, %v874
        %v1203 = vpack.c.bf16 %v907, %v906
        %v1204 = vpack.c.bf16 %v939, %v938
        %v1205 = vpack.c.bf16 %v971, %v970
        %v1206 = vpack.c.bf16 %v1003, %v1002
        %v1207 = vpack.c.bf16 %v1036, %v1035
        %v1208 = vpack.c.bf16 %v1068, %v1067
        %v1209 = vpack.c.bf16 %v1100, %v1099
        %v1210 = vpack.c.bf16 %v845, %v844
        %v1211 = vpack.c.bf16 %v877, %v876
        %v1212 = vpack.c.bf16 %v909, %v908
        %v1213 = vpack.c.bf16 %v941, %v940
        %v1214 = vpack.c.bf16 %v973, %v972
        %v1215 = vpack.c.bf16 %v1005, %v1004
        %v1216 = vpack.c.bf16 %v1038, %v1037
        %v1217 = vpack.c.bf16 %v1070, %v1069
        %v1218 = vpack.c.bf16 %v1102, %v1101
        %v1219 = vpack.c.bf16 %v847, %v846
        %v1220 = vpack.c.bf16 %v879, %v878
        %v1221 = vpack.c.bf16 %v911, %v910
        %v1222 = vpack.c.bf16 %v943, %v942
        %v1223 = vpack.c.bf16 %v975, %v974
        %v1224 = vpack.c.bf16 %v1007, %v1006
        %v1225 = vpack.c.bf16 %v1040, %v1039
        %v1226 = vpack.c.bf16 %v1072, %v1071
        %v1227 = vpack.c.bf16 %v1104, %v1103
        %v1228 = vpack.c.bf16 %v849, %v848
        %v1229 = vpack.c.bf16 %v881, %v880
        %v1230 = vpack.c.bf16 %v913, %v912
        %v1231 = vpack.c.bf16 %v945, %v944
        %v1232 = vpack.c.bf16 %v977, %v976
        %v1233 = vpack.c.bf16 %v1009, %v1008
        %v1234 = vpack.c.bf16 %v1042, %v1041
        %v1235 = vpack.c.bf16 %v1074, %v1073
        %v1236 = vpack.c.bf16 %v1106, %v1105
        %v1237 = vpack.c.bf16 %v851, %v850
        %v1238 = vpack.c.bf16 %v883, %v882
        %v1239 = vpack.c.bf16 %v915, %v914
        %v1240 = vpack.c.bf16 %v947, %v946
        %v1241 = vpack.c.bf16 %v979, %v978
        %v1242 = vpack.c.bf16 %v1011, %v1010
        %v1243 = vpack.c.bf16 %v1044, %v1043
        %v1244 = vpack.c.bf16 %v1076, %v1075
        %v1245 = vpack.c.bf16 %v1108, %v1107
        %v1246 = vpack.c.bf16 %v853, %v852
        %v1247 = vpack.c.bf16 %v885, %v884
        %v1248 = vpack.c.bf16 %v917, %v916
        %v1249 = vpack.c.bf16 %v949, %v948
        %v1250 = vpack.c.bf16 %v981, %v980
        %v1251 = vpack.c.bf16 %v1013, %v1012
        %v1252 = vpack.c.bf16 %v1046, %v1045
        %v1253 = vpack.c.bf16 %v1078, %v1077
        %v1254 = vpack.c.bf16 %v1110, %v1109
        %v1255 = vld [vmem:[#allocation8] sm:$0xf]
        %v1256 = vld [vmem:[#allocation8 + $0x4] sm:$0xf]
        %v1257 = vld [vmem:[#allocation8 + $0x8] sm:$0xf]
        %v1258 = vld [vmem:[#allocation8 + $0xc] sm:$0xf]
        %v1259 = vld [vmem:[#allocation8 + $0x10] sm:$0xf]
        %v1260 = vld [vmem:[#allocation8 + $0x14] sm:$0xf]
        %v1261 = vld [vmem:[#allocation8 + $0x18] sm:$0xf]
        %v1262 = vld [vmem:[#allocation8 + $0x1c] sm:$0xf]
        %v1263 = vld [vmem:[#allocation8 + $0x20] sm:$0xf]
        %v1264 = vld [vmem:[#allocation8 + $0x24] sm:$0xf]
        %v1265 = vld [vmem:[#allocation8 + $0x28] sm:$0xf]
        %v1266 = vld [vmem:[#allocation8 + $0x2c] sm:$0xf]
        %v1267 = vld [vmem:[#allocation8 + $0x30] sm:$0xf]
        %v1268 = vld [vmem:[#allocation8 + $0x34] sm:$0xf]
        %v1269 = vld [vmem:[#allocation8 + $0x38] sm:$0xf]
        %v1270 = vld [vmem:[#allocation8 + $0x3c] sm:$0xf]
        %v1271 = vld [vmem:[#allocation8 + $0x40] sm:$0xf]
        %v1272 = vld [vmem:[#allocation8 + $0x44] sm:$0xf]
        %v1273 = vld [vmem:[#allocation8 + $0x48] sm:$0xf]
        %v1274 = vld [vmem:[#allocation8 + $0x4c] sm:$0xf]
        %v1275 = vld [vmem:[#allocation8 + $0x50] sm:$0xf]
        %v1276 = vld [vmem:[#allocation8 + $0x54] sm:$0xf]
        %v1277 = vld [vmem:[#allocation8 + $0x58] sm:$0xf]
        %v1278 = vld [vmem:[#allocation8 + $0x5c] sm:$0xf]
        %v1279 = vld [vmem:[#allocation8 + $0x60] sm:$0xf]
        %v1280 = vld [vmem:[#allocation8 + $0x64] sm:$0xf]
        %v1281 = vld [vmem:[#allocation8 + $0x68] sm:$0xf]
        %v1282 = vld [vmem:[#allocation8 + $0x6c] sm:$0xf]
        %v1283 = vld [vmem:[#allocation8 + $0x70] sm:$0xf]
        %v1284 = vld [vmem:[#allocation8 + $0x74] sm:$0xf]
        %v1285 = vld [vmem:[#allocation8 + $0x78] sm:$0xf]
        %v1286 = vld [vmem:[#allocation8 + $0x7c] sm:$0xf]
        %v1287 = vld [vmem:[#allocation8 + $0x80] sm:$0xf]
        %v1288 = vld [vmem:[#allocation8 + $0x84] sm:$0xf]
        %v1289 = vld [vmem:[#allocation8 + $0x88] sm:$0xf]
        %v1290 = vld [vmem:[#allocation8 + $0x8c] sm:$0xf]
        %v1291 = vld [vmem:[#allocation8 + $0x90] sm:$0xf]
        %v1292 = vld [vmem:[#allocation8 + $0x94] sm:$0xf]
        %v1293 = vld [vmem:[#allocation8 + $0x98] sm:$0xf]
        %v1294 = vld [vmem:[#allocation8 + $0x9c] sm:$0xf]
        %v1295 = vld [vmem:[#allocation8 + $0xa0] sm:$0xf]
        %v1296 = vld [vmem:[#allocation8 + $0xa4] sm:$0xf]
        %v1297 = vld [vmem:[#allocation8 + $0xa8] sm:$0xf]
        %v1298 = vld [vmem:[#allocation8 + $0xac] sm:$0xf]
        %v1299 = vld [vmem:[#allocation8 + $0xb0] sm:$0xf]
        %v1300 = vld [vmem:[#allocation8 + $0xb4] sm:$0xf]
        %v1301 = vld [vmem:[#allocation8 + $0xb8] sm:$0xf]
        %v1302 = vld [vmem:[#allocation8 + $0xbc] sm:$0xf]
        %v1303 = vld [vmem:[#allocation8 + $0xc0] sm:$0xf]
        %v1304 = vld [vmem:[#allocation8 + $0xc4] sm:$0xf]
        %v1305 = vld [vmem:[#allocation8 + $0xc8] sm:$0xf]
        %v1306 = vld [vmem:[#allocation8 + $0xcc] sm:$0xf]
        %v1307 = vld [vmem:[#allocation8 + $0xd0] sm:$0xf]
        %v1308 = vld [vmem:[#allocation8 + $0xd4] sm:$0xf]
        %v1309 = vld [vmem:[#allocation8 + $0xd8] sm:$0xf]
        %v1310 = vld [vmem:[#allocation8 + $0xdc] sm:$0xf]
        %v1311 = vld [vmem:[#allocation8 + $0xe0] sm:$0xf]
        %v1312 = vld [vmem:[#allocation8 + $0xe4] sm:$0xf]
        %v1313 = vld [vmem:[#allocation8 + $0xe8] sm:$0xf]
        %v1314 = vld [vmem:[#allocation8 + $0xec] sm:$0xf]
        %v1315 = vld [vmem:[#allocation8 + $0xf0] sm:$0xf]
        %v1316 = vld [vmem:[#allocation8 + $0xf4] sm:$0xf]
        %v1317 = vld [vmem:[#allocation8 + $0xf8] sm:$0xf]
        %v1318 = vld [vmem:[#allocation8 + $0xfc] sm:$0xf]
        %v1319 = vld [vmem:[#allocation8 + $0x100] sm:$0xf]
        %v1320 = vld [vmem:[#allocation8 + $0x104] sm:$0xf]
        %v1321 = vld [vmem:[#allocation8 + $0x108] sm:$0xf]
        %v1322 = vld [vmem:[#allocation8 + $0x10c] sm:$0xf]
        %v1323 = vld [vmem:[#allocation8 + $0x110] sm:$0xf]
        %v1324 = vld [vmem:[#allocation8 + $0x114] sm:$0xf]
        %v1325 = vld [vmem:[#allocation8 + $0x118] sm:$0xf]
        %v1326 = vld [vmem:[#allocation8 + $0x11c] sm:$0xf]
        %v1327 = vld [vmem:[#allocation8 + $0x120] sm:$0xf]
        %v1328 = vld [vmem:[#allocation8 + $0x124] sm:$0xf]
        %v1329 = vld [vmem:[#allocation8 + $0x128] sm:$0xf]
        %v1330 = vld [vmem:[#allocation8 + $0x12c] sm:$0xf]
        %v1331 = vld [vmem:[#allocation8 + $0x130] sm:$0xf]
        %v1332 = vld [vmem:[#allocation8 + $0x134] sm:$0xf]
        %v1333 = vld [vmem:[#allocation8 + $0x138] sm:$0xf]
        %v1334 = vld [vmem:[#allocation8 + $0x13c] sm:$0xf]
        %v1335 = vld [vmem:[#allocation8 + $0x140] sm:$0xf]
        %v1336 = vld [vmem:[#allocation8 + $0x144] sm:$0xf]
        %v1337 = vld [vmem:[#allocation8 + $0x148] sm:$0xf]
        %v1338 = vld [vmem:[#allocation8 + $0x14c] sm:$0xf]
        %v1339 = vld [vmem:[#allocation8 + $0x150] sm:$0xf]
        %v1340 = vld [vmem:[#allocation8 + $0x154] sm:$0xf]
        %v1341 = vld [vmem:[#allocation8 + $0x158] sm:$0xf]
        %v1342 = vld [vmem:[#allocation8 + $0x15c] sm:$0xf]
        %v1343 = vld [vmem:[#allocation8 + $0x160] sm:$0xf]
        %v1344 = vld [vmem:[#allocation8 + $0x164] sm:$0xf]
        %v1345 = vld [vmem:[#allocation8 + $0x168] sm:$0xf]
        %v1346 = vld [vmem:[#allocation8 + $0x16c] sm:$0xf]
        %v1347 = vld [vmem:[#allocation8 + $0x170] sm:$0xf]
        %v1348 = vld [vmem:[#allocation8 + $0x174] sm:$0xf]
        %v1349 = vld [vmem:[#allocation8 + $0x178] sm:$0xf]
        %v1350 = vld [vmem:[#allocation8 + $0x17c] sm:$0xf]
        %v1351 = vld [vmem:[#allocation8 + $0x180] sm:$0xf]
        %v1352 = vld [vmem:[#allocation8 + $0x184] sm:$0xf]
        %v1353 = vld [vmem:[#allocation8 + $0x188] sm:$0xf]
        %v1354 = vld [vmem:[#allocation8 + $0x18c] sm:$0xf]
        %v1355 = vld [vmem:[#allocation8 + $0x190] sm:$0xf]
        %v1356 = vld [vmem:[#allocation8 + $0x194] sm:$0xf]
        %v1357 = vld [vmem:[#allocation8 + $0x198] sm:$0xf]
        %v1358 = vld [vmem:[#allocation8 + $0x19c] sm:$0xf]
        %v1359 = vld [vmem:[#allocation8 + $0x1a0] sm:$0xf]
        %v1360 = vld [vmem:[#allocation8 + $0x1a4] sm:$0xf]
        %v1361 = vld [vmem:[#allocation8 + $0x1a8] sm:$0xf]
        %v1362 = vld [vmem:[#allocation8 + $0x1ac] sm:$0xf]
        %v1363 = vld [vmem:[#allocation8 + $0x1b0] sm:$0xf]
        %v1364 = vld [vmem:[#allocation8 + $0x1b4] sm:$0xf]
        %v1365 = vld [vmem:[#allocation8 + $0x1b8] sm:$0xf]
        %v1366 = vld [vmem:[#allocation8 + $0x1bc] sm:$0xf]
        %v1367 = vld [vmem:[#allocation8 + $0x1c0] sm:$0xf]
        %v1368 = vld [vmem:[#allocation8 + $0x1c4] sm:$0xf]
        %v1369 = vld [vmem:[#allocation8 + $0x1c8] sm:$0xf]
        %v1370 = vld [vmem:[#allocation8 + $0x1cc] sm:$0xf]
        %v1371 = vld [vmem:[#allocation8 + $0x1d0] sm:$0xf]
        %v1372 = vld [vmem:[#allocation8 + $0x1d4] sm:$0xf]
        %v1373 = vld [vmem:[#allocation8 + $0x1d8] sm:$0xf]
        %v1374 = vld [vmem:[#allocation8 + $0x1dc] sm:$0xf]
        %v1375 = vld [vmem:[#allocation8 + $0x1e0] sm:$0xf]
        %v1376 = vld [vmem:[#allocation8 + $0x1e4] sm:$0xf]
        %v1377 = vld [vmem:[#allocation8 + $0x1e8] sm:$0xf]
        %v1378 = vld [vmem:[#allocation8 + $0x1ec] sm:$0xf]
        %v1379 = vld [vmem:[#allocation8 + $0x1f0] sm:$0xf]
        %v1380 = vld [vmem:[#allocation8 + $0x1f4] sm:$0xf]
        %v1381 = vld [vmem:[#allocation8 + $0x1f8] sm:$0xf]
        %v1382 = vld [vmem:[#allocation8 + $0x1fc] sm:$0xf]
        %v1383 = vld [vmem:[#allocation8 + $0x200] sm:$0xf]
        %v1384 = vld [vmem:[#allocation8 + $0x204] sm:$0xf]
        %v1385 = vld [vmem:[#allocation8 + $0x208] sm:$0xf]
        %v1386 = vld [vmem:[#allocation8 + $0x20c] sm:$0xf]
        %v1387 = vld [vmem:[#allocation8 + $0x210] sm:$0xf]
        %v1388 = vld [vmem:[#allocation8 + $0x214] sm:$0xf]
        %v1389 = vld [vmem:[#allocation8 + $0x218] sm:$0xf]
        %v1390 = vld [vmem:[#allocation8 + $0x21c] sm:$0xf]
        %v1391 = vld [vmem:[#allocation8 + $0x220] sm:$0xf]
        %v1392 = vld [vmem:[#allocation8 + $0x224] sm:$0xf]
        %v1393 = vld [vmem:[#allocation8 + $0x228] sm:$0xf]
        %v1394 = vld [vmem:[#allocation8 + $0x22c] sm:$0xf]
        %v1395 = vld [vmem:[#allocation8 + $0x230] sm:$0xf]
        %v1396 = vld [vmem:[#allocation8 + $0x234] sm:$0xf]
        %v1397 = vld [vmem:[#allocation8 + $0x238] sm:$0xf]
        %v1398 = vld [vmem:[#allocation8 + $0x23c] sm:$0xf]
        %v1543 = vunpack.c.l.b16 %v1255
        %v1544 = vunpack.c.l.b16 %v1256
        %v1545 = vunpack.c.l.b16 %v1257
        %v1546 = vunpack.c.l.b16 %v1258
        %v1547 = vunpack.c.l.b16 %v1259
        %v1548 = vunpack.c.l.b16 %v1260
        %v1549 = vunpack.c.l.b16 %v1261
        %v1550 = vunpack.c.l.b16 %v1262
        %v1551 = vunpack.c.l.b16 %v1263
        %v1552 = vunpack.c.l.b16 %v1264
        %v1553 = vunpack.c.l.b16 %v1265
        %v1554 = vunpack.c.l.b16 %v1266
        %v1555 = vunpack.c.l.b16 %v1267
        %v1556 = vunpack.c.l.b16 %v1268
        %v1557 = vunpack.c.l.b16 %v1269
        %v1558 = vunpack.c.l.b16 %v1270
        %v1559 = vunpack.c.l.b16 %v1271
        %v1560 = vunpack.c.l.b16 %v1272
        %v1561 = vunpack.c.l.b16 %v1273
        %v1562 = vunpack.c.l.b16 %v1274
        %v1563 = vunpack.c.l.b16 %v1275
        %v1564 = vunpack.c.l.b16 %v1276
        %v1565 = vunpack.c.l.b16 %v1277
        %v1566 = vunpack.c.l.b16 %v1278
        %v1567 = vunpack.c.l.b16 %v1279
        %v1568 = vunpack.c.l.b16 %v1280
        %v1569 = vunpack.c.l.b16 %v1281
        %v1570 = vunpack.c.l.b16 %v1282
        %v1571 = vunpack.c.l.b16 %v1283
        %v1572 = vunpack.c.l.b16 %v1284
        %v1573 = vunpack.c.l.b16 %v1285
        %v1574 = vunpack.c.l.b16 %v1286
        %v1575 = vunpack.c.l.b16 %v1287
        %v1576 = vunpack.c.l.b16 %v1288
        %v1577 = vunpack.c.l.b16 %v1289
        %v1578 = vunpack.c.l.b16 %v1290
        %v1579 = vunpack.c.l.b16 %v1291
        %v1580 = vunpack.c.l.b16 %v1292
        %v1581 = vunpack.c.l.b16 %v1293
        %v1582 = vunpack.c.l.b16 %v1294
        %v1583 = vunpack.c.l.b16 %v1295
        %v1584 = vunpack.c.l.b16 %v1296
        %v1585 = vunpack.c.l.b16 %v1297
        %v1586 = vunpack.c.l.b16 %v1298
        %v1587 = vunpack.c.l.b16 %v1299
        %v1588 = vunpack.c.l.b16 %v1300
        %v1589 = vunpack.c.l.b16 %v1301
        %v1590 = vunpack.c.l.b16 %v1302
        %v1591 = vunpack.c.l.b16 %v1303
        %v1592 = vunpack.c.l.b16 %v1304
        %v1593 = vunpack.c.l.b16 %v1305
        %v1594 = vunpack.c.l.b16 %v1306
        %v1595 = vunpack.c.l.b16 %v1307
        %v1596 = vunpack.c.l.b16 %v1308
        %v1597 = vunpack.c.l.b16 %v1309
        %v1598 = vunpack.c.l.b16 %v1310
        %v1599 = vunpack.c.l.b16 %v1311
        %v1600 = vunpack.c.l.b16 %v1312
        %v1601 = vunpack.c.l.b16 %v1313
        %v1602 = vunpack.c.l.b16 %v1314
        %v1603 = vunpack.c.l.b16 %v1315
        %v1604 = vunpack.c.l.b16 %v1316
        %v1605 = vunpack.c.l.b16 %v1317
        %v1606 = vunpack.c.l.b16 %v1318
        %v1607 = vunpack.c.l.b16 %v1319
        %v1608 = vunpack.c.l.b16 %v1320
        %v1609 = vunpack.c.l.b16 %v1321
        %v1610 = vunpack.c.l.b16 %v1322
        %v1611 = vunpack.c.l.b16 %v1323
        %v1612 = vunpack.c.l.b16 %v1324
        %v1613 = vunpack.c.l.b16 %v1325
        %v1614 = vunpack.c.l.b16 %v1326
        %v1615 = vunpack.c.l.b16 %v1327
        %v1616 = vunpack.c.l.b16 %v1328
        %v1617 = vunpack.c.l.b16 %v1329
        %v1618 = vunpack.c.l.b16 %v1330
        %v1619 = vunpack.c.l.b16 %v1331
        %v1620 = vunpack.c.l.b16 %v1332
        %v1621 = vunpack.c.l.b16 %v1333
        %v1622 = vunpack.c.l.b16 %v1334
        %v1623 = vunpack.c.l.b16 %v1335
        %v1624 = vunpack.c.l.b16 %v1336
        %v1625 = vunpack.c.l.b16 %v1337
        %v1626 = vunpack.c.l.b16 %v1338
        %v1627 = vunpack.c.l.b16 %v1339
        %v1628 = vunpack.c.l.b16 %v1340
        %v1629 = vunpack.c.l.b16 %v1341
        %v1630 = vunpack.c.l.b16 %v1342
        %v1631 = vunpack.c.l.b16 %v1343
        %v1632 = vunpack.c.l.b16 %v1344
        %v1633 = vunpack.c.l.b16 %v1345
        %v1634 = vunpack.c.l.b16 %v1346
        %v1635 = vunpack.c.l.b16 %v1347
        %v1636 = vunpack.c.l.b16 %v1348
        %v1637 = vunpack.c.l.b16 %v1349
        %v1638 = vunpack.c.l.b16 %v1350
        %v1639 = vunpack.c.l.b16 %v1351
        %v1640 = vunpack.c.l.b16 %v1352
        %v1641 = vunpack.c.l.b16 %v1353
        %v1642 = vunpack.c.l.b16 %v1354
        %v1643 = vunpack.c.l.b16 %v1355
        %v1644 = vunpack.c.l.b16 %v1356
        %v1645 = vunpack.c.l.b16 %v1357
        %v1646 = vunpack.c.l.b16 %v1358
        %v1647 = vunpack.c.l.b16 %v1359
        %v1648 = vunpack.c.l.b16 %v1360
        %v1649 = vunpack.c.l.b16 %v1361
        %v1650 = vunpack.c.l.b16 %v1362
        %v1651 = vunpack.c.l.b16 %v1363
        %v1652 = vunpack.c.l.b16 %v1364
        %v1653 = vunpack.c.l.b16 %v1365
        %v1654 = vunpack.c.l.b16 %v1366
        %v1655 = vunpack.c.l.b16 %v1367
        %v1656 = vunpack.c.l.b16 %v1368
        %v1657 = vunpack.c.l.b16 %v1369
        %v1658 = vunpack.c.l.b16 %v1370
        %v1659 = vunpack.c.l.b16 %v1371
        %v1660 = vunpack.c.l.b16 %v1372
        %v1661 = vunpack.c.l.b16 %v1373
        %v1662 = vunpack.c.l.b16 %v1374
        %v1663 = vunpack.c.l.b16 %v1375
        %v1664 = vunpack.c.l.b16 %v1376
        %v1665 = vunpack.c.l.b16 %v1377
        %v1666 = vunpack.c.l.b16 %v1378
        %v1667 = vunpack.c.l.b16 %v1379
        %v1668 = vunpack.c.l.b16 %v1380
        %v1669 = vunpack.c.l.b16 %v1381
        %v1670 = vunpack.c.l.b16 %v1382
        %v1671 = vunpack.c.l.b16 %v1383
        %v1672 = vunpack.c.l.b16 %v1384
        %v1673 = vunpack.c.l.b16 %v1385
        %v1674 = vunpack.c.l.b16 %v1386
        %v1675 = vunpack.c.l.b16 %v1387
        %v1676 = vunpack.c.l.b16 %v1388
        %v1677 = vunpack.c.l.b16 %v1389
        %v1678 = vunpack.c.l.b16 %v1390
        %v1679 = vunpack.c.l.b16 %v1391
        %v1680 = vunpack.c.l.b16 %v1392
        %v1681 = vunpack.c.l.b16 %v1393
        %v1682 = vunpack.c.l.b16 %v1394
        %v1683 = vunpack.c.l.b16 %v1395
        %v1684 = vunpack.c.l.b16 %v1396
        %v1685 = vunpack.c.l.b16 %v1397
        %v1686 = vunpack.c.l.b16 %v1398
        %v1687 = vpack.c.b16 %v1544, %v1543
        %v1688 = vpack.c.b16 %v1546, %v1545
        %v1689 = vpack.c.b16 %v1548, %v1547
        %v1690 = vpack.c.b16 %v1550, %v1549
        %v1691 = vpack.c.b16 %v1552, %v1551
        %v1692 = vpack.c.b16 %v1554, %v1553
        %v1693 = vpack.c.b16 %v1556, %v1555
        %v1694 = vpack.c.b16 %v1558, %v1557
        %v1695 = vpack.c.b16 %v1560, %v1559
        %v1696 = vpack.c.b16 %v1562, %v1561
        %v1697 = vpack.c.b16 %v1564, %v1563
        %v1698 = vpack.c.b16 %v1566, %v1565
        %v1699 = vpack.c.b16 %v1568, %v1567
        %v1700 = vpack.c.b16 %v1570, %v1569
        %v1701 = vpack.c.b16 %v1572, %v1571
        %v1702 = vpack.c.b16 %v1574, %v1573
        %v1703 = vpack.c.b16 %v1576, %v1575
        %v1704 = vpack.c.b16 %v1578, %v1577
        %v1705 = vpack.c.b16 %v1580, %v1579
        %v1706 = vpack.c.b16 %v1582, %v1581
        %v1707 = vpack.c.b16 %v1584, %v1583
        %v1708 = vpack.c.b16 %v1586, %v1585
        %v1709 = vpack.c.b16 %v1588, %v1587
        %v1710 = vpack.c.b16 %v1590, %v1589
        %v1711 = vpack.c.b16 %v1592, %v1591
        %v1712 = vpack.c.b16 %v1594, %v1593
        %v1713 = vpack.c.b16 %v1596, %v1595
        %v1714 = vpack.c.b16 %v1598, %v1597
        %v1715 = vpack.c.b16 %v1600, %v1599
        %v1716 = vpack.c.b16 %v1602, %v1601
        %v1717 = vpack.c.b16 %v1604, %v1603
        %v1718 = vpack.c.b16 %v1606, %v1605
        %v1719 = vpack.c.b16 %v1608, %v1607
        %v1720 = vpack.c.b16 %v1610, %v1609
        %v1721 = vpack.c.b16 %v1612, %v1611
        %v1722 = vpack.c.b16 %v1614, %v1613
        %v1723 = vpack.c.b16 %v1616, %v1615
        %v1724 = vpack.c.b16 %v1618, %v1617
        %v1725 = vpack.c.b16 %v1620, %v1619
        %v1726 = vpack.c.b16 %v1622, %v1621
        %v1727 = vpack.c.b16 %v1624, %v1623
        %v1728 = vpack.c.b16 %v1626, %v1625
        %v1729 = vpack.c.b16 %v1628, %v1627
        %v1730 = vpack.c.b16 %v1630, %v1629
        %v1731 = vpack.c.b16 %v1632, %v1631
        %v1732 = vpack.c.b16 %v1634, %v1633
        %v1733 = vpack.c.b16 %v1636, %v1635
        %v1734 = vpack.c.b16 %v1638, %v1637
        %v1735 = vpack.c.b16 %v1640, %v1639
        %v1736 = vpack.c.b16 %v1642, %v1641
        %v1737 = vpack.c.b16 %v1644, %v1643
        %v1738 = vpack.c.b16 %v1646, %v1645
        %v1739 = vpack.c.b16 %v1648, %v1647
        %v1740 = vpack.c.b16 %v1650, %v1649
        %v1741 = vpack.c.b16 %v1652, %v1651
        %v1742 = vpack.c.b16 %v1654, %v1653
        %v1743 = vpack.c.b16 %v1656, %v1655
        %v1744 = vpack.c.b16 %v1658, %v1657
        %v1745 = vpack.c.b16 %v1660, %v1659
        %v1746 = vpack.c.b16 %v1662, %v1661
        %v1747 = vpack.c.b16 %v1664, %v1663
        %v1748 = vpack.c.b16 %v1666, %v1665
        %v1749 = vpack.c.b16 %v1668, %v1667
        %v1750 = vpack.c.b16 %v1670, %v1669
        %v1751 = vpack.c.b16 %v1672, %v1671
        %v1752 = vpack.c.b16 %v1674, %v1673
        %v1753 = vpack.c.b16 %v1676, %v1675
        %v1754 = vpack.c.b16 %v1678, %v1677
        %v1755 = vpack.c.b16 %v1680, %v1679
        %v1756 = vpack.c.b16 %v1682, %v1681
        %v1757 = vpack.c.b16 %v1684, %v1683
        %v1758 = vpack.c.b16 %v1686, %v1685
        %1831 = vmatpush.bf16.msra.mxu0 %v1694
        %1832 = vmatpush.bf16.msra.mxu0 %v1693
        %1833 = vmatpush.bf16.msra.mxu0 %v1692
        %1834 = vmatpush.bf16.msra.mxu0 %v1691
        %1835 = vmatpush.bf16.msra.mxu0 %v1690
        %1836 = vmatpush.bf16.msra.mxu0 %v1689
        %1837 = vmatpush.bf16.msra.mxu0 %v1688
        %1838 = vmatpush.bf16.msra.mxu0 %v1687
        %1839 = vmatmul.bf16.gmra.mxu0 %v1111
        %v1840 = vpop.f32.mrf.mxu0
        %v1841 = vadd.f32 0.0, %v1840
        %v1842 = vpop.f32.mrf.mxu0
        %v1843 = vadd.f32 0.0, %v1842
        %1844 = vmatmul.bf16.gmra.mxu0 %v1120
        %v1845 = vpop.f32.mrf.mxu0
        %v1846 = vadd.f32 0.0, %v1845
        %v1847 = vpop.f32.mrf.mxu0
        %v1848 = vadd.f32 0.0, %v1847
        %1849 = vmatmul.bf16.gmra.mxu0 %v1129
        %v1850 = vpop.f32.mrf.mxu0
        %v1851 = vadd.f32 0.0, %v1850
        %v1852 = vpop.f32.mrf.mxu0
        %v1853 = vadd.f32 0.0, %v1852
        %1854 = vmatmul.bf16.gmra.mxu0 %v1138
        %v1855 = vpop.f32.mrf.mxu0
        %v1856 = vadd.f32 0.0, %v1855
        %v1857 = vpop.f32.mrf.mxu0
        %v1858 = vadd.f32 0.0, %v1857
        %1859 = vmatmul.bf16.gmra.mxu0 %v1147
        %v1860 = vpop.f32.mrf.mxu0
        %v1861 = vadd.f32 0.0, %v1860
        %v1862 = vpop.f32.mrf.mxu0
        %v1863 = vadd.f32 0.0, %v1862
        %1864 = vmatmul.bf16.gmra.mxu0 %v1156
        %v1865 = vpop.f32.mrf.mxu0
        %v1866 = vadd.f32 0.0, %v1865
        %v1867 = vpop.f32.mrf.mxu0
        %v1868 = vadd.f32 0.0, %v1867
        %1869 = vmatmul.bf16.gmra.mxu0 %v1165
        %v1870 = vpop.f32.mrf.mxu0
        %v1871 = vadd.f32 0.0, %v1870
        %v1872 = vpop.f32.mrf.mxu0
        %v1873 = vadd.f32 0.0, %v1872
        %1874 = vmatmul.bf16.gmra.mxu0 %v1174
        %v1875 = vpop.f32.mrf.mxu0
        %v1876 = vadd.f32 0.0, %v1875
        %v1877 = vpop.f32.mrf.mxu0
        %v1878 = vadd.f32 0.0, %v1877
        %1879 = vmatmul.bf16.gmra.mxu0 %v1183
        %v1880 = vpop.f32.mrf.mxu0
        %v1881 = vadd.f32 0.0, %v1880
        %v1882 = vpop.f32.mrf.mxu0
        %v1883 = vadd.f32 0.0, %v1882
        %1884 = vmatmul.bf16.gmra.mxu0 %v1192
        %v1885 = vpop.f32.mrf.mxu0
        %v1886 = vadd.f32 0.0, %v1885
        %v1887 = vpop.f32.mrf.mxu0
        %v1888 = vadd.f32 0.0, %v1887
        %1889 = vmatmul.bf16.gmra.mxu0 %v1201
        %v1890 = vpop.f32.mrf.mxu0
        %v1891 = vadd.f32 0.0, %v1890
        %v1892 = vpop.f32.mrf.mxu0
        %v1893 = vadd.f32 0.0, %v1892
        %1894 = vmatmul.bf16.gmra.mxu0 %v1210
        %v1895 = vpop.f32.mrf.mxu0
        %v1896 = vadd.f32 0.0, %v1895
        %v1897 = vpop.f32.mrf.mxu0
        %v1898 = vadd.f32 0.0, %v1897
        %1899 = vmatmul.bf16.gmra.mxu0 %v1219
        %v1900 = vpop.f32.mrf.mxu0
        %v1901 = vadd.f32 0.0, %v1900
        %v1902 = vpop.f32.mrf.mxu0
        %v1903 = vadd.f32 0.0, %v1902
        %1904 = vmatmul.bf16.gmra.mxu0 %v1228
        %v1905 = vpop.f32.mrf.mxu0
        %v1906 = vadd.f32 0.0, %v1905
        %v1907 = vpop.f32.mrf.mxu0
        %v1908 = vadd.f32 0.0, %v1907
        %1909 = vmatmul.bf16.gmra.mxu0 %v1237
        %v1910 = vpop.f32.mrf.mxu0
        %v1911 = vadd.f32 0.0, %v1910
        %v1912 = vpop.f32.mrf.mxu0
        %v1913 = vadd.f32 0.0, %v1912
        %1914 = vmatmul.bf16.gmra.mxu0 %v1246
        %v1915 = vpop.f32.mrf.mxu0
        %v1916 = vadd.f32 0.0, %v1915
        %v1917 = vpop.f32.mrf.mxu0
        %v1918 = vadd.f32 0.0, %v1917
        %1919 = vdwg.mxu0
        %1920 = vmatpush.bf16.msra.mxu0 %v1702
        %1921 = vmatpush.bf16.msra.mxu0 %v1701
        %1922 = vmatpush.bf16.msra.mxu0 %v1700
        %1923 = vmatpush.bf16.msra.mxu0 %v1699
        %1924 = vmatpush.bf16.msra.mxu0 %v1698
        %1925 = vmatpush.bf16.msra.mxu0 %v1697
        %1926 = vmatpush.bf16.msra.mxu0 %v1696
        %1927 = vmatpush.bf16.msra.mxu0 %v1695
        %1928 = vmatmul.bf16.gmra.mxu0 %v1112
        %v1929 = vpop.f32.mrf.mxu0
        %v1930 = vadd.f32 %v1841, %v1929
        %v1931 = vpop.f32.mrf.mxu0
        %v1932 = vadd.f32 %v1843, %v1931
        %1933 = vmatmul.bf16.gmra.mxu0 %v1121
        %v1934 = vpop.f32.mrf.mxu0
        %v1935 = vadd.f32 %v1846, %v1934
        %v1936 = vpop.f32.mrf.mxu0
        %v1937 = vadd.f32 %v1848, %v1936
        %1938 = vmatmul.bf16.gmra.mxu0 %v1130
        %v1939 = vpop.f32.mrf.mxu0
        %v1940 = vadd.f32 %v1851, %v1939
        %v1941 = vpop.f32.mrf.mxu0
        %v1942 = vadd.f32 %v1853, %v1941
        %1943 = vmatmul.bf16.gmra.mxu0 %v1139
        %v1944 = vpop.f32.mrf.mxu0
        %v1945 = vadd.f32 %v1856, %v1944
        %v1946 = vpop.f32.mrf.mxu0
        %v1947 = vadd.f32 %v1858, %v1946
        %1948 = vmatmul.bf16.gmra.mxu0 %v1148
        %v1949 = vpop.f32.mrf.mxu0
        %v1950 = vadd.f32 %v1861, %v1949
        %v1951 = vpop.f32.mrf.mxu0
        %v1952 = vadd.f32 %v1863, %v1951
        %1953 = vmatmul.bf16.gmra.mxu0 %v1157
        %v1954 = vpop.f32.mrf.mxu0
        %v1955 = vadd.f32 %v1866, %v1954
        %v1956 = vpop.f32.mrf.mxu0
        %v1957 = vadd.f32 %v1868, %v1956
        %1958 = vmatmul.bf16.gmra.mxu0 %v1166
        %v1959 = vpop.f32.mrf.mxu0
        %v1960 = vadd.f32 %v1871, %v1959
        %v1961 = vpop.f32.mrf.mxu0
        %v1962 = vadd.f32 %v1873, %v1961
        %1963 = vmatmul.bf16.gmra.mxu0 %v1175
        %v1964 = vpop.f32.mrf.mxu0
        %v1965 = vadd.f32 %v1876, %v1964
        %v1966 = vpop.f32.mrf.mxu0
        %v1967 = vadd.f32 %v1878, %v1966
        %1968 = vmatmul.bf16.gmra.mxu0 %v1184
        %v1969 = vpop.f32.mrf.mxu0
        %v1970 = vadd.f32 %v1881, %v1969
        %v1971 = vpop.f32.mrf.mxu0
        %v1972 = vadd.f32 %v1883, %v1971
        %1973 = vmatmul.bf16.gmra.mxu0 %v1193
        %v1974 = vpop.f32.mrf.mxu0
        %v1975 = vadd.f32 %v1886, %v1974
        %v1976 = vpop.f32.mrf.mxu0
        %v1977 = vadd.f32 %v1888, %v1976
        %1978 = vmatmul.bf16.gmra.mxu0 %v1202
        %v1979 = vpop.f32.mrf.mxu0
        %v1980 = vadd.f32 %v1891, %v1979
        %v1981 = vpop.f32.mrf.mxu0
        %v1982 = vadd.f32 %v1893, %v1981
        %1983 = vmatmul.bf16.gmra.mxu0 %v1211
        %v1984 = vpop.f32.mrf.mxu0
        %v1985 = vadd.f32 %v1896, %v1984
        %v1986 = vpop.f32.mrf.mxu0
        %v1987 = vadd.f32 %v1898, %v1986
        %1988 = vmatmul.bf16.gmra.mxu0 %v1220
        %v1989 = vpop.f32.mrf.mxu0
        %v1990 = vadd.f32 %v1901, %v1989
        %v1991 = vpop.f32.mrf.mxu0
        %v1992 = vadd.f32 %v1903, %v1991
        %1993 = vmatmul.bf16.gmra.mxu0 %v1229
        %v1994 = vpop.f32.mrf.mxu0
        %v1995 = vadd.f32 %v1906, %v1994
        %v1996 = vpop.f32.mrf.mxu0
        %v1997 = vadd.f32 %v1908, %v1996
        %1998 = vmatmul.bf16.gmra.mxu0 %v1238
        %v1999 = vpop.f32.mrf.mxu0
        %v2000 = vadd.f32 %v1911, %v1999
        %v2001 = vpop.f32.mrf.mxu0
        %v2002 = vadd.f32 %v1913, %v2001
        %2003 = vmatmul.bf16.gmra.mxu0 %v1247
        %v2004 = vpop.f32.mrf.mxu0
        %v2005 = vadd.f32 %v1916, %v2004
        %v2006 = vpop.f32.mrf.mxu0
        %v2007 = vadd.f32 %v1918, %v2006
        %2008 = vdwg.mxu0
        %2009 = vmatpush.bf16.msra.mxu0 %v1710
        %2010 = vmatpush.bf16.msra.mxu0 %v1709
        %2011 = vmatpush.bf16.msra.mxu0 %v1708
        %2012 = vmatpush.bf16.msra.mxu0 %v1707
        %2013 = vmatpush.bf16.msra.mxu0 %v1706
        %2014 = vmatpush.bf16.msra.mxu0 %v1705
        %2015 = vmatpush.bf16.msra.mxu0 %v1704
        %2016 = vmatpush.bf16.msra.mxu0 %v1703
        %2017 = vmatmul.bf16.gmra.mxu0 %v1113
        %v2018 = vpop.f32.mrf.mxu0
        %v2019 = vadd.f32 %v1930, %v2018
        %v2020 = vpop.f32.mrf.mxu0
        %v2021 = vadd.f32 %v1932, %v2020
        %2022 = vmatmul.bf16.gmra.mxu0 %v1122
        %v2023 = vpop.f32.mrf.mxu0
        %v2024 = vadd.f32 %v1935, %v2023
        %v2025 = vpop.f32.mrf.mxu0
        %v2026 = vadd.f32 %v1937, %v2025
        %2027 = vmatmul.bf16.gmra.mxu0 %v1131
        %v2028 = vpop.f32.mrf.mxu0
        %v2029 = vadd.f32 %v1940, %v2028
        %v2030 = vpop.f32.mrf.mxu0
        %v2031 = vadd.f32 %v1942, %v2030
        %2032 = vmatmul.bf16.gmra.mxu0 %v1140
        %v2033 = vpop.f32.mrf.mxu0
        %v2034 = vadd.f32 %v1945, %v2033
        %v2035 = vpop.f32.mrf.mxu0
        %v2036 = vadd.f32 %v1947, %v2035
        %2037 = vmatmul.bf16.gmra.mxu0 %v1149
        %v2038 = vpop.f32.mrf.mxu0
        %v2039 = vadd.f32 %v1950, %v2038
        %v2040 = vpop.f32.mrf.mxu0
        %v2041 = vadd.f32 %v1952, %v2040
        %2042 = vmatmul.bf16.gmra.mxu0 %v1158
        %v2043 = vpop.f32.mrf.mxu0
        %v2044 = vadd.f32 %v1955, %v2043
        %v2045 = vpop.f32.mrf.mxu0
        %v2046 = vadd.f32 %v1957, %v2045
        %2047 = vmatmul.bf16.gmra.mxu0 %v1167
        %v2048 = vpop.f32.mrf.mxu0
        %v2049 = vadd.f32 %v1960, %v2048
        %v2050 = vpop.f32.mrf.mxu0
        %v2051 = vadd.f32 %v1962, %v2050
        %2052 = vmatmul.bf16.gmra.mxu0 %v1176
        %v2053 = vpop.f32.mrf.mxu0
        %v2054 = vadd.f32 %v1965, %v2053
        %v2055 = vpop.f32.mrf.mxu0
        %v2056 = vadd.f32 %v1967, %v2055
        %2057 = vmatmul.bf16.gmra.mxu0 %v1185
        %v2058 = vpop.f32.mrf.mxu0
        %v2059 = vadd.f32 %v1970, %v2058
        %v2060 = vpop.f32.mrf.mxu0
        %v2061 = vadd.f32 %v1972, %v2060
        %2062 = vmatmul.bf16.gmra.mxu0 %v1194
        %v2063 = vpop.f32.mrf.mxu0
        %v2064 = vadd.f32 %v1975, %v2063
        %v2065 = vpop.f32.mrf.mxu0
        %v2066 = vadd.f32 %v1977, %v2065
        %2067 = vmatmul.bf16.gmra.mxu0 %v1203
        %v2068 = vpop.f32.mrf.mxu0
        %v2069 = vadd.f32 %v1980, %v2068
        %v2070 = vpop.f32.mrf.mxu0
        %v2071 = vadd.f32 %v1982, %v2070
        %2072 = vmatmul.bf16.gmra.mxu0 %v1212
        %v2073 = vpop.f32.mrf.mxu0
        %v2074 = vadd.f32 %v1985, %v2073
        %v2075 = vpop.f32.mrf.mxu0
        %v2076 = vadd.f32 %v1987, %v2075
        %2077 = vmatmul.bf16.gmra.mxu0 %v1221
        %v2078 = vpop.f32.mrf.mxu0
        %v2079 = vadd.f32 %v1990, %v2078
        %v2080 = vpop.f32.mrf.mxu0
        %v2081 = vadd.f32 %v1992, %v2080
        %2082 = vmatmul.bf16.gmra.mxu0 %v1230
        %v2083 = vpop.f32.mrf.mxu0
        %v2084 = vadd.f32 %v1995, %v2083
        %v2085 = vpop.f32.mrf.mxu0
        %v2086 = vadd.f32 %v1997, %v2085
        %2087 = vmatmul.bf16.gmra.mxu0 %v1239
        %v2088 = vpop.f32.mrf.mxu0
        %v2089 = vadd.f32 %v2000, %v2088
        %v2090 = vpop.f32.mrf.mxu0
        %v2091 = vadd.f32 %v2002, %v2090
        %2092 = vmatmul.bf16.gmra.mxu0 %v1248
        %v2093 = vpop.f32.mrf.mxu0
        %v2094 = vadd.f32 %v2005, %v2093
        %v2095 = vpop.f32.mrf.mxu0
        %v2096 = vadd.f32 %v2007, %v2095
        %2097 = vdwg.mxu0
        %2098 = vmatpush.bf16.msra.mxu0 %v1718
        %2099 = vmatpush.bf16.msra.mxu0 %v1717
        %2100 = vmatpush.bf16.msra.mxu0 %v1716
        %2101 = vmatpush.bf16.msra.mxu0 %v1715
        %2102 = vmatpush.bf16.msra.mxu0 %v1714
        %2103 = vmatpush.bf16.msra.mxu0 %v1713
        %2104 = vmatpush.bf16.msra.mxu0 %v1712
        %2105 = vmatpush.bf16.msra.mxu0 %v1711
        %2106 = vmatmul.bf16.gmra.mxu0 %v1114
        %v2107 = vpop.f32.mrf.mxu0
        %v2108 = vadd.f32 %v2019, %v2107
        %v2109 = vpop.f32.mrf.mxu0
        %v2110 = vadd.f32 %v2021, %v2109
        %2111 = vmatmul.bf16.gmra.mxu0 %v1123
        %v2112 = vpop.f32.mrf.mxu0
        %v2113 = vadd.f32 %v2024, %v2112
        %v2114 = vpop.f32.mrf.mxu0
        %v2115 = vadd.f32 %v2026, %v2114
        %2116 = vmatmul.bf16.gmra.mxu0 %v1132
        %v2117 = vpop.f32.mrf.mxu0
        %v2118 = vadd.f32 %v2029, %v2117
        %v2119 = vpop.f32.mrf.mxu0
        %v2120 = vadd.f32 %v2031, %v2119
        %2121 = vmatmul.bf16.gmra.mxu0 %v1141
        %v2122 = vpop.f32.mrf.mxu0
        %v2123 = vadd.f32 %v2034, %v2122
        %v2124 = vpop.f32.mrf.mxu0
        %v2125 = vadd.f32 %v2036, %v2124
        %2126 = vmatmul.bf16.gmra.mxu0 %v1150
        %v2127 = vpop.f32.mrf.mxu0
        %v2128 = vadd.f32 %v2039, %v2127
        %v2129 = vpop.f32.mrf.mxu0
        %v2130 = vadd.f32 %v2041, %v2129
        %2131 = vmatmul.bf16.gmra.mxu0 %v1159
        %v2132 = vpop.f32.mrf.mxu0
        %v2133 = vadd.f32 %v2044, %v2132
        %v2134 = vpop.f32.mrf.mxu0
        %v2135 = vadd.f32 %v2046, %v2134
        %2136 = vmatmul.bf16.gmra.mxu0 %v1168
        %v2137 = vpop.f32.mrf.mxu0
        %v2138 = vadd.f32 %v2049, %v2137
        %v2139 = vpop.f32.mrf.mxu0
        %v2140 = vadd.f32 %v2051, %v2139
        %2141 = vmatmul.bf16.gmra.mxu0 %v1177
        %v2142 = vpop.f32.mrf.mxu0
        %v2143 = vadd.f32 %v2054, %v2142
        %v2144 = vpop.f32.mrf.mxu0
        %v2145 = vadd.f32 %v2056, %v2144
        %2146 = vmatmul.bf16.gmra.mxu0 %v1186
        %v2147 = vpop.f32.mrf.mxu0
        %v2148 = vadd.f32 %v2059, %v2147
        %v2149 = vpop.f32.mrf.mxu0
        %v2150 = vadd.f32 %v2061, %v2149
        %2151 = vmatmul.bf16.gmra.mxu0 %v1195
        %v2152 = vpop.f32.mrf.mxu0
        %v2153 = vadd.f32 %v2064, %v2152
        %v2154 = vpop.f32.mrf.mxu0
        %v2155 = vadd.f32 %v2066, %v2154
        %2156 = vmatmul.bf16.gmra.mxu0 %v1204
        %v2157 = vpop.f32.mrf.mxu0
        %v2158 = vadd.f32 %v2069, %v2157
        %v2159 = vpop.f32.mrf.mxu0
        %v2160 = vadd.f32 %v2071, %v2159
        %2161 = vmatmul.bf16.gmra.mxu0 %v1213
        %v2162 = vpop.f32.mrf.mxu0
        %v2163 = vadd.f32 %v2074, %v2162
        %v2164 = vpop.f32.mrf.mxu0
        %v2165 = vadd.f32 %v2076, %v2164
        %2166 = vmatmul.bf16.gmra.mxu0 %v1222
        %v2167 = vpop.f32.mrf.mxu0
        %v2168 = vadd.f32 %v2079, %v2167
        %v2169 = vpop.f32.mrf.mxu0
        %v2170 = vadd.f32 %v2081, %v2169
        %2171 = vmatmul.bf16.gmra.mxu0 %v1231
        %v2172 = vpop.f32.mrf.mxu0
        %v2173 = vadd.f32 %v2084, %v2172
        %v2174 = vpop.f32.mrf.mxu0
        %v2175 = vadd.f32 %v2086, %v2174
        %2176 = vmatmul.bf16.gmra.mxu0 %v1240
        %v2177 = vpop.f32.mrf.mxu0
        %v2178 = vadd.f32 %v2089, %v2177
        %v2179 = vpop.f32.mrf.mxu0
        %v2180 = vadd.f32 %v2091, %v2179
        %2181 = vmatmul.bf16.gmra.mxu0 %v1249
        %v2182 = vpop.f32.mrf.mxu0
        %v2183 = vadd.f32 %v2094, %v2182
        %v2184 = vpop.f32.mrf.mxu0
        %v2185 = vadd.f32 %v2096, %v2184
        %2186 = vdwg.mxu0
        %2187 = vmatpush.bf16.msra.mxu0 %v1726
        %2188 = vmatpush.bf16.msra.mxu0 %v1725
        %2189 = vmatpush.bf16.msra.mxu0 %v1724
        %2190 = vmatpush.bf16.msra.mxu0 %v1723
        %2191 = vmatpush.bf16.msra.mxu0 %v1722
        %2192 = vmatpush.bf16.msra.mxu0 %v1721
        %2193 = vmatpush.bf16.msra.mxu0 %v1720
        %2194 = vmatpush.bf16.msra.mxu0 %v1719
        %2195 = vmatmul.bf16.gmra.mxu0 %v1115
        %v2196 = vpop.f32.mrf.mxu0
        %v2197 = vadd.f32 %v2108, %v2196
        %v2198 = vpop.f32.mrf.mxu0
        %v2199 = vadd.f32 %v2110, %v2198
        %2200 = vmatmul.bf16.gmra.mxu0 %v1124
        %v2201 = vpop.f32.mrf.mxu0
        %v2202 = vadd.f32 %v2113, %v2201
        %v2203 = vpop.f32.mrf.mxu0
        %v2204 = vadd.f32 %v2115, %v2203
        %2205 = vmatmul.bf16.gmra.mxu0 %v1133
        %v2206 = vpop.f32.mrf.mxu0
        %v2207 = vadd.f32 %v2118, %v2206
        %v2208 = vpop.f32.mrf.mxu0
        %v2209 = vadd.f32 %v2120, %v2208
        %2210 = vmatmul.bf16.gmra.mxu0 %v1142
        %v2211 = vpop.f32.mrf.mxu0
        %v2212 = vadd.f32 %v2123, %v2211
        %v2213 = vpop.f32.mrf.mxu0
        %v2214 = vadd.f32 %v2125, %v2213
        %2215 = vmatmul.bf16.gmra.mxu0 %v1151
        %v2216 = vpop.f32.mrf.mxu0
        %v2217 = vadd.f32 %v2128, %v2216
        %v2218 = vpop.f32.mrf.mxu0
        %v2219 = vadd.f32 %v2130, %v2218
        %2220 = vmatmul.bf16.gmra.mxu0 %v1160
        %v2221 = vpop.f32.mrf.mxu0
        %v2222 = vadd.f32 %v2133, %v2221
        %v2223 = vpop.f32.mrf.mxu0
        %v2224 = vadd.f32 %v2135, %v2223
        %2225 = vmatmul.bf16.gmra.mxu0 %v1169
        %v2226 = vpop.f32.mrf.mxu0
        %v2227 = vadd.f32 %v2138, %v2226
        %v2228 = vpop.f32.mrf.mxu0
        %v2229 = vadd.f32 %v2140, %v2228
        %2230 = vmatmul.bf16.gmra.mxu0 %v1178
        %v2231 = vpop.f32.mrf.mxu0
        %v2232 = vadd.f32 %v2143, %v2231
        %v2233 = vpop.f32.mrf.mxu0
        %v2234 = vadd.f32 %v2145, %v2233
        %2235 = vmatmul.bf16.gmra.mxu0 %v1187
        %v2236 = vpop.f32.mrf.mxu0
        %v2237 = vadd.f32 %v2148, %v2236
        %v2238 = vpop.f32.mrf.mxu0
        %v2239 = vadd.f32 %v2150, %v2238
        %2240 = vmatmul.bf16.gmra.mxu0 %v1196
        %v2241 = vpop.f32.mrf.mxu0
        %v2242 = vadd.f32 %v2153, %v2241
        %v2243 = vpop.f32.mrf.mxu0
        %v2244 = vadd.f32 %v2155, %v2243
        %2245 = vmatmul.bf16.gmra.mxu0 %v1205
        %v2246 = vpop.f32.mrf.mxu0
        %v2247 = vadd.f32 %v2158, %v2246
        %v2248 = vpop.f32.mrf.mxu0
        %v2249 = vadd.f32 %v2160, %v2248
        %2250 = vmatmul.bf16.gmra.mxu0 %v1214
        %v2251 = vpop.f32.mrf.mxu0
        %v2252 = vadd.f32 %v2163, %v2251
        %v2253 = vpop.f32.mrf.mxu0
        %v2254 = vadd.f32 %v2165, %v2253
        %2255 = vmatmul.bf16.gmra.mxu0 %v1223
        %v2256 = vpop.f32.mrf.mxu0
        %v2257 = vadd.f32 %v2168, %v2256
        %v2258 = vpop.f32.mrf.mxu0
        %v2259 = vadd.f32 %v2170, %v2258
        %2260 = vmatmul.bf16.gmra.mxu0 %v1232
        %v2261 = vpop.f32.mrf.mxu0
        %v2262 = vadd.f32 %v2173, %v2261
        %v2263 = vpop.f32.mrf.mxu0
        %v2264 = vadd.f32 %v2175, %v2263
        %2265 = vmatmul.bf16.gmra.mxu0 %v1241
        %v2266 = vpop.f32.mrf.mxu0
        %v2267 = vadd.f32 %v2178, %v2266
        %v2268 = vpop.f32.mrf.mxu0
        %v2269 = vadd.f32 %v2180, %v2268
        %2270 = vmatmul.bf16.gmra.mxu0 %v1250
        %v2271 = vpop.f32.mrf.mxu0
        %v2272 = vadd.f32 %v2183, %v2271
        %v2273 = vpop.f32.mrf.mxu0
        %v2274 = vadd.f32 %v2185, %v2273
        %2275 = vdwg.mxu0
        %2276 = vmatpush.bf16.msra.mxu0 %v1734
        %2277 = vmatpush.bf16.msra.mxu0 %v1733
        %2278 = vmatpush.bf16.msra.mxu0 %v1732
        %2279 = vmatpush.bf16.msra.mxu0 %v1731
        %2280 = vmatpush.bf16.msra.mxu0 %v1730
        %2281 = vmatpush.bf16.msra.mxu0 %v1729
        %2282 = vmatpush.bf16.msra.mxu0 %v1728
        %2283 = vmatpush.bf16.msra.mxu0 %v1727
        %2284 = vmatmul.bf16.gmra.mxu0 %v1116
        %v2285 = vpop.f32.mrf.mxu0
        %v2286 = vadd.f32 %v2197, %v2285
        %v2287 = vpop.f32.mrf.mxu0
        %v2288 = vadd.f32 %v2199, %v2287
        %2289 = vmatmul.bf16.gmra.mxu0 %v1125
        %v2290 = vpop.f32.mrf.mxu0
        %v2291 = vadd.f32 %v2202, %v2290
        %v2292 = vpop.f32.mrf.mxu0
        %v2293 = vadd.f32 %v2204, %v2292
        %2294 = vmatmul.bf16.gmra.mxu0 %v1134
        %v2295 = vpop.f32.mrf.mxu0
        %v2296 = vadd.f32 %v2207, %v2295
        %v2297 = vpop.f32.mrf.mxu0
        %v2298 = vadd.f32 %v2209, %v2297
        %2299 = vmatmul.bf16.gmra.mxu0 %v1143
        %v2300 = vpop.f32.mrf.mxu0
        %v2301 = vadd.f32 %v2212, %v2300
        %v2302 = vpop.f32.mrf.mxu0
        %v2303 = vadd.f32 %v2214, %v2302
        %2304 = vmatmul.bf16.gmra.mxu0 %v1152
        %v2305 = vpop.f32.mrf.mxu0
        %v2306 = vadd.f32 %v2217, %v2305
        %v2307 = vpop.f32.mrf.mxu0
        %v2308 = vadd.f32 %v2219, %v2307
        %2309 = vmatmul.bf16.gmra.mxu0 %v1161
        %v2310 = vpop.f32.mrf.mxu0
        %v2311 = vadd.f32 %v2222, %v2310
        %v2312 = vpop.f32.mrf.mxu0
        %v2313 = vadd.f32 %v2224, %v2312
        %2314 = vmatmul.bf16.gmra.mxu0 %v1170
        %v2315 = vpop.f32.mrf.mxu0
        %v2316 = vadd.f32 %v2227, %v2315
        %v2317 = vpop.f32.mrf.mxu0
        %v2318 = vadd.f32 %v2229, %v2317
        %2319 = vmatmul.bf16.gmra.mxu0 %v1179
        %v2320 = vpop.f32.mrf.mxu0
        %v2321 = vadd.f32 %v2232, %v2320
        %v2322 = vpop.f32.mrf.mxu0
        %v2323 = vadd.f32 %v2234, %v2322
        %2324 = vmatmul.bf16.gmra.mxu0 %v1188
        %v2325 = vpop.f32.mrf.mxu0
        %v2326 = vadd.f32 %v2237, %v2325
        %v2327 = vpop.f32.mrf.mxu0
        %v2328 = vadd.f32 %v2239, %v2327
        %2329 = vmatmul.bf16.gmra.mxu0 %v1197
        %v2330 = vpop.f32.mrf.mxu0
        %v2331 = vadd.f32 %v2242, %v2330
        %v2332 = vpop.f32.mrf.mxu0
        %v2333 = vadd.f32 %v2244, %v2332
        %2334 = vmatmul.bf16.gmra.mxu0 %v1206
        %v2335 = vpop.f32.mrf.mxu0
        %v2336 = vadd.f32 %v2247, %v2335
        %v2337 = vpop.f32.mrf.mxu0
        %v2338 = vadd.f32 %v2249, %v2337
        %2339 = vmatmul.bf16.gmra.mxu0 %v1215
        %v2340 = vpop.f32.mrf.mxu0
        %v2341 = vadd.f32 %v2252, %v2340
        %v2342 = vpop.f32.mrf.mxu0
        %v2343 = vadd.f32 %v2254, %v2342
        %2344 = vmatmul.bf16.gmra.mxu0 %v1224
        %v2345 = vpop.f32.mrf.mxu0
        %v2346 = vadd.f32 %v2257, %v2345
        %v2347 = vpop.f32.mrf.mxu0
        %v2348 = vadd.f32 %v2259, %v2347
        %2349 = vmatmul.bf16.gmra.mxu0 %v1233
        %v2350 = vpop.f32.mrf.mxu0
        %v2351 = vadd.f32 %v2262, %v2350
        %v2352 = vpop.f32.mrf.mxu0
        %v2353 = vadd.f32 %v2264, %v2352
        %2354 = vmatmul.bf16.gmra.mxu0 %v1242
        %v2355 = vpop.f32.mrf.mxu0
        %v2356 = vadd.f32 %v2267, %v2355
        %v2357 = vpop.f32.mrf.mxu0
        %v2358 = vadd.f32 %v2269, %v2357
        %2359 = vmatmul.bf16.gmra.mxu0 %v1251
        %v2360 = vpop.f32.mrf.mxu0
        %v2361 = vadd.f32 %v2272, %v2360
        %v2362 = vpop.f32.mrf.mxu0
        %v2363 = vadd.f32 %v2274, %v2362
        %2364 = vdwg.mxu0
        %2365 = vmatpush.bf16.msra.mxu0 %v1742
        %2366 = vmatpush.bf16.msra.mxu0 %v1741
        %2367 = vmatpush.bf16.msra.mxu0 %v1740
        %2368 = vmatpush.bf16.msra.mxu0 %v1739
        %2369 = vmatpush.bf16.msra.mxu0 %v1738
        %2370 = vmatpush.bf16.msra.mxu0 %v1737
        %2371 = vmatpush.bf16.msra.mxu0 %v1736
        %2372 = vmatpush.bf16.msra.mxu0 %v1735
        %2373 = vmatmul.bf16.gmra.mxu0 %v1117
        %v2374 = vpop.f32.mrf.mxu0
        %v2375 = vadd.f32 %v2286, %v2374
        %v2376 = vpop.f32.mrf.mxu0
        %v2377 = vadd.f32 %v2288, %v2376
        %2378 = vmatmul.bf16.gmra.mxu0 %v1126
        %v2379 = vpop.f32.mrf.mxu0
        %v2380 = vadd.f32 %v2291, %v2379
        %v2381 = vpop.f32.mrf.mxu0
        %v2382 = vadd.f32 %v2293, %v2381
        %2383 = vmatmul.bf16.gmra.mxu0 %v1135
        %v2384 = vpop.f32.mrf.mxu0
        %v2385 = vadd.f32 %v2296, %v2384
        %v2386 = vpop.f32.mrf.mxu0
        %v2387 = vadd.f32 %v2298, %v2386
        %2388 = vmatmul.bf16.gmra.mxu0 %v1144
        %v2389 = vpop.f32.mrf.mxu0
        %v2390 = vadd.f32 %v2301, %v2389
        %v2391 = vpop.f32.mrf.mxu0
        %v2392 = vadd.f32 %v2303, %v2391
        %2393 = vmatmul.bf16.gmra.mxu0 %v1153
        %v2394 = vpop.f32.mrf.mxu0
        %v2395 = vadd.f32 %v2306, %v2394
        %v2396 = vpop.f32.mrf.mxu0
        %v2397 = vadd.f32 %v2308, %v2396
        %2398 = vmatmul.bf16.gmra.mxu0 %v1162
        %v2399 = vpop.f32.mrf.mxu0
        %v2400 = vadd.f32 %v2311, %v2399
        %v2401 = vpop.f32.mrf.mxu0
        %v2402 = vadd.f32 %v2313, %v2401
        %2403 = vmatmul.bf16.gmra.mxu0 %v1171
        %v2404 = vpop.f32.mrf.mxu0
        %v2405 = vadd.f32 %v2316, %v2404
        %v2406 = vpop.f32.mrf.mxu0
        %v2407 = vadd.f32 %v2318, %v2406
        %2408 = vmatmul.bf16.gmra.mxu0 %v1180
        %v2409 = vpop.f32.mrf.mxu0
        %v2410 = vadd.f32 %v2321, %v2409
        %v2411 = vpop.f32.mrf.mxu0
        %v2412 = vadd.f32 %v2323, %v2411
        %2413 = vmatmul.bf16.gmra.mxu0 %v1189
        %v2414 = vpop.f32.mrf.mxu0
        %v2415 = vadd.f32 %v2326, %v2414
        %v2416 = vpop.f32.mrf.mxu0
        %v2417 = vadd.f32 %v2328, %v2416
        %2418 = vmatmul.bf16.gmra.mxu0 %v1198
        %v2419 = vpop.f32.mrf.mxu0
        %v2420 = vadd.f32 %v2331, %v2419
        %v2421 = vpop.f32.mrf.mxu0
        %v2422 = vadd.f32 %v2333, %v2421
        %2423 = vmatmul.bf16.gmra.mxu0 %v1207
        %v2424 = vpop.f32.mrf.mxu0
        %v2425 = vadd.f32 %v2336, %v2424
        %v2426 = vpop.f32.mrf.mxu0
        %v2427 = vadd.f32 %v2338, %v2426
        %2428 = vmatmul.bf16.gmra.mxu0 %v1216
        %v2429 = vpop.f32.mrf.mxu0
        %v2430 = vadd.f32 %v2341, %v2429
        %v2431 = vpop.f32.mrf.mxu0
        %v2432 = vadd.f32 %v2343, %v2431
        %2433 = vmatmul.bf16.gmra.mxu0 %v1225
        %v2434 = vpop.f32.mrf.mxu0
        %v2435 = vadd.f32 %v2346, %v2434
        %v2436 = vpop.f32.mrf.mxu0
        %v2437 = vadd.f32 %v2348, %v2436
        %2438 = vmatmul.bf16.gmra.mxu0 %v1234
        %v2439 = vpop.f32.mrf.mxu0
        %v2440 = vadd.f32 %v2351, %v2439
        %v2441 = vpop.f32.mrf.mxu0
        %v2442 = vadd.f32 %v2353, %v2441
        %2443 = vmatmul.bf16.gmra.mxu0 %v1243
        %v2444 = vpop.f32.mrf.mxu0
        %v2445 = vadd.f32 %v2356, %v2444
        %v2446 = vpop.f32.mrf.mxu0
        %v2447 = vadd.f32 %v2358, %v2446
        %2448 = vmatmul.bf16.gmra.mxu0 %v1252
        %v2449 = vpop.f32.mrf.mxu0
        %v2450 = vadd.f32 %v2361, %v2449
        %v2451 = vpop.f32.mrf.mxu0
        %v2452 = vadd.f32 %v2363, %v2451
        %2453 = vdwg.mxu0
        %2454 = vmatpush.bf16.msra.mxu0 %v1750
        %2455 = vmatpush.bf16.msra.mxu0 %v1749
        %2456 = vmatpush.bf16.msra.mxu0 %v1748
        %2457 = vmatpush.bf16.msra.mxu0 %v1747
        %2458 = vmatpush.bf16.msra.mxu0 %v1746
        %2459 = vmatpush.bf16.msra.mxu0 %v1745
        %2460 = vmatpush.bf16.msra.mxu0 %v1744
        %2461 = vmatpush.bf16.msra.mxu0 %v1743
        %2462 = vmatmul.bf16.gmra.mxu0 %v1118
        %v2463 = vpop.f32.mrf.mxu0
        %v2464 = vadd.f32 %v2375, %v2463
        %v2465 = vpop.f32.mrf.mxu0
        %v2466 = vadd.f32 %v2377, %v2465
        %2467 = vmatmul.bf16.gmra.mxu0 %v1127
        %v2468 = vpop.f32.mrf.mxu0
        %v2469 = vadd.f32 %v2380, %v2468
        %v2470 = vpop.f32.mrf.mxu0
        %v2471 = vadd.f32 %v2382, %v2470
        %2472 = vmatmul.bf16.gmra.mxu0 %v1136
        %v2473 = vpop.f32.mrf.mxu0
        %v2474 = vadd.f32 %v2385, %v2473
        %v2475 = vpop.f32.mrf.mxu0
        %v2476 = vadd.f32 %v2387, %v2475
        %2477 = vmatmul.bf16.gmra.mxu0 %v1145
        %v2478 = vpop.f32.mrf.mxu0
        %v2479 = vadd.f32 %v2390, %v2478
        %v2480 = vpop.f32.mrf.mxu0
        %v2481 = vadd.f32 %v2392, %v2480
        %2482 = vmatmul.bf16.gmra.mxu0 %v1154
        %v2483 = vpop.f32.mrf.mxu0
        %v2484 = vadd.f32 %v2395, %v2483
        %v2485 = vpop.f32.mrf.mxu0
        %v2486 = vadd.f32 %v2397, %v2485
        %2487 = vmatmul.bf16.gmra.mxu0 %v1163
        %v2488 = vpop.f32.mrf.mxu0
        %v2489 = vadd.f32 %v2400, %v2488
        %v2490 = vpop.f32.mrf.mxu0
        %v2491 = vadd.f32 %v2402, %v2490
        %2492 = vmatmul.bf16.gmra.mxu0 %v1172
        %v2493 = vpop.f32.mrf.mxu0
        %v2494 = vadd.f32 %v2405, %v2493
        %v2495 = vpop.f32.mrf.mxu0
        %v2496 = vadd.f32 %v2407, %v2495
        %2497 = vmatmul.bf16.gmra.mxu0 %v1181
        %v2498 = vpop.f32.mrf.mxu0
        %v2499 = vadd.f32 %v2410, %v2498
        %v2500 = vpop.f32.mrf.mxu0
        %v2501 = vadd.f32 %v2412, %v2500
        %2502 = vmatmul.bf16.gmra.mxu0 %v1190
        %v2503 = vpop.f32.mrf.mxu0
        %v2504 = vadd.f32 %v2415, %v2503
        %v2505 = vpop.f32.mrf.mxu0
        %v2506 = vadd.f32 %v2417, %v2505
        %2507 = vmatmul.bf16.gmra.mxu0 %v1199
        %v2508 = vpop.f32.mrf.mxu0
        %v2509 = vadd.f32 %v2420, %v2508
        %v2510 = vpop.f32.mrf.mxu0
        %v2511 = vadd.f32 %v2422, %v2510
        %2512 = vmatmul.bf16.gmra.mxu0 %v1208
        %v2513 = vpop.f32.mrf.mxu0
        %v2514 = vadd.f32 %v2425, %v2513
        %v2515 = vpop.f32.mrf.mxu0
        %v2516 = vadd.f32 %v2427, %v2515
        %2517 = vmatmul.bf16.gmra.mxu0 %v1217
        %v2518 = vpop.f32.mrf.mxu0
        %v2519 = vadd.f32 %v2430, %v2518
        %v2520 = vpop.f32.mrf.mxu0
        %v2521 = vadd.f32 %v2432, %v2520
        %2522 = vmatmul.bf16.gmra.mxu0 %v1226
        %v2523 = vpop.f32.mrf.mxu0
        %v2524 = vadd.f32 %v2435, %v2523
        %v2525 = vpop.f32.mrf.mxu0
        %v2526 = vadd.f32 %v2437, %v2525
        %2527 = vmatmul.bf16.gmra.mxu0 %v1235
        %v2528 = vpop.f32.mrf.mxu0
        %v2529 = vadd.f32 %v2440, %v2528
        %v2530 = vpop.f32.mrf.mxu0
        %v2531 = vadd.f32 %v2442, %v2530
        %2532 = vmatmul.bf16.gmra.mxu0 %v1244
        %v2533 = vpop.f32.mrf.mxu0
        %v2534 = vadd.f32 %v2445, %v2533
        %v2535 = vpop.f32.mrf.mxu0
        %v2536 = vadd.f32 %v2447, %v2535
        %2537 = vmatmul.bf16.gmra.mxu0 %v1253
        %v2538 = vpop.f32.mrf.mxu0
        %v2539 = vadd.f32 %v2450, %v2538
        %v2540 = vpop.f32.mrf.mxu0
        %v2541 = vadd.f32 %v2452, %v2540
        %2542 = vdwg.mxu0
        %2543 = vmatpush.bf16.msra.mxu0 %v1758
        %2544 = vmatpush.bf16.msra.mxu0 %v1757
        %2545 = vmatpush.bf16.msra.mxu0 %v1756
        %2546 = vmatpush.bf16.msra.mxu0 %v1755
        %2547 = vmatpush.bf16.msra.mxu0 %v1754
        %2548 = vmatpush.bf16.msra.mxu0 %v1753
        %2549 = vmatpush.bf16.msra.mxu0 %v1752
        %2550 = vmatpush.bf16.msra.mxu0 %v1751
        %2551 = vmatmul.bf16.gmra.mxu0 %v1119
        %v2552 = vpop.f32.mrf.mxu0
        %v2553 = vadd.f32 %v2464, %v2552
        %v2554 = vpop.f32.mrf.mxu0
        %v2555 = vadd.f32 %v2466, %v2554
        %2556 = vmatmul.bf16.gmra.mxu0 %v1128
        %v2557 = vpop.f32.mrf.mxu0
        %v2558 = vadd.f32 %v2469, %v2557
        %v2559 = vpop.f32.mrf.mxu0
        %v2560 = vadd.f32 %v2471, %v2559
        %2561 = vmatmul.bf16.gmra.mxu0 %v1137
        %v2562 = vpop.f32.mrf.mxu0
        %v2563 = vadd.f32 %v2474, %v2562
        %v2564 = vpop.f32.mrf.mxu0
        %v2565 = vadd.f32 %v2476, %v2564
        %2566 = vmatmul.bf16.gmra.mxu0 %v1146
        %v2567 = vpop.f32.mrf.mxu0
        %v2568 = vadd.f32 %v2479, %v2567
        %v2569 = vpop.f32.mrf.mxu0
        %v2570 = vadd.f32 %v2481, %v2569
        %2571 = vmatmul.bf16.gmra.mxu0 %v1155
        %v2572 = vpop.f32.mrf.mxu0
        %v2573 = vadd.f32 %v2484, %v2572
        %v2574 = vpop.f32.mrf.mxu0
        %v2575 = vadd.f32 %v2486, %v2574
        %2576 = vmatmul.bf16.gmra.mxu0 %v1164
        %v2577 = vpop.f32.mrf.mxu0
        %v2578 = vadd.f32 %v2489, %v2577
        %v2579 = vpop.f32.mrf.mxu0
        %v2580 = vadd.f32 %v2491, %v2579
        %2581 = vmatmul.bf16.gmra.mxu0 %v1173
        %v2582 = vpop.f32.mrf.mxu0
        %v2583 = vadd.f32 %v2494, %v2582
        %v2584 = vpop.f32.mrf.mxu0
        %v2585 = vadd.f32 %v2496, %v2584
        %2586 = vmatmul.bf16.gmra.mxu0 %v1182
        %v2587 = vpop.f32.mrf.mxu0
        %v2588 = vadd.f32 %v2499, %v2587
        %v2589 = vpop.f32.mrf.mxu0
        %v2590 = vadd.f32 %v2501, %v2589
        %2591 = vmatmul.bf16.gmra.mxu0 %v1191
        %v2592 = vpop.f32.mrf.mxu0
        %v2593 = vadd.f32 %v2504, %v2592
        %v2594 = vpop.f32.mrf.mxu0
        %v2595 = vadd.f32 %v2506, %v2594
        %2596 = vmatmul.bf16.gmra.mxu0 %v1200
        %v2597 = vpop.f32.mrf.mxu0
        %v2598 = vadd.f32 %v2509, %v2597
        %v2599 = vpop.f32.mrf.mxu0
        %v2600 = vadd.f32 %v2511, %v2599
        %2601 = vmatmul.bf16.gmra.mxu0 %v1209
        %v2602 = vpop.f32.mrf.mxu0
        %v2603 = vadd.f32 %v2514, %v2602
        %v2604 = vpop.f32.mrf.mxu0
        %v2605 = vadd.f32 %v2516, %v2604
        %2606 = vmatmul.bf16.gmra.mxu0 %v1218
        %v2607 = vpop.f32.mrf.mxu0
        %v2608 = vadd.f32 %v2519, %v2607
        %v2609 = vpop.f32.mrf.mxu0
        %v2610 = vadd.f32 %v2521, %v2609
        %2611 = vmatmul.bf16.gmra.mxu0 %v1227
        %v2612 = vpop.f32.mrf.mxu0
        %v2613 = vadd.f32 %v2524, %v2612
        %v2614 = vpop.f32.mrf.mxu0
        %v2615 = vadd.f32 %v2526, %v2614
        %2616 = vmatmul.bf16.gmra.mxu0 %v1236
        %v2617 = vpop.f32.mrf.mxu0
        %v2618 = vadd.f32 %v2529, %v2617
        %v2619 = vpop.f32.mrf.mxu0
        %v2620 = vadd.f32 %v2531, %v2619
        %2621 = vmatmul.bf16.gmra.mxu0 %v1245
        %v2622 = vpop.f32.mrf.mxu0
        %v2623 = vadd.f32 %v2534, %v2622
        %v2624 = vpop.f32.mrf.mxu0
        %v2625 = vadd.f32 %v2536, %v2624
        %2626 = vmatmul.bf16.gmra.mxu0 %v1254
        %v2627 = vpop.f32.mrf.mxu0
        %v2628 = vadd.f32 %v2539, %v2627
        %v2629 = vpop.f32.mrf.mxu0
        %v2630 = vadd.f32 %v2541, %v2629
        %2631 = vdwg.mxu0
        %v2632 = vld [vmem:[%s5] sm:$0x1]
        %v2634 = vperm.slane %v2632, 0
        %v2636 = vmul.f32 %v2553, %v2634
        %v2637 = vmul.f32 %v2555, %v2634
        %v2638 = vmul.f32 %v2558, %v2634
        %v2639 = vmul.f32 %v2560, %v2634
        %v2640 = vmul.f32 %v2563, %v2634
        %v2641 = vmul.f32 %v2565, %v2634
        %v2642 = vmul.f32 %v2568, %v2634
        %v2643 = vmul.f32 %v2570, %v2634
        %v2644 = vmul.f32 %v2573, %v2634
        %v2645 = vmul.f32 %v2575, %v2634
        %v2646 = vmul.f32 %v2578, %v2634
        %v2647 = vmul.f32 %v2580, %v2634
        %v2648 = vmul.f32 %v2583, %v2634
        %v2649 = vmul.f32 %v2585, %v2634
        %v2650 = vmul.f32 %v2588, %v2634
        %v2651 = vmul.f32 %v2590, %v2634
        %v2652 = vmul.f32 %v2593, %v2634
        %v2653 = vmul.f32 %v2595, %v2634
        %v2654 = vmul.f32 %v2598, %v2634
        %v2655 = vmul.f32 %v2600, %v2634
        %v2656 = vmul.f32 %v2603, %v2634
        %v2657 = vmul.f32 %v2605, %v2634
        %v2658 = vmul.f32 %v2608, %v2634
        %v2659 = vmul.f32 %v2610, %v2634
        %v2660 = vmul.f32 %v2613, %v2634
        %v2661 = vmul.f32 %v2615, %v2634
        %v2662 = vmul.f32 %v2618, %v2634
        %v2663 = vmul.f32 %v2620, %v2634
        %v2664 = vmul.f32 %v2623, %v2634
        %v2665 = vmul.f32 %v2625, %v2634
        %v2666 = vmul.f32 %v2628, %v2634
        %v2667 = vmul.f32 %v2630, %v2634
        %v2668 = vld [vmem:[%s6] sm:$0x1]
        %v2670 = vperm.slane %v2668, 0
        %v2672 = vadd.f32 %v2636, %v2670
        %v2673 = vadd.f32 %v2637, %v2670
        %v2674 = vadd.f32 %v2638, %v2670
        %v2675 = vadd.f32 %v2639, %v2670
        %v2676 = vadd.f32 %v2640, %v2670
        %v2677 = vadd.f32 %v2641, %v2670
        %v2678 = vadd.f32 %v2642, %v2670
        %v2679 = vadd.f32 %v2643, %v2670
        %v2680 = vadd.f32 %v2644, %v2670
        %v2681 = vadd.f32 %v2645, %v2670
        %v2682 = vadd.f32 %v2646, %v2670
        %v2683 = vadd.f32 %v2647, %v2670
        %v2684 = vadd.f32 %v2648, %v2670
        %v2685 = vadd.f32 %v2649, %v2670
        %v2686 = vadd.f32 %v2650, %v2670
        %v2687 = vadd.f32 %v2651, %v2670
        %v2688 = vadd.f32 %v2652, %v2670
        %v2689 = vadd.f32 %v2653, %v2670
        %v2690 = vadd.f32 %v2654, %v2670
        %v2691 = vadd.f32 %v2655, %v2670
        %v2692 = vadd.f32 %v2656, %v2670
        %v2693 = vadd.f32 %v2657, %v2670
        %v2694 = vadd.f32 %v2658, %v2670
        %v2695 = vadd.f32 %v2659, %v2670
        %v2696 = vadd.f32 %v2660, %v2670
        %v2697 = vadd.f32 %v2661, %v2670
        %v2698 = vadd.f32 %v2662, %v2670
        %v2699 = vadd.f32 %v2663, %v2670
        %v2700 = vadd.f32 %v2664, %v2670
        %v2701 = vadd.f32 %v2665, %v2670
        %v2702 = vadd.f32 %v2666, %v2670
        %v2703 = vadd.f32 %v2667, %v2670
        %v2704 = vmax.f32 %v2672, 0.0
        %v2705 = vmax.f32 %v2673, 0.0
        %v2706 = vmax.f32 %v2674, 0.0
        %v2707 = vmax.f32 %v2675, 0.0
        %v2708 = vmax.f32 %v2676, 0.0
        %v2709 = vmax.f32 %v2677, 0.0
        %v2710 = vmax.f32 %v2678, 0.0
        %v2711 = vmax.f32 %v2679, 0.0
        %v2712 = vmax.f32 %v2680, 0.0
        %v2713 = vmax.f32 %v2681, 0.0
        %v2714 = vmax.f32 %v2682, 0.0
        %v2715 = vmax.f32 %v2683, 0.0
        %v2716 = vmax.f32 %v2684, 0.0
        %v2717 = vmax.f32 %v2685, 0.0
        %v2718 = vmax.f32 %v2686, 0.0
        %v2719 = vmax.f32 %v2687, 0.0
        %v2720 = vmax.f32 %v2688, 0.0
        %v2721 = vmax.f32 %v2689, 0.0
        %v2722 = vmax.f32 %v2690, 0.0
        %v2723 = vmax.f32 %v2691, 0.0
        %v2724 = vmax.f32 %v2692, 0.0
        %v2725 = vmax.f32 %v2693, 0.0
        %v2726 = vmax.f32 %v2694, 0.0
        %v2727 = vmax.f32 %v2695, 0.0
        %v2728 = vmax.f32 %v2696, 0.0
        %v2729 = vmax.f32 %v2697, 0.0
        %v2730 = vmax.f32 %v2698, 0.0
        %v2731 = vmax.f32 %v2699, 0.0
        %v2732 = vmax.f32 %v2700, 0.0
        %v2733 = vmax.f32 %v2701, 0.0
        %v2734 = vmax.f32 %v2702, 0.0
        %v2735 = vmax.f32 %v2703, 0.0
        %v2736 = vpack.c.bf16 %v2705, %v2704
        %v2737 = vpack.c.bf16 %v2707, %v2706
        %v2738 = vpack.c.bf16 %v2709, %v2708
        %v2739 = vpack.c.bf16 %v2711, %v2710
        %v2740 = vpack.c.bf16 %v2713, %v2712
        %v2741 = vpack.c.bf16 %v2715, %v2714
        %v2742 = vpack.c.bf16 %v2717, %v2716
        %v2743 = vpack.c.bf16 %v2719, %v2718
        %v2744 = vpack.c.bf16 %v2721, %v2720
        %v2745 = vpack.c.bf16 %v2723, %v2722
        %v2746 = vpack.c.bf16 %v2725, %v2724
        %v2747 = vpack.c.bf16 %v2727, %v2726
        %v2748 = vpack.c.bf16 %v2729, %v2728
        %v2749 = vpack.c.bf16 %v2731, %v2730
        %v2750 = vpack.c.bf16 %v2733, %v2732
        %v2751 = vpack.c.bf16 %v2735, %v2734
        %v2752 = vld [vmem:[#allocation9] sm:$0xf]
        %v2753 = vld [vmem:[#allocation9 + $0x4] sm:$0xf]
        %v2754 = vld [vmem:[#allocation9 + $0x8] sm:$0xf]
        %v2755 = vld [vmem:[#allocation9 + $0xc] sm:$0xf]
        %v2756 = vld [vmem:[#allocation9 + $0x10] sm:$0xf]
        %v2757 = vld [vmem:[#allocation9 + $0x14] sm:$0xf]
        %v2758 = vld [vmem:[#allocation9 + $0x18] sm:$0xf]
        %v2759 = vld [vmem:[#allocation9 + $0x1c] sm:$0xf]
        %v2760 = vld [vmem:[#allocation9 + $0x20] sm:$0xf]
        %v2761 = vld [vmem:[#allocation9 + $0x24] sm:$0xf]
        %v2762 = vld [vmem:[#allocation9 + $0x28] sm:$0xf]
        %v2763 = vld [vmem:[#allocation9 + $0x2c] sm:$0xf]
        %v2764 = vld [vmem:[#allocation9 + $0x30] sm:$0xf]
        %v2765 = vld [vmem:[#allocation9 + $0x34] sm:$0xf]
        %v2766 = vld [vmem:[#allocation9 + $0x38] sm:$0xf]
        %v2767 = vld [vmem:[#allocation9 + $0x3c] sm:$0xf]
        %v2784 = vunpack.c.l.b16 %v2752
        %v2785 = vunpack.c.l.b16 %v2753
        %v2786 = vunpack.c.l.b16 %v2754
        %v2787 = vunpack.c.l.b16 %v2755
        %v2788 = vunpack.c.l.b16 %v2756
        %v2789 = vunpack.c.l.b16 %v2757
        %v2790 = vunpack.c.l.b16 %v2758
        %v2791 = vunpack.c.l.b16 %v2759
        %v2792 = vunpack.c.l.b16 %v2760
        %v2793 = vunpack.c.l.b16 %v2761
        %v2794 = vunpack.c.l.b16 %v2762
        %v2795 = vunpack.c.l.b16 %v2763
        %v2796 = vunpack.c.l.b16 %v2764
        %v2797 = vunpack.c.l.b16 %v2765
        %v2798 = vunpack.c.l.b16 %v2766
        %v2799 = vunpack.c.l.b16 %v2767
        %v2800 = vpack.c.b16 %v2785, %v2784
        %v2801 = vpack.c.b16 %v2787, %v2786
        %v2802 = vpack.c.b16 %v2789, %v2788
        %v2803 = vpack.c.b16 %v2791, %v2790
        %v2804 = vpack.c.b16 %v2793, %v2792
        %v2805 = vpack.c.b16 %v2795, %v2794
        %v2806 = vpack.c.b16 %v2797, %v2796
        %v2807 = vpack.c.b16 %v2799, %v2798
        %2816 = vmatpush.bf16.msra.mxu0 %v2807
        %2817 = vmatpush.bf16.msra.mxu0 %v2806
        %2818 = vmatpush.bf16.msra.mxu0 %v2805
        %2819 = vmatpush.bf16.msra.mxu0 %v2804
        %2820 = vmatpush.bf16.msra.mxu0 %v2803
        %2821 = vmatpush.bf16.msra.mxu0 %v2802
        %2822 = vmatpush.bf16.msra.mxu0 %v2801
        %2823 = vmatpush.bf16.msra.mxu0 %v2800
        %2824 = vmatmul.bf16.gmra.mxu0 %v2736
        %v2825 = vpop.f32.mrf.mxu0
        %v2826 = vadd.f32 0.0, %v2825
        %v2827 = vpop.f32.mrf.mxu0
        %v2828 = vadd.f32 0.0, %v2827
        %2829 = vmatmul.bf16.gmra.mxu0 %v2737
        %v2830 = vpop.f32.mrf.mxu0
        %v2831 = vadd.f32 0.0, %v2830
        %v2832 = vpop.f32.mrf.mxu0
        %v2833 = vadd.f32 0.0, %v2832
        %2834 = vmatmul.bf16.gmra.mxu0 %v2738
        %v2835 = vpop.f32.mrf.mxu0
        %v2836 = vadd.f32 0.0, %v2835
        %v2837 = vpop.f32.mrf.mxu0
        %v2838 = vadd.f32 0.0, %v2837
        %2839 = vmatmul.bf16.gmra.mxu0 %v2739
        %v2840 = vpop.f32.mrf.mxu0
        %v2841 = vadd.f32 0.0, %v2840
        %v2842 = vpop.f32.mrf.mxu0
        %v2843 = vadd.f32 0.0, %v2842
        %2844 = vmatmul.bf16.gmra.mxu0 %v2740
        %v2845 = vpop.f32.mrf.mxu0
        %v2846 = vadd.f32 0.0, %v2845
        %v2847 = vpop.f32.mrf.mxu0
        %v2848 = vadd.f32 0.0, %v2847
        %2849 = vmatmul.bf16.gmra.mxu0 %v2741
        %v2850 = vpop.f32.mrf.mxu0
        %v2851 = vadd.f32 0.0, %v2850
        %v2852 = vpop.f32.mrf.mxu0
        %v2853 = vadd.f32 0.0, %v2852
        %2854 = vmatmul.bf16.gmra.mxu0 %v2742
        %v2855 = vpop.f32.mrf.mxu0
        %v2856 = vadd.f32 0.0, %v2855
        %v2857 = vpop.f32.mrf.mxu0
        %v2858 = vadd.f32 0.0, %v2857
        %2859 = vmatmul.bf16.gmra.mxu0 %v2743
        %v2860 = vpop.f32.mrf.mxu0
        %v2861 = vadd.f32 0.0, %v2860
        %v2862 = vpop.f32.mrf.mxu0
        %v2863 = vadd.f32 0.0, %v2862
        %2864 = vmatmul.bf16.gmra.mxu0 %v2744
        %v2865 = vpop.f32.mrf.mxu0
        %v2866 = vadd.f32 0.0, %v2865
        %v2867 = vpop.f32.mrf.mxu0
        %v2868 = vadd.f32 0.0, %v2867
        %2869 = vmatmul.bf16.gmra.mxu0 %v2745
        %v2870 = vpop.f32.mrf.mxu0
        %v2871 = vadd.f32 0.0, %v2870
        %v2872 = vpop.f32.mrf.mxu0
        %v2873 = vadd.f32 0.0, %v2872
        %2874 = vmatmul.bf16.gmra.mxu0 %v2746
        %v2875 = vpop.f32.mrf.mxu0
        %v2876 = vadd.f32 0.0, %v2875
        %v2877 = vpop.f32.mrf.mxu0
        %v2878 = vadd.f32 0.0, %v2877
        %2879 = vmatmul.bf16.gmra.mxu0 %v2747
        %v2880 = vpop.f32.mrf.mxu0
        %v2881 = vadd.f32 0.0, %v2880
        %v2882 = vpop.f32.mrf.mxu0
        %v2883 = vadd.f32 0.0, %v2882
        %2884 = vmatmul.bf16.gmra.mxu0 %v2748
        %v2885 = vpop.f32.mrf.mxu0
        %v2886 = vadd.f32 0.0, %v2885
        %v2887 = vpop.f32.mrf.mxu0
        %v2888 = vadd.f32 0.0, %v2887
        %2889 = vmatmul.bf16.gmra.mxu0 %v2749
        %v2890 = vpop.f32.mrf.mxu0
        %v2891 = vadd.f32 0.0, %v2890
        %v2892 = vpop.f32.mrf.mxu0
        %v2893 = vadd.f32 0.0, %v2892
        %2894 = vmatmul.bf16.gmra.mxu0 %v2750
        %v2895 = vpop.f32.mrf.mxu0
        %v2896 = vadd.f32 0.0, %v2895
        %v2897 = vpop.f32.mrf.mxu0
        %v2898 = vadd.f32 0.0, %v2897
        %2899 = vmatmul.bf16.gmra.mxu0 %v2751
        %v2900 = vpop.f32.mrf.mxu0
        %v2901 = vadd.f32 0.0, %v2900
        %v2902 = vpop.f32.mrf.mxu0
        %v2903 = vadd.f32 0.0, %v2902
        %2904 = vdwg.mxu0
        %v2905 = vld [vmem:[%s8] sm:$0x1]
        %v2907 = vperm.slane %v2905, 0
        %v2909 = vmul.f32 %v2826, %v2907
        %v2910 = vmul.f32 %v2828, %v2907
        %v2911 = vmul.f32 %v2831, %v2907
        %v2912 = vmul.f32 %v2833, %v2907
        %v2913 = vmul.f32 %v2836, %v2907
        %v2914 = vmul.f32 %v2838, %v2907
        %v2915 = vmul.f32 %v2841, %v2907
        %v2916 = vmul.f32 %v2843, %v2907
        %v2917 = vmul.f32 %v2846, %v2907
        %v2918 = vmul.f32 %v2848, %v2907
        %v2919 = vmul.f32 %v2851, %v2907
        %v2920 = vmul.f32 %v2853, %v2907
        %v2921 = vmul.f32 %v2856, %v2907
        %v2922 = vmul.f32 %v2858, %v2907
        %v2923 = vmul.f32 %v2861, %v2907
        %v2924 = vmul.f32 %v2863, %v2907
        %v2925 = vmul.f32 %v2866, %v2907
        %v2926 = vmul.f32 %v2868, %v2907
        %v2927 = vmul.f32 %v2871, %v2907
        %v2928 = vmul.f32 %v2873, %v2907
        %v2929 = vmul.f32 %v2876, %v2907
        %v2930 = vmul.f32 %v2878, %v2907
        %v2931 = vmul.f32 %v2881, %v2907
        %v2932 = vmul.f32 %v2883, %v2907
        %v2933 = vmul.f32 %v2886, %v2907
        %v2934 = vmul.f32 %v2888, %v2907
        %v2935 = vmul.f32 %v2891, %v2907
        %v2936 = vmul.f32 %v2893, %v2907
        %v2937 = vmul.f32 %v2896, %v2907
        %v2938 = vmul.f32 %v2898, %v2907
        %v2939 = vmul.f32 %v2901, %v2907
        %v2940 = vmul.f32 %v2903, %v2907
        %v2941 = vld [vmem:[%s9] sm:$0x1]
        %v2943 = vperm.slane %v2941, 0
        %v2945 = vadd.f32 %v2909, %v2943
        %v2946 = vadd.f32 %v2910, %v2943
        %v2947 = vadd.f32 %v2911, %v2943
        %v2948 = vadd.f32 %v2912, %v2943
        %v2949 = vadd.f32 %v2913, %v2943
        %v2950 = vadd.f32 %v2914, %v2943
        %v2951 = vadd.f32 %v2915, %v2943
        %v2952 = vadd.f32 %v2916, %v2943
        %v2953 = vadd.f32 %v2917, %v2943
        %v2954 = vadd.f32 %v2918, %v2943
        %v2955 = vadd.f32 %v2919, %v2943
        %v2956 = vadd.f32 %v2920, %v2943
        %v2957 = vadd.f32 %v2921, %v2943
        %v2958 = vadd.f32 %v2922, %v2943
        %v2959 = vadd.f32 %v2923, %v2943
        %v2960 = vadd.f32 %v2924, %v2943
        %v2961 = vadd.f32 %v2925, %v2943
        %v2962 = vadd.f32 %v2926, %v2943
        %v2963 = vadd.f32 %v2927, %v2943
        %v2964 = vadd.f32 %v2928, %v2943
        %v2965 = vadd.f32 %v2929, %v2943
        %v2966 = vadd.f32 %v2930, %v2943
        %v2967 = vadd.f32 %v2931, %v2943
        %v2968 = vadd.f32 %v2932, %v2943
        %v2969 = vadd.f32 %v2933, %v2943
        %v2970 = vadd.f32 %v2934, %v2943
        %v2971 = vadd.f32 %v2935, %v2943
        %v2972 = vadd.f32 %v2936, %v2943
        %v2973 = vadd.f32 %v2937, %v2943
        %v2974 = vadd.f32 %v2938, %v2943
        %v2975 = vadd.f32 %v2939, %v2943
        %v2976 = vadd.f32 %v2940, %v2943
        %v2977 = vadd.f32 %v2945, %v430
        %v2978 = vadd.f32 %v2946, %v431
        %v2979 = vadd.f32 %v2947, %v432
        %v2980 = vadd.f32 %v2948, %v433
        %v2981 = vadd.f32 %v2949, %v434
        %v2982 = vadd.f32 %v2950, %v435
        %v2983 = vadd.f32 %v2951, %v436
        %v2984 = vadd.f32 %v2952, %v437
        %v2985 = vadd.f32 %v2953, %v438
        %v2986 = vadd.f32 %v2954, %v439
        %v2987 = vadd.f32 %v2955, %v440
        %v2988 = vadd.f32 %v2956, %v441
        %v2989 = vadd.f32 %v2957, %v442
        %v2990 = vadd.f32 %v2958, %v443
        %v2991 = vadd.f32 %v2959, %v444
        %v2992 = vadd.f32 %v2960, %v445
        %v2993 = vadd.f32 %v2961, %v446
        %v2994 = vadd.f32 %v2962, %v447
        %v2995 = vadd.f32 %v2963, %v448
        %v2996 = vadd.f32 %v2964, %v449
        %v2997 = vadd.f32 %v2965, %v450
        %v2998 = vadd.f32 %v2966, %v451
        %v2999 = vadd.f32 %v2967, %v452
        %v3000 = vadd.f32 %v2968, %v453
        %v3001 = vadd.f32 %v2969, %v454
        %v3002 = vadd.f32 %v2970, %v455
        %v3003 = vadd.f32 %v2971, %v456
        %v3004 = vadd.f32 %v2972, %v457
        %v3005 = vadd.f32 %v2973, %v458
        %v3006 = vadd.f32 %v2974, %v459
        %v3007 = vadd.f32 %v2975, %v460
        %v3008 = vadd.f32 %v2976, %v461
        %v3009 = vmax.f32 %v2977, 0.0
        %v3010 = vmax.f32 %v2978, 0.0
        %v3011 = vmax.f32 %v2979, 0.0
        %v3012 = vmax.f32 %v2980, 0.0
        %v3013 = vmax.f32 %v2981, 0.0
        %v3014 = vmax.f32 %v2982, 0.0
        %v3015 = vmax.f32 %v2983, 0.0
        %v3016 = vmax.f32 %v2984, 0.0
        %v3017 = vmax.f32 %v2985, 0.0
        %v3018 = vmax.f32 %v2986, 0.0
        %v3019 = vmax.f32 %v2987, 0.0
        %v3020 = vmax.f32 %v2988, 0.0
        %v3021 = vmax.f32 %v2989, 0.0
        %v3022 = vmax.f32 %v2990, 0.0
        %v3023 = vmax.f32 %v2991, 0.0
        %v3024 = vmax.f32 %v2992, 0.0
        %v3025 = vmax.f32 %v2993, 0.0
        %v3026 = vmax.f32 %v2994, 0.0
        %v3027 = vmax.f32 %v2995, 0.0
        %v3028 = vmax.f32 %v2996, 0.0
        %v3029 = vmax.f32 %v2997, 0.0
        %v3030 = vmax.f32 %v2998, 0.0
        %v3031 = vmax.f32 %v2999, 0.0
        %v3032 = vmax.f32 %v3000, 0.0
        %v3033 = vmax.f32 %v3001, 0.0
        %v3034 = vmax.f32 %v3002, 0.0
        %v3035 = vmax.f32 %v3003, 0.0
        %v3036 = vmax.f32 %v3004, 0.0
        %v3037 = vmax.f32 %v3005, 0.0
        %v3038 = vmax.f32 %v3006, 0.0
        %v3039 = vmax.f32 %v3007, 0.0
        %v3040 = vmax.f32 %v3008, 0.0
        %3041 = vst [vmem:[%s429] sm:$0xff] %v3009
        %3042 = vst [vmem:[%s429 + $0x8] sm:$0xff] %v3010
        %3043 = vst [vmem:[%s429 + $0x10] sm:$0xff] %v3011
        %3044 = vst [vmem:[%s429 + $0x18] sm:$0xff] %v3012
        %3045 = vst [vmem:[%s429 + $0x20] sm:$0xff] %v3013
        %3046 = vst [vmem:[%s429 + $0x28] sm:$0xff] %v3014
        %3047 = vst [vmem:[%s429 + $0x30] sm:$0xff] %v3015
        %3048 = vst [vmem:[%s429 + $0x38] sm:$0xff] %v3016
        %3049 = vst [vmem:[%s429 + $0x40] sm:$0xff] %v3017
        %3050 = vst [vmem:[%s429 + $0x48] sm:$0xff] %v3018
        %3051 = vst [vmem:[%s429 + $0x50] sm:$0xff] %v3019
        %3052 = vst [vmem:[%s429 + $0x58] sm:$0xff] %v3020
        %3053 = vst [vmem:[%s429 + $0x60] sm:$0xff] %v3021
        %3054 = vst [vmem:[%s429 + $0x68] sm:$0xff] %v3022
        %3055 = vst [vmem:[%s429 + $0x70] sm:$0xff] %v3023
        %3056 = vst [vmem:[%s429 + $0x78] sm:$0xff] %v3024
        %3057 = vst [vmem:[%s429 + $0x80] sm:$0xff] %v3025
        %3058 = vst [vmem:[%s429 + $0x88] sm:$0xff] %v3026
        %3059 = vst [vmem:[%s429 + $0x90] sm:$0xff] %v3027
        %3060 = vst [vmem:[%s429 + $0x98] sm:$0xff] %v3028
        %3061 = vst [vmem:[%s429 + $0xa0] sm:$0xff] %v3029
        %3062 = vst [vmem:[%s429 + $0xa8] sm:$0xff] %v3030
        %3063 = vst [vmem:[%s429 + $0xb0] sm:$0xff] %v3031
        %3064 = vst [vmem:[%s429 + $0xb8] sm:$0xff] %v3032
        %3065 = vst [vmem:[%s429 + $0xc0] sm:$0xff] %v3033
        %3066 = vst [vmem:[%s429 + $0xc8] sm:$0xff] %v3034
        %3067 = vst [vmem:[%s429 + $0xd0] sm:$0xff] %v3035
        %3068 = vst [vmem:[%s429 + $0xd8] sm:$0xff] %v3036
        %3069 = vst [vmem:[%s429 + $0xe0] sm:$0xff] %v3037
        %3070 = vst [vmem:[%s429 + $0xe8] sm:$0xff] %v3038
        %3071 = vst [vmem:[%s429 + $0xf0] sm:$0xff] %v3039
        %3072 = vst [vmem:[%s429 + $0xf8] sm:$0xff] %v3040
        %s3073 = sand.u32 %s252, 1
        %s3074 = scalar_lea.sflag [#allocation5], %s3073
        %s3075 = sand.u32 %s252, 1
        %s3076 = smul.addr %s3075, 256
        %s3077 = scalar_lea.vmem [#allocation11], %s3076
        // Predicated region
        $region77: #{tpu_custom_call.1} parent=59 // pred_check
          %p3078 = pneg %p262
        $region78: #{tpu_custom_call.1} parent=59 // pred_check_branch
          %3080 = sbr.rel (%p3078) target = $region80
        $region79: #{tpu_custom_call.1} parent=59 // pred_region
          %3082 = vsyncadd %s3074, 0
          %s3083 = smul.addr %s29, 32
          %s3084 = smul.addr %s3083, 8
          %s3085 = scalar_lea.hbm %s10, %s3084
          %s3086 = sshll.u32 %s3077, 4
          %s3087 = int_to_ptr.vmem [resolvable:$true] %s3086
          %s3088 = sshll.u32 %s3085, 4
          %s3089 = int_to_ptr.hbm [resolvable:$true] %s3088
          %3094 = dma.vmem_to_hbm [thread:$0]  %s3087, 4096, %s3089, %s3074, 128, 128, 8
        $region80: #{tpu_custom_call.1} parent=59 // pred_fallthru
          _
      $region60: #{tpu_custom_call.1} parent=5 // pred_fallthru
        _
      %p3095 = scmp.le.s32.totalorder 2, %s24
      // Predicated region
      $region81: #{tpu_custom_call.1} parent=5 // pred_check
        %p3096 = pneg %p3095
      $region82: #{tpu_custom_call.1} parent=5 // pred_check_branch
        %3098 = sbr.rel (%p3096) target = $region84
      $region83: #{tpu_custom_call.1} parent=5 // pred_region
        %s3099 = ssub.s32 %s24, 2
        // Predicated region
        $region85: #{tpu_custom_call.1} parent=83 // pred_check
          %p3100 = pneg %p268
        $region86: #{tpu_custom_call.1} parent=83 // pred_check_branch
          %3102 = sbr.rel (%p3100) target = $region88
        $region87: #{tpu_custom_call.1} parent=83 // pred_region
          %s3103 = sand.u32 %s253, 1
          %s3104 = scalar_lea.sflag [#allocation5], %s3103
          %s3105 = sand.u32 %s253, 1
          %s3106 = smul.addr %s3105, 256
          %s3107 = scalar_lea.vmem [#allocation11], %s3106
          %3109 = dma.done %s3104, 4096
        $region88: #{tpu_custom_call.1} parent=83 // pred_fallthru
          _
      $region84: #{tpu_custom_call.1} parent=5 // pred_fallthru
        _
    $region6: #{tpu_custom_call.1} parent=1 // loop_footer
      %s28 = sadd.s32 1, %s24
    $region7: #{tpu_custom_call.1} parent=1 // loop_footer_branch
      %23 = sbr.rel target = $region3
    $region8: #{tpu_custom_call.1} parent=1 // loop_exit
      _
    %3110 = vsyncpa [#allocation4], 1
    %s3111 = scalar_lea.sflag [#allocation4], 1
    %3112 = vsyncpa %s3111, 1
    %3113 = vsyncpa [#allocation7], 1
    %3114 = vsyncpa [#allocation10], 1
    %3115 = vsyncpa [#allocation5], 1
    %s3116 = scalar_lea.sflag [#allocation5], 1
    %3117 = vsyncpa %s3116, 1

</llo_original>
